<compile_context>
chip_gen: v7x
topology: tpu7x:2x2x1
jax: 0.10.0
libtpu: 0.0.40
codegen_flags: <defaults>
</compile_context>

<pallas_src>
import functools

import jax
import jax.numpy as jnp
from jax.experimental import pallas as pl
from jax.experimental.pallas import tpu as pltpu

KSIZE = 5    # conv kernel size
PAD = 2      # conv padding
LANE = 128   # TPU lane width


def _dca_kernel(scale_ref, shift_ref, wflat_ref, x_ref, o_ref):
    """Per-batch affine transform + 5x5 conv, fully register-resident.

    scale_ref, shift_ref : SMEM (N,) f32      -- per-batch affine params
    wflat_ref            : SMEM (C*C*25,) f32 -- conv weight [co,ci,kh,kw] row-major
    x_ref                : VMEM (1, C, H, W)  -- native dtype, cast in-kernel
    o_ref                : VMEM (1, C, H, W)  f32
    """
    b = pl.program_id(0)
    s = scale_ref[b]
    t = shift_ref[b]

    C = x_ref.shape[1]
    H = x_ref.shape[2]
    W = x_ref.shape[3]

    # ---- load channels once, cast to f32 inside the kernel -----------------
    x_ch = [x_ref[0, c].astype(jnp.float32) for c in range(C)]        # (H, W)

    # ---- zero-pixel mask (torch: x.sum(1)==0, then row/col counts) ---------
    csum = x_ch[0]
    for c in range(1, C):
        csum = csum + x_ch[c]
    zero_pix = (csum == 0.0).astype(jnp.float32)                      # (H, W)
    row_cnt = jnp.sum(zero_pix, axis=1, keepdims=True)                # (H, 1)
    col_cnt = jnp.sum(zero_pix, axis=0, keepdims=True)                # (1, W)
    mask = jnp.logical_and(row_cnt < float(W),
                           col_cnt < float(H)).astype(jnp.float32)    # (H, W)

    # ---- affine transform, kept in registers (no padded scratch) -----------
    y_ch = [(s * xc + t) * mask for xc in x_ch]

    # ---- hoist ALL conv weights out of the spatial hot loop (SMEM reads) ---
    wv = [[[[wflat_ref[((co * C + ci) * KSIZE + kh) * KSIZE + kw]
             for kw in range(KSIZE)]
            for kh in range(KSIZE)]
           for ci in range(C)]
          for co in range(C)]

    # ---- boundary-validity masks for the conv halo (replace zero padding) --
    row_idx = jax.lax.broadcasted_iota(jnp.int32, (H, W), 0)
    col_idx = jax.lax.broadcasted_iota(jnp.int32, (H, W), 1)
    row_ok = {}
    col_ok = {}
    for d in range(-PAD, PAD + 1):
        if d == 0:
            continue
        row_ok[d] = (row_idx < (H - d)) if d > 0 else (row_idx >= -d)
        col_ok[d] = (col_idx < (W - d)) if d > 0 else (col_idx >= -d)

    # ---- 5x5 cross-correlation as 25 rolled + masked accumulations ---------
    # out[co,i,j] = sum_{ci,kh,kw} w[co,ci,kh,kw] * y[ci, i+kh-2, j+kw-2]
    # (zero outside the image).  Rolls go to the XLU slot; FMAs to the VALU.
    acc = [jnp.zeros((H, W), jnp.float32) for _ in range(C)]
    for ci in range(C):
        y = y_ch[ci]
        for kh in range(KSIZE):
            dh = kh - PAD
            yr = y
            if dh != 0:
                yr = jnp.where(row_ok[dh],
                               pltpu.roll(y, (-dh) % H, axis=0), 0.0)
            for kw in range(KSIZE):
                dw = kw - PAD
                p = yr
                if dw != 0:
                    p = jnp.where(col_ok[dw],
                                  pltpu.roll(yr, (-dw) % W, axis=1), 0.0)
                for co in range(C):
                    acc[co] = acc[co] + wv[co][ci][kh][kw] * p

    for co in range(C):
        o_ref[0, co] = acc[co].astype(o_ref.dtype)


@jax.jit
def _transform_conv(x, scale_vec, shift_vec, conv_w):
    """x: (N, C, H, W); scale_vec/shift_vec: (N,) f32; conv_w: (C, C, 5, 5)."""
    N, C, H, W = x.shape
    wflat = conv_w.reshape(-1).astype(jnp.float32)

    # Lane-dense W: pad to a multiple of 128 so every vector store is an
    # unmasked full-lane vst.  The padded columns are all-zero, so the
    # zero-pixel mask zeroes them and the conv halo stays exactly equivalent
    # to the original zero padding; the output is sliced back to W.
    Wp = ((W + LANE - 1) // LANE) * LANE
    if Wp != W:
        x = jnp.pad(x, ((0, 0), (0, 0), (0, 0), (0, Wp - W)))

    grid_spec = pltpu.PrefetchScalarGridSpec(
        num_scalar_prefetch=0,
        grid=(N,),
        in_specs=[
            pl.BlockSpec(memory_space=pltpu.MemorySpace.SMEM),    # scale (N,)
            pl.BlockSpec(memory_space=pltpu.MemorySpace.SMEM),    # shift (N,)
            pl.BlockSpec(memory_space=pltpu.MemorySpace.SMEM),    # flat conv weight
            pl.BlockSpec((1, C, H, Wp), lambda i: (i, 0, 0, 0)),  # x
        ],
        out_specs=pl.BlockSpec((1, C, H, Wp), lambda i: (i, 0, 0, 0)),
        scratch_shapes=[],                                        # no VMEM scratch
    )

    # Advisory cost: 25 taps * C_in * C_out FMAs per pixel; keep on the VPU
    # (C=3 output channels would use <3% of the MXU lanes).
    flops = 2 * N * C * C * KSIZE * KSIZE * H * Wp + 8 * N * C * H * Wp
    bytes_accessed = N * C * H * Wp * (x.dtype.itemsize + 4)

    out = pl.pallas_call(
        _dca_kernel,
        out_shape=jax.ShapeDtypeStruct((N, C, H, Wp), jnp.float32),
        grid_spec=grid_spec,
        compiler_params=pltpu.CompilerParams(
            dimension_semantics=("parallel",),
            # Under v7x's 64 MiB physical VMEM; also raises the 16/32 MiB
            # scoped defaults on v5e/v6e for larger images.
            vmem_limit_bytes=48 * 1024 * 1024,
        ),
        cost_estimate=pl.CostEstimate(
            flops=flops, transcendentals=0, bytes_accessed=bytes_accessed),
    )(scale_vec.astype(jnp.float32), shift_vec.astype(jnp.float32), wflat, x)

    if Wp != W:
        out = out[..., :W]
    return out


def _reference_transform_conv(x, scale_vec, shift_vec, conv_w):
    """Pure-JAX reference of transform() + Conv2d(3,3,5,5,pad=2,no bias)."""
    N, C, H, W = x.shape
    s = scale_vec.reshape(N, 1, 1, 1)
    t = shift_vec.reshape(N, 1, 1, 1)
    zero_pix = (jnp.sum(x, axis=1, keepdims=True) == 0.0).astype(jnp.float32)
    row_cnt = jnp.sum(zero_pix, axis=-1, keepdims=True)
    col_cnt = jnp.sum(zero_pix, axis=-2, keepdims=True)
    mask = jnp.logical_and(row_cnt < W, col_cnt < H).astype(jnp.float32)
    y = (s * x.astype(jnp.float32) + t) * mask
    yp = jnp.pad(y, ((0, 0), (0, 0), (PAD, PAD), (PAD, PAD)))
    outs = []
    for co in range(C):
        acc = jnp.zeros((N, H, W), jnp.float32)
        for ci in range(C):
            for kh in range(KSIZE):
                for kw in range(KSIZE):
                    acc = acc + conv_w[co, ci, kh, kw] * yp[:, ci, kh:kh + H, kw:kw + W]
        outs.append(acc)
    return jnp.stack(outs, axis=1)


def init_params(key):
    """Deterministic, in-script parameter init (shapes from the module __init__)."""
    k0, k1, k2, k3 = jax.random.split(key, 4)
    return {
        "n_w": jax.random.normal(k0, (2, 11), jnp.float32) * 0.2,    # n_regress: Linear(11, 2, bias=False)
        "c_w": jax.random.normal(k1, (2, 11), jnp.float32) * 0.2,    # c_regress: Linear(11, 2, bias=False)
        "scale": jnp.array([1.0], jnp.float32),                       # nn.Parameter([scale])
        "logits": jnp.zeros((1,), jnp.float32),                       # nn.Parameter(zeros(1))
        "feature": jax.random.normal(k2, (10,), jnp.float32),         # nn.Parameter(randn(10))
        "conv_w": jax.random.normal(k3, (3, 3, 5, 5), jnp.float32) * 0.05,  # Conv2d(3,3,5,5,pad=2,no bias)
    }


def detection_color_aug_forward(params, x, magnitude, boxes, key, re=True,
                                temp=0.05, relax=True, stochastic=True):
    N = x.shape[0]
    k_noise, k_bern = jax.random.split(key)

    # noise = feature + randn/100 (shared across batch), then concat magnitude
    noise = params["feature"] + jax.random.normal(k_noise, (10,), jnp.float32) / 100.0
    if isinstance(magnitude, (float, int)):
        magnitude = jnp.full((N, 1), float(magnitude), jnp.float32)
    noise = jnp.broadcast_to(noise[None, :], (N, 10))
    noise = jnp.concatenate([noise, magnitude.astype(jnp.float32)], axis=1)   # (N, 11)

    gfactor = noise @ params["n_w"].T                                         # (N, 2)
    factor = noise @ params["c_w"].T                                          # (N, 2)
    scale, shift = factor[:, 0:1], factor[:, 1:2]
    g_scale, g_shift = gfactor[:, 0:1], gfactor[:, 1:2]

    scale = jax.nn.sigmoid(g_scale + scale)
    shift = jax.nn.sigmoid(g_shift + shift)
    scale = params["scale"] * (scale - 0.5) + 1.0
    shift = shift - 0.5

    if re and stochastic:
        logits = jnp.broadcast_to(params["logits"], (N, 1))
        u = jax.random.uniform(k_bern, (N, 1), jnp.float32,
                               minval=1e-6, maxval=1.0 - 1e-6)
        l = jnp.log(u) - jnp.log(1.0 - u)
        prob = jax.nn.sigmoid((l + logits) / temp)                            # relaxed_bernoulli
        if not relax:
            prob = (prob > 0.5).astype(jnp.float32)
        scale = 1.0 - prob + prob * scale
        shift = prob * shift

    out = _transform_conv(x, scale.reshape(-1), shift.reshape(-1), params["conv_w"])
    return out, boxes


if __name__ == "__main__":
    key = jax.random.PRNGKey(0)
    k_params, k_x, k_fwd = jax.random.split(key, 3)

    params = init_params(k_params)

    N, C, H, W = 2, 3, 16, 16
    x = jax.random.normal(k_x, (N, C, H, W), jnp.float32)
    # zero out the last 4 rows so the "all-zero pixel" mask path is exercised
    x = x.at[:, :, H - 4:, :].set(0.0)
    boxes = jnp.array([[1.0, 2.0, 8.0, 9.0],
                       [0.0, 0.0, 15.0, 15.0]], jnp.float32)

    # numerical check of the Pallas transform+conv against a pure-JAX reference
    sc = jnp.array([1.10, 0.92], jnp.float32)
    sh = jnp.array([0.05, -0.10], jnp.float32)
    got = jax.block_until_ready(_transform_conv(x, sc, sh, params["conv_w"]))
    ref = _reference_transform_conv(x, sc, sh, params["conv_w"])
    assert got.shape == ref.shape
    assert bool(jnp.allclose(got, ref, rtol=1e-3, atol=1e-3)), \
        float(jnp.max(jnp.abs(got - ref)))

    # full forward pass
    out, boxes_out = detection_color_aug_forward(params, x, 0.5, boxes, k_fwd, re=True)
    out = jax.block_until_ready(out)

    assert out.shape == (N, C, H, W) and out.dtype == jnp.float32
    assert boxes_out.shape == boxes.shape
    print("KERNEL_OK")
</pallas_src>

<mosaic_0001>
module attributes {stable_mosaic.version = 11 : i64} {
  func.func @_dca_kernel(%arg0: i32, %arg1: memref<2xf32, #tpu.memory_space<smem>>, %arg2: memref<2xf32, #tpu.memory_space<smem>>, %arg3: memref<225xf32, #tpu.memory_space<smem>>, %arg4: memref<1x3x16x128xf32, #tpu.memory_space<vmem>>, %arg5: memref<1x3x16x128xf32, #tpu.memory_space<vmem>>) attributes {dimension_semantics = [#tpu.dimension_semantics<parallel>], iteration_bounds = array<i64: 2>, scalar_prefetch = 0 : i64, scratch_operands = 0 : i64, tpu.core_type = #tpu.core_type<tc>, window_params = [{transform_indices = @transform_0, window_bounds = array<i64: 2>}, {transform_indices = @transform_1, window_bounds = array<i64: 2>}, {transform_indices = @transform_2, window_bounds = array<i64: 225>}, {transform_indices = @transform_3, window_bounds = array<i64: 1, 3, 16, 128>}, {transform_indices = @transform_4, window_bounds = array<i64: 1, 3, 16, 128>}]} {
    %0 = arith.index_cast %arg0 : i32 to index
    %1 = memref.load %arg1[%0] : memref<2xf32, #tpu.memory_space<smem>>
    %2 = arith.index_cast %arg0 : i32 to index
    %3 = memref.load %arg2[%2] : memref<2xf32, #tpu.memory_space<smem>>
    %c0 = arith.constant 0 : index
    %c0_0 = arith.constant 0 : index
    %c0_1 = arith.constant 0 : index
    %c0_2 = arith.constant 0 : index
    %4 = vector.load %arg4[%c0, %c0_0, %c0_1, %c0_2] : memref<1x3x16x128xf32, #tpu.memory_space<vmem>>, vector<1x1x16x128xf32>
    %5 = vector.shape_cast %4 : vector<1x1x16x128xf32> to vector<16x128xf32>
    %c0_3 = arith.constant 0 : index
    %c1 = arith.constant 1 : index
    %c0_4 = arith.constant 0 : index
    %c0_5 = arith.constant 0 : index
    %6 = vector.load %arg4[%c0_3, %c1, %c0_4, %c0_5] : memref<1x3x16x128xf32, #tpu.memory_space<vmem>>, vector<1x1x16x128xf32>
    %7 = vector.shape_cast %6 : vector<1x1x16x128xf32> to vector<16x128xf32>
    %c0_6 = arith.constant 0 : index
    %c2 = arith.constant 2 : index
    %c0_7 = arith.constant 0 : index
    %c0_8 = arith.constant 0 : index
    %8 = vector.load %arg4[%c0_6, %c2, %c0_7, %c0_8] : memref<1x3x16x128xf32, #tpu.memory_space<vmem>>, vector<1x1x16x128xf32>
    %9 = vector.shape_cast %8 : vector<1x1x16x128xf32> to vector<16x128xf32>
    %10 = arith.addf %5, %7 : vector<16x128xf32>
    %11 = arith.addf %10, %9 : vector<16x128xf32>
    %cst = arith.constant 0.000000e+00 : f32
    %12 = vector.broadcast %cst : f32 to vector<16x128xf32>
    %13 = arith.cmpf oeq, %11, %12 : vector<16x128xf32>
    %14 = arith.extui %13 : vector<16x128xi1> to vector<16x128xi32>
    %15 = arith.sitofp %14 : vector<16x128xi32> to vector<16x128xf32>
    %cst_9 = arith.constant dense<0.000000e+00> : vector<16xf32>
    %16 = vector.multi_reduction <add>, %15, %cst_9 [1] : vector<16x128xf32> to vector<16xf32>
    %17 = vector.shape_cast %16 : vector<16xf32> to vector<16x1xf32>
    %cst_10 = arith.constant dense<0.000000e+00> : vector<128xf32>
    %18 = vector.multi_reduction <add>, %15, %cst_10 [0] : vector<16x128xf32> to vector<128xf32>
    %19 = vector.shape_cast %18 : vector<128xf32> to vector<1x128xf32>
    %cst_11 = arith.constant 1.280000e+02 : f32
    %20 = vector.broadcast %cst_11 : f32 to vector<16x1xf32>
    %21 = arith.cmpf olt, %17, %20 : vector<16x1xf32>
    %cst_12 = arith.constant 1.600000e+01 : f32
    %22 = vector.broadcast %cst_12 : f32 to vector<1x128xf32>
    %23 = arith.cmpf olt, %19, %22 : vector<1x128xf32>
    %24 = vector.broadcast %21 : vector<16x1xi1> to vector<16x128xi1>
    %25 = vector.broadcast %23 : vector<1x128xi1> to vector<16x128xi1>
    %26 = arith.andi %24, %25 : vector<16x128xi1>
    %27 = arith.extui %26 : vector<16x128xi1> to vector<16x128xi32>
    %28 = arith.sitofp %27 : vector<16x128xi32> to vector<16x128xf32>
    %29 = vector.broadcast %1 : f32 to vector<16x128xf32>
    %30 = arith.mulf %29, %5 : vector<16x128xf32>
    %31 = vector.broadcast %3 : f32 to vector<16x128xf32>
    %32 = arith.addf %30, %31 : vector<16x128xf32>
    %33 = arith.mulf %32, %28 : vector<16x128xf32>
    %34 = vector.broadcast %1 : f32 to vector<16x128xf32>
    %35 = arith.mulf %34, %7 : vector<16x128xf32>
    %36 = vector.broadcast %3 : f32 to vector<16x128xf32>
    %37 = arith.addf %35, %36 : vector<16x128xf32>
    %38 = arith.mulf %37, %28 : vector<16x128xf32>
    %39 = vector.broadcast %1 : f32 to vector<16x128xf32>
    %40 = arith.mulf %39, %9 : vector<16x128xf32>
    %41 = vector.broadcast %3 : f32 to vector<16x128xf32>
    %42 = arith.addf %40, %41 : vector<16x128xf32>
    %43 = arith.mulf %42, %28 : vector<16x128xf32>
    %c0_13 = arith.constant 0 : index
    %44 = memref.load %arg3[%c0_13] : memref<225xf32, #tpu.memory_space<smem>>
    %c1_14 = arith.constant 1 : index
    %45 = memref.load %arg3[%c1_14] : memref<225xf32, #tpu.memory_space<smem>>
    %c2_15 = arith.constant 2 : index
    %46 = memref.load %arg3[%c2_15] : memref<225xf32, #tpu.memory_space<smem>>
    %c3 = arith.constant 3 : index
    %47 = memref.load %arg3[%c3] : memref<225xf32, #tpu.memory_space<smem>>
    %c4 = arith.constant 4 : index
    %48 = memref.load %arg3[%c4] : memref<225xf32, #tpu.memory_space<smem>>
    %c5 = arith.constant 5 : index
    %49 = memref.load %arg3[%c5] : memref<225xf32, #tpu.memory_space<smem>>
    %c6 = arith.constant 6 : index
    %50 = memref.load %arg3[%c6] : memref<225xf32, #tpu.memory_space<smem>>
    %c7 = arith.constant 7 : index
    %51 = memref.load %arg3[%c7] : memref<225xf32, #tpu.memory_space<smem>>
    %c8 = arith.constant 8 : index
    %52 = memref.load %arg3[%c8] : memref<225xf32, #tpu.memory_space<smem>>
    %c9 = arith.constant 9 : index
    %53 = memref.load %arg3[%c9] : memref<225xf32, #tpu.memory_space<smem>>
    %c10 = arith.constant 10 : index
    %54 = memref.load %arg3[%c10] : memref<225xf32, #tpu.memory_space<smem>>
    %c11 = arith.constant 11 : index
    %55 = memref.load %arg3[%c11] : memref<225xf32, #tpu.memory_space<smem>>
    %c12 = arith.constant 12 : index
    %56 = memref.load %arg3[%c12] : memref<225xf32, #tpu.memory_space<smem>>
    %c13 = arith.constant 13 : index
    %57 = memref.load %arg3[%c13] : memref<225xf32, #tpu.memory_space<smem>>
    %c14 = arith.constant 14 : index
    %58 = memref.load %arg3[%c14] : memref<225xf32, #tpu.memory_space<smem>>
    %c15 = arith.constant 15 : index
    %59 = memref.load %arg3[%c15] : memref<225xf32, #tpu.memory_space<smem>>
    %c16 = arith.constant 16 : index
    %60 = memref.load %arg3[%c16] : memref<225xf32, #tpu.memory_space<smem>>
    %c17 = arith.constant 17 : index
    %61 = memref.load %arg3[%c17] : memref<225xf32, #tpu.memory_space<smem>>
    %c18 = arith.constant 18 : index
    %62 = memref.load %arg3[%c18] : memref<225xf32, #tpu.memory_space<smem>>
    %c19 = arith.constant 19 : index
    %63 = memref.load %arg3[%c19] : memref<225xf32, #tpu.memory_space<smem>>
    %c20 = arith.constant 20 : index
    %64 = memref.load %arg3[%c20] : memref<225xf32, #tpu.memory_space<smem>>
    %c21 = arith.constant 21 : index
    %65 = memref.load %arg3[%c21] : memref<225xf32, #tpu.memory_space<smem>>
    %c22 = arith.constant 22 : index
    %66 = memref.load %arg3[%c22] : memref<225xf32, #tpu.memory_space<smem>>
    %c23 = arith.constant 23 : index
    %67 = memref.load %arg3[%c23] : memref<225xf32, #tpu.memory_space<smem>>
    %c24 = arith.constant 24 : index
    %68 = memref.load %arg3[%c24] : memref<225xf32, #tpu.memory_space<smem>>
    %c25 = arith.constant 25 : index
    %69 = memref.load %arg3[%c25] : memref<225xf32, #tpu.memory_space<smem>>
    %c26 = arith.constant 26 : index
    %70 = memref.load %arg3[%c26] : memref<225xf32, #tpu.memory_space<smem>>
    %c27 = arith.constant 27 : index
    %71 = memref.load %arg3[%c27] : memref<225xf32, #tpu.memory_space<smem>>
    %c28 = arith.constant 28 : index
    %72 = memref.load %arg3[%c28] : memref<225xf32, #tpu.memory_space<smem>>
    %c29 = arith.constant 29 : index
    %73 = memref.load %arg3[%c29] : memref<225xf32, #tpu.memory_space<smem>>
    %c30 = arith.constant 30 : index
    %74 = memref.load %arg3[%c30] : memref<225xf32, #tpu.memory_space<smem>>
    %c31 = arith.constant 31 : index
    %75 = memref.load %arg3[%c31] : memref<225xf32, #tpu.memory_space<smem>>
    %c32 = arith.constant 32 : index
    %76 = memref.load %arg3[%c32] : memref<225xf32, #tpu.memory_space<smem>>
    %c33 = arith.constant 33 : index
    %77 = memref.load %arg3[%c33] : memref<225xf32, #tpu.memory_space<smem>>
    %c34 = arith.constant 34 : index
    %78 = memref.load %arg3[%c34] : memref<225xf32, #tpu.memory_space<smem>>
    %c35 = arith.constant 35 : index
    %79 = memref.load %arg3[%c35] : memref<225xf32, #tpu.memory_space<smem>>
    %c36 = arith.constant 36 : index
    %80 = memref.load %arg3[%c36] : memref<225xf32, #tpu.memory_space<smem>>
    %c37 = arith.constant 37 : index
    %81 = memref.load %arg3[%c37] : memref<225xf32, #tpu.memory_space<smem>>
    %c38 = arith.constant 38 : index
    %82 = memref.load %arg3[%c38] : memref<225xf32, #tpu.memory_space<smem>>
    %c39 = arith.constant 39 : index
    %83 = memref.load %arg3[%c39] : memref<225xf32, #tpu.memory_space<smem>>
    %c40 = arith.constant 40 : index
    %84 = memref.load %arg3[%c40] : memref<225xf32, #tpu.memory_space<smem>>
    %c41 = arith.constant 41 : index
    %85 = memref.load %arg3[%c41] : memref<225xf32, #tpu.memory_space<smem>>
    %c42 = arith.constant 42 : index
    %86 = memref.load %arg3[%c42] : memref<225xf32, #tpu.memory_space<smem>>
    %c43 = arith.constant 43 : index
    %87 = memref.load %arg3[%c43] : memref<225xf32, #tpu.memory_space<smem>>
    %c44 = arith.constant 44 : index
    %88 = memref.load %arg3[%c44] : memref<225xf32, #tpu.memory_space<smem>>
    %c45 = arith.constant 45 : index
    %89 = memref.load %arg3[%c45] : memref<225xf32, #tpu.memory_space<smem>>
    %c46 = arith.constant 46 : index
    %90 = memref.load %arg3[%c46] : memref<225xf32, #tpu.memory_space<smem>>
    %c47 = arith.constant 47 : index
    %91 = memref.load %arg3[%c47] : memref<225xf32, #tpu.memory_space<smem>>
    %c48 = arith.constant 48 : index
    %92 = memref.load %arg3[%c48] : memref<225xf32, #tpu.memory_space<smem>>
    %c49 = arith.constant 49 : index
    %93 = memref.load %arg3[%c49] : memref<225xf32, #tpu.memory_space<smem>>
    %c50 = arith.constant 50 : index
    %94 = memref.load %arg3[%c50] : memref<225xf32, #tpu.memory_space<smem>>
    %c51 = arith.constant 51 : index
    %95 = memref.load %arg3[%c51] : memref<225xf32, #tpu.memory_space<smem>>
    %c52 = arith.constant 52 : index
    %96 = memref.load %arg3[%c52] : memref<225xf32, #tpu.memory_space<smem>>
    %c53 = arith.constant 53 : index
    %97 = memref.load %arg3[%c53] : memref<225xf32, #tpu.memory_space<smem>>
    %c54 = arith.constant 54 : index
    %98 = memref.load %arg3[%c54] : memref<225xf32, #tpu.memory_space<smem>>
    %c55 = arith.constant 55 : index
    %99 = memref.load %arg3[%c55] : memref<225xf32, #tpu.memory_space<smem>>
    %c56 = arith.constant 56 : index
    %100 = memref.load %arg3[%c56] : memref<225xf32, #tpu.memory_space<smem>>
    %c57 = arith.constant 57 : index
    %101 = memref.load %arg3[%c57] : memref<225xf32, #tpu.memory_space<smem>>
    %c58 = arith.constant 58 : index
    %102 = memref.load %arg3[%c58] : memref<225xf32, #tpu.memory_space<smem>>
    %c59 = arith.constant 59 : index
    %103 = memref.load %arg3[%c59] : memref<225xf32, #tpu.memory_space<smem>>
    %c60 = arith.constant 60 : index
    %104 = memref.load %arg3[%c60] : memref<225xf32, #tpu.memory_space<smem>>
    %c61 = arith.constant 61 : index
    %105 = memref.load %arg3[%c61] : memref<225xf32, #tpu.memory_space<smem>>
    %c62 = arith.constant 62 : index
    %106 = memref.load %arg3[%c62] : memref<225xf32, #tpu.memory_space<smem>>
    %c63 = arith.constant 63 : index
    %107 = memref.load %arg3[%c63] : memref<225xf32, #tpu.memory_space<smem>>
    %c64 = arith.constant 64 : index
    %108 = memref.load %arg3[%c64] : memref<225xf32, #tpu.memory_space<smem>>
    %c65 = arith.constant 65 : index
    %109 = memref.load %arg3[%c65] : memref<225xf32, #tpu.memory_space<smem>>
    %c66 = arith.constant 66 : index
    %110 = memref.load %arg3[%c66] : memref<225xf32, #tpu.memory_space<smem>>
    %c67 = arith.constant 67 : index
    %111 = memref.load %arg3[%c67] : memref<225xf32, #tpu.memory_space<smem>>
    %c68 = arith.constant 68 : index
    %112 = memref.load %arg3[%c68] : memref<225xf32, #tpu.memory_space<smem>>
    %c69 = arith.constant 69 : index
    %113 = memref.load %arg3[%c69] : memref<225xf32, #tpu.memory_space<smem>>
    %c70 = arith.constant 70 : index
    %114 = memref.load %arg3[%c70] : memref<225xf32, #tpu.memory_space<smem>>
    %c71 = arith.constant 71 : index
    %115 = memref.load %arg3[%c71] : memref<225xf32, #tpu.memory_space<smem>>
    %c72 = arith.constant 72 : index
    %116 = memref.load %arg3[%c72] : memref<225xf32, #tpu.memory_space<smem>>
    %c73 = arith.constant 73 : index
    %117 = memref.load %arg3[%c73] : memref<225xf32, #tpu.memory_space<smem>>
    %c74 = arith.constant 74 : index
    %118 = memref.load %arg3[%c74] : memref<225xf32, #tpu.memory_space<smem>>
    %c75 = arith.constant 75 : index
    %119 = memref.load %arg3[%c75] : memref<225xf32, #tpu.memory_space<smem>>
    %c76 = arith.constant 76 : index
    %120 = memref.load %arg3[%c76] : memref<225xf32, #tpu.memory_space<smem>>
    %c77 = arith.constant 77 : index
    %121 = memref.load %arg3[%c77] : memref<225xf32, #tpu.memory_space<smem>>
    %c78 = arith.constant 78 : index
    %122 = memref.load %arg3[%c78] : memref<225xf32, #tpu.memory_space<smem>>
    %c79 = arith.constant 79 : index
    %123 = memref.load %arg3[%c79] : memref<225xf32, #tpu.memory_space<smem>>
    %c80 = arith.constant 80 : index
    %124 = memref.load %arg3[%c80] : memref<225xf32, #tpu.memory_space<smem>>
    %c81 = arith.constant 81 : index
    %125 = memref.load %arg3[%c81] : memref<225xf32, #tpu.memory_space<smem>>
    %c82 = arith.constant 82 : index
    %126 = memref.load %arg3[%c82] : memref<225xf32, #tpu.memory_space<smem>>
    %c83 = arith.constant 83 : index
    %127 = memref.load %arg3[%c83] : memref<225xf32, #tpu.memory_space<smem>>
    %c84 = arith.constant 84 : index
    %128 = memref.load %arg3[%c84] : memref<225xf32, #tpu.memory_space<smem>>
    %c85 = arith.constant 85 : index
    %129 = memref.load %arg3[%c85] : memref<225xf32, #tpu.memory_space<smem>>
    %c86 = arith.constant 86 : index
    %130 = memref.load %arg3[%c86] : memref<225xf32, #tpu.memory_space<smem>>
    %c87 = arith.constant 87 : index
    %131 = memref.load %arg3[%c87] : memref<225xf32, #tpu.memory_space<smem>>
    %c88 = arith.constant 88 : index
    %132 = memref.load %arg3[%c88] : memref<225xf32, #tpu.memory_space<smem>>
    %c89 = arith.constant 89 : index
    %133 = memref.load %arg3[%c89] : memref<225xf32, #tpu.memory_space<smem>>
    %c90 = arith.constant 90 : index
    %134 = memref.load %arg3[%c90] : memref<225xf32, #tpu.memory_space<smem>>
    %c91 = arith.constant 91 : index
    %135 = memref.load %arg3[%c91] : memref<225xf32, #tpu.memory_space<smem>>
    %c92 = arith.constant 92 : index
    %136 = memref.load %arg3[%c92] : memref<225xf32, #tpu.memory_space<smem>>
    %c93 = arith.constant 93 : index
    %137 = memref.load %arg3[%c93] : memref<225xf32, #tpu.memory_space<smem>>
    %c94 = arith.constant 94 : index
    %138 = memref.load %arg3[%c94] : memref<225xf32, #tpu.memory_space<smem>>
    %c95 = arith.constant 95 : index
    %139 = memref.load %arg3[%c95] : memref<225xf32, #tpu.memory_space<smem>>
    %c96 = arith.constant 96 : index
    %140 = memref.load %arg3[%c96] : memref<225xf32, #tpu.memory_space<smem>>
    %c97 = arith.constant 97 : index
    %141 = memref.load %arg3[%c97] : memref<225xf32, #tpu.memory_space<smem>>
    %c98 = arith.constant 98 : index
    %142 = memref.load %arg3[%c98] : memref<225xf32, #tpu.memory_space<smem>>
    %c99 = arith.constant 99 : index
    %143 = memref.load %arg3[%c99] : memref<225xf32, #tpu.memory_space<smem>>
    %c100 = arith.constant 100 : index
    %144 = memref.load %arg3[%c100] : memref<225xf32, #tpu.memory_space<smem>>
    %c101 = arith.constant 101 : index
    %145 = memref.load %arg3[%c101] : memref<225xf32, #tpu.memory_space<smem>>
    %c102 = arith.constant 102 : index
    %146 = memref.load %arg3[%c102] : memref<225xf32, #tpu.memory_space<smem>>
    %c103 = arith.constant 103 : index
    %147 = memref.load %arg3[%c103] : memref<225xf32, #tpu.memory_space<smem>>
    %c104 = arith.constant 104 : index
    %148 = memref.load %arg3[%c104] : memref<225xf32, #tpu.memory_space<smem>>
    %c105 = arith.constant 105 : index
    %149 = memref.load %arg3[%c105] : memref<225xf32, #tpu.memory_space<smem>>
    %c106 = arith.constant 106 : index
    %150 = memref.load %arg3[%c106] : memref<225xf32, #tpu.memory_space<smem>>
    %c107 = arith.constant 107 : index
    %151 = memref.load %arg3[%c107] : memref<225xf32, #tpu.memory_space<smem>>
    %c108 = arith.constant 108 : index
    %152 = memref.load %arg3[%c108] : memref<225xf32, #tpu.memory_space<smem>>
    %c109 = arith.constant 109 : index
    %153 = memref.load %arg3[%c109] : memref<225xf32, #tpu.memory_space<smem>>
    %c110 = arith.constant 110 : index
    %154 = memref.load %arg3[%c110] : memref<225xf32, #tpu.memory_space<smem>>
    %c111 = arith.constant 111 : index
    %155 = memref.load %arg3[%c111] : memref<225xf32, #tpu.memory_space<smem>>
    %c112 = arith.constant 112 : index
    %156 = memref.load %arg3[%c112] : memref<225xf32, #tpu.memory_space<smem>>
    %c113 = arith.constant 113 : index
    %157 = memref.load %arg3[%c113] : memref<225xf32, #tpu.memory_space<smem>>
    %c114 = arith.constant 114 : index
    %158 = memref.load %arg3[%c114] : memref<225xf32, #tpu.memory_space<smem>>
    %c115 = arith.constant 115 : index
    %159 = memref.load %arg3[%c115] : memref<225xf32, #tpu.memory_space<smem>>
    %c116 = arith.constant 116 : index
    %160 = memref.load %arg3[%c116] : memref<225xf32, #tpu.memory_space<smem>>
    %c117 = arith.constant 117 : index
    %161 = memref.load %arg3[%c117] : memref<225xf32, #tpu.memory_space<smem>>
    %c118 = arith.constant 118 : index
    %162 = memref.load %arg3[%c118] : memref<225xf32, #tpu.memory_space<smem>>
    %c119 = arith.constant 119 : index
    %163 = memref.load %arg3[%c119] : memref<225xf32, #tpu.memory_space<smem>>
    %c120 = arith.constant 120 : index
    %164 = memref.load %arg3[%c120] : memref<225xf32, #tpu.memory_space<smem>>
    %c121 = arith.constant 121 : index
    %165 = memref.load %arg3[%c121] : memref<225xf32, #tpu.memory_space<smem>>
    %c122 = arith.constant 122 : index
    %166 = memref.load %arg3[%c122] : memref<225xf32, #tpu.memory_space<smem>>
    %c123 = arith.constant 123 : index
    %167 = memref.load %arg3[%c123] : memref<225xf32, #tpu.memory_space<smem>>
    %c124 = arith.constant 124 : index
    %168 = memref.load %arg3[%c124] : memref<225xf32, #tpu.memory_space<smem>>
    %c125 = arith.constant 125 : index
    %169 = memref.load %arg3[%c125] : memref<225xf32, #tpu.memory_space<smem>>
    %c126 = arith.constant 126 : index
    %170 = memref.load %arg3[%c126] : memref<225xf32, #tpu.memory_space<smem>>
    %c127 = arith.constant 127 : index
    %171 = memref.load %arg3[%c127] : memref<225xf32, #tpu.memory_space<smem>>
    %c128 = arith.constant 128 : index
    %172 = memref.load %arg3[%c128] : memref<225xf32, #tpu.memory_space<smem>>
    %c129 = arith.constant 129 : index
    %173 = memref.load %arg3[%c129] : memref<225xf32, #tpu.memory_space<smem>>
    %c130 = arith.constant 130 : index
    %174 = memref.load %arg3[%c130] : memref<225xf32, #tpu.memory_space<smem>>
    %c131 = arith.constant 131 : index
    %175 = memref.load %arg3[%c131] : memref<225xf32, #tpu.memory_space<smem>>
    %c132 = arith.constant 132 : index
    %176 = memref.load %arg3[%c132] : memref<225xf32, #tpu.memory_space<smem>>
    %c133 = arith.constant 133 : index
    %177 = memref.load %arg3[%c133] : memref<225xf32, #tpu.memory_space<smem>>
    %c134 = arith.constant 134 : index
    %178 = memref.load %arg3[%c134] : memref<225xf32, #tpu.memory_space<smem>>
    %c135 = arith.constant 135 : index
    %179 = memref.load %arg3[%c135] : memref<225xf32, #tpu.memory_space<smem>>
    %c136 = arith.constant 136 : index
    %180 = memref.load %arg3[%c136] : memref<225xf32, #tpu.memory_space<smem>>
    %c137 = arith.constant 137 : index
    %181 = memref.load %arg3[%c137] : memref<225xf32, #tpu.memory_space<smem>>
    %c138 = arith.constant 138 : index
    %182 = memref.load %arg3[%c138] : memref<225xf32, #tpu.memory_space<smem>>
    %c139 = arith.constant 139 : index
    %183 = memref.load %arg3[%c139] : memref<225xf32, #tpu.memory_space<smem>>
    %c140 = arith.constant 140 : index
    %184 = memref.load %arg3[%c140] : memref<225xf32, #tpu.memory_space<smem>>
    %c141 = arith.constant 141 : index
    %185 = memref.load %arg3[%c141] : memref<225xf32, #tpu.memory_space<smem>>
    %c142 = arith.constant 142 : index
    %186 = memref.load %arg3[%c142] : memref<225xf32, #tpu.memory_space<smem>>
    %c143 = arith.constant 143 : index
    %187 = memref.load %arg3[%c143] : memref<225xf32, #tpu.memory_space<smem>>
    %c144 = arith.constant 144 : index
    %188 = memref.load %arg3[%c144] : memref<225xf32, #tpu.memory_space<smem>>
    %c145 = arith.constant 145 : index
    %189 = memref.load %arg3[%c145] : memref<225xf32, #tpu.memory_space<smem>>
    %c146 = arith.constant 146 : index
    %190 = memref.load %arg3[%c146] : memref<225xf32, #tpu.memory_space<smem>>
    %c147 = arith.constant 147 : index
    %191 = memref.load %arg3[%c147] : memref<225xf32, #tpu.memory_space<smem>>
    %c148 = arith.constant 148 : index
    %192 = memref.load %arg3[%c148] : memref<225xf32, #tpu.memory_space<smem>>
    %c149 = arith.constant 149 : index
    %193 = memref.load %arg3[%c149] : memref<225xf32, #tpu.memory_space<smem>>
    %c150 = arith.constant 150 : index
    %194 = memref.load %arg3[%c150] : memref<225xf32, #tpu.memory_space<smem>>
    %c151 = arith.constant 151 : index
    %195 = memref.load %arg3[%c151] : memref<225xf32, #tpu.memory_space<smem>>
    %c152 = arith.constant 152 : index
    %196 = memref.load %arg3[%c152] : memref<225xf32, #tpu.memory_space<smem>>
    %c153 = arith.constant 153 : index
    %197 = memref.load %arg3[%c153] : memref<225xf32, #tpu.memory_space<smem>>
    %c154 = arith.constant 154 : index
    %198 = memref.load %arg3[%c154] : memref<225xf32, #tpu.memory_space<smem>>
    %c155 = arith.constant 155 : index
    %199 = memref.load %arg3[%c155] : memref<225xf32, #tpu.memory_space<smem>>
    %c156 = arith.constant 156 : index
    %200 = memref.load %arg3[%c156] : memref<225xf32, #tpu.memory_space<smem>>
    %c157 = arith.constant 157 : index
    %201 = memref.load %arg3[%c157] : memref<225xf32, #tpu.memory_space<smem>>
    %c158 = arith.constant 158 : index
    %202 = memref.load %arg3[%c158] : memref<225xf32, #tpu.memory_space<smem>>
    %c159 = arith.constant 159 : index
    %203 = memref.load %arg3[%c159] : memref<225xf32, #tpu.memory_space<smem>>
    %c160 = arith.constant 160 : index
    %204 = memref.load %arg3[%c160] : memref<225xf32, #tpu.memory_space<smem>>
    %c161 = arith.constant 161 : index
    %205 = memref.load %arg3[%c161] : memref<225xf32, #tpu.memory_space<smem>>
    %c162 = arith.constant 162 : index
    %206 = memref.load %arg3[%c162] : memref<225xf32, #tpu.memory_space<smem>>
    %c163 = arith.constant 163 : index
    %207 = memref.load %arg3[%c163] : memref<225xf32, #tpu.memory_space<smem>>
    %c164 = arith.constant 164 : index
    %208 = memref.load %arg3[%c164] : memref<225xf32, #tpu.memory_space<smem>>
    %c165 = arith.constant 165 : index
    %209 = memref.load %arg3[%c165] : memref<225xf32, #tpu.memory_space<smem>>
    %c166 = arith.constant 166 : index
    %210 = memref.load %arg3[%c166] : memref<225xf32, #tpu.memory_space<smem>>
    %c167 = arith.constant 167 : index
    %211 = memref.load %arg3[%c167] : memref<225xf32, #tpu.memory_space<smem>>
    %c168 = arith.constant 168 : index
    %212 = memref.load %arg3[%c168] : memref<225xf32, #tpu.memory_space<smem>>
    %c169 = arith.constant 169 : index
    %213 = memref.load %arg3[%c169] : memref<225xf32, #tpu.memory_space<smem>>
    %c170 = arith.constant 170 : index
    %214 = memref.load %arg3[%c170] : memref<225xf32, #tpu.memory_space<smem>>
    %c171 = arith.constant 171 : index
    %215 = memref.load %arg3[%c171] : memref<225xf32, #tpu.memory_space<smem>>
    %c172 = arith.constant 172 : index
    %216 = memref.load %arg3[%c172] : memref<225xf32, #tpu.memory_space<smem>>
    %c173 = arith.constant 173 : index
    %217 = memref.load %arg3[%c173] : memref<225xf32, #tpu.memory_space<smem>>
    %c174 = arith.constant 174 : index
    %218 = memref.load %arg3[%c174] : memref<225xf32, #tpu.memory_space<smem>>
    %c175 = arith.constant 175 : index
    %219 = memref.load %arg3[%c175] : memref<225xf32, #tpu.memory_space<smem>>
    %c176 = arith.constant 176 : index
    %220 = memref.load %arg3[%c176] : memref<225xf32, #tpu.memory_space<smem>>
    %c177 = arith.constant 177 : index
    %221 = memref.load %arg3[%c177] : memref<225xf32, #tpu.memory_space<smem>>
    %c178 = arith.constant 178 : index
    %222 = memref.load %arg3[%c178] : memref<225xf32, #tpu.memory_space<smem>>
    %c179 = arith.constant 179 : index
    %223 = memref.load %arg3[%c179] : memref<225xf32, #tpu.memory_space<smem>>
    %c180 = arith.constant 180 : index
    %224 = memref.load %arg3[%c180] : memref<225xf32, #tpu.memory_space<smem>>
    %c181 = arith.constant 181 : index
    %225 = memref.load %arg3[%c181] : memref<225xf32, #tpu.memory_space<smem>>
    %c182 = arith.constant 182 : index
    %226 = memref.load %arg3[%c182] : memref<225xf32, #tpu.memory_space<smem>>
    %c183 = arith.constant 183 : index
    %227 = memref.load %arg3[%c183] : memref<225xf32, #tpu.memory_space<smem>>
    %c184 = arith.constant 184 : index
    %228 = memref.load %arg3[%c184] : memref<225xf32, #tpu.memory_space<smem>>
    %c185 = arith.constant 185 : index
    %229 = memref.load %arg3[%c185] : memref<225xf32, #tpu.memory_space<smem>>
    %c186 = arith.constant 186 : index
    %230 = memref.load %arg3[%c186] : memref<225xf32, #tpu.memory_space<smem>>
    %c187 = arith.constant 187 : index
    %231 = memref.load %arg3[%c187] : memref<225xf32, #tpu.memory_space<smem>>
    %c188 = arith.constant 188 : index
    %232 = memref.load %arg3[%c188] : memref<225xf32, #tpu.memory_space<smem>>
    %c189 = arith.constant 189 : index
    %233 = memref.load %arg3[%c189] : memref<225xf32, #tpu.memory_space<smem>>
    %c190 = arith.constant 190 : index
    %234 = memref.load %arg3[%c190] : memref<225xf32, #tpu.memory_space<smem>>
    %c191 = arith.constant 191 : index
    %235 = memref.load %arg3[%c191] : memref<225xf32, #tpu.memory_space<smem>>
    %c192 = arith.constant 192 : index
    %236 = memref.load %arg3[%c192] : memref<225xf32, #tpu.memory_space<smem>>
    %c193 = arith.constant 193 : index
    %237 = memref.load %arg3[%c193] : memref<225xf32, #tpu.memory_space<smem>>
    %c194 = arith.constant 194 : index
    %238 = memref.load %arg3[%c194] : memref<225xf32, #tpu.memory_space<smem>>
    %c195 = arith.constant 195 : index
    %239 = memref.load %arg3[%c195] : memref<225xf32, #tpu.memory_space<smem>>
    %c196 = arith.constant 196 : index
    %240 = memref.load %arg3[%c196] : memref<225xf32, #tpu.memory_space<smem>>
    %c197 = arith.constant 197 : index
    %241 = memref.load %arg3[%c197] : memref<225xf32, #tpu.memory_space<smem>>
    %c198 = arith.constant 198 : index
    %242 = memref.load %arg3[%c198] : memref<225xf32, #tpu.memory_space<smem>>
    %c199 = arith.constant 199 : index
    %243 = memref.load %arg3[%c199] : memref<225xf32, #tpu.memory_space<smem>>
    %c200 = arith.constant 200 : index
    %244 = memref.load %arg3[%c200] : memref<225xf32, #tpu.memory_space<smem>>
    %c201 = arith.constant 201 : index
    %245 = memref.load %arg3[%c201] : memref<225xf32, #tpu.memory_space<smem>>
    %c202 = arith.constant 202 : index
    %246 = memref.load %arg3[%c202] : memref<225xf32, #tpu.memory_space<smem>>
    %c203 = arith.constant 203 : index
    %247 = memref.load %arg3[%c203] : memref<225xf32, #tpu.memory_space<smem>>
    %c204 = arith.constant 204 : index
    %248 = memref.load %arg3[%c204] : memref<225xf32, #tpu.memory_space<smem>>
    %c205 = arith.constant 205 : index
    %249 = memref.load %arg3[%c205] : memref<225xf32, #tpu.memory_space<smem>>
    %c206 = arith.constant 206 : index
    %250 = memref.load %arg3[%c206] : memref<225xf32, #tpu.memory_space<smem>>
    %c207 = arith.constant 207 : index
    %251 = memref.load %arg3[%c207] : memref<225xf32, #tpu.memory_space<smem>>
    %c208 = arith.constant 208 : index
    %252 = memref.load %arg3[%c208] : memref<225xf32, #tpu.memory_space<smem>>
    %c209 = arith.constant 209 : index
    %253 = memref.load %arg3[%c209] : memref<225xf32, #tpu.memory_space<smem>>
    %c210 = arith.constant 210 : index
    %254 = memref.load %arg3[%c210] : memref<225xf32, #tpu.memory_space<smem>>
    %c211 = arith.constant 211 : index
    %255 = memref.load %arg3[%c211] : memref<225xf32, #tpu.memory_space<smem>>
    %c212 = arith.constant 212 : index
    %256 = memref.load %arg3[%c212] : memref<225xf32, #tpu.memory_space<smem>>
    %c213 = arith.constant 213 : index
    %257 = memref.load %arg3[%c213] : memref<225xf32, #tpu.memory_space<smem>>
    %c214 = arith.constant 214 : index
    %258 = memref.load %arg3[%c214] : memref<225xf32, #tpu.memory_space<smem>>
    %c215 = arith.constant 215 : index
    %259 = memref.load %arg3[%c215] : memref<225xf32, #tpu.memory_space<smem>>
    %c216 = arith.constant 216 : index
    %260 = memref.load %arg3[%c216] : memref<225xf32, #tpu.memory_space<smem>>
    %c217 = arith.constant 217 : index
    %261 = memref.load %arg3[%c217] : memref<225xf32, #tpu.memory_space<smem>>
    %c218 = arith.constant 218 : index
    %262 = memref.load %arg3[%c218] : memref<225xf32, #tpu.memory_space<smem>>
    %c219 = arith.constant 219 : index
    %263 = memref.load %arg3[%c219] : memref<225xf32, #tpu.memory_space<smem>>
    %c220 = arith.constant 220 : index
    %264 = memref.load %arg3[%c220] : memref<225xf32, #tpu.memory_space<smem>>
    %c221 = arith.constant 221 : index
    %265 = memref.load %arg3[%c221] : memref<225xf32, #tpu.memory_space<smem>>
    %c222 = arith.constant 222 : index
    %266 = memref.load %arg3[%c222] : memref<225xf32, #tpu.memory_space<smem>>
    %c223 = arith.constant 223 : index
    %267 = memref.load %arg3[%c223] : memref<225xf32, #tpu.memory_space<smem>>
    %c224 = arith.constant 224 : index
    %268 = memref.load %arg3[%c224] : memref<225xf32, #tpu.memory_space<smem>>
    %269 = tpu.iota {dimensions = array<i32: 0>} : vector<16x128xi32>
    %270 = tpu.iota {dimensions = array<i32: 1>} : vector<16x128xi32>
    %c2_i32 = arith.constant 2 : i32
    %271 = vector.broadcast %c2_i32 : i32 to vector<16x128xi32>
    %272 = arith.cmpi sge, %269, %271 : vector<16x128xi32>
    %c2_i32_16 = arith.constant 2 : i32
    %273 = vector.broadcast %c2_i32_16 : i32 to vector<16x128xi32>
    %274 = arith.cmpi sge, %270, %273 : vector<16x128xi32>
    %c1_i32 = arith.constant 1 : i32
    %275 = vector.broadcast %c1_i32 : i32 to vector<16x128xi32>
    %276 = arith.cmpi sge, %269, %275 : vector<16x128xi32>
    %c1_i32_17 = arith.constant 1 : i32
    %277 = vector.broadcast %c1_i32_17 : i32 to vector<16x128xi32>
    %278 = arith.cmpi sge, %270, %277 : vector<16x128xi32>
    %c15_i32 = arith.constant 15 : i32
    %279 = vector.broadcast %c15_i32 : i32 to vector<16x128xi32>
    %280 = arith.cmpi slt, %269, %279 : vector<16x128xi32>
    %c127_i32 = arith.constant 127 : i32
    %281 = vector.broadcast %c127_i32 : i32 to vector<16x128xi32>
    %282 = arith.cmpi slt, %270, %281 : vector<16x128xi32>
    %c14_i32 = arith.constant 14 : i32
    %283 = vector.broadcast %c14_i32 : i32 to vector<16x128xi32>
    %284 = arith.cmpi slt, %269, %283 : vector<16x128xi32>
    %c126_i32 = arith.constant 126 : i32
    %285 = vector.broadcast %c126_i32 : i32 to vector<16x128xi32>
    %286 = arith.cmpi slt, %270, %285 : vector<16x128xi32>
    %cst_18 = arith.constant 0.000000e+00 : f32
    %287 = vector.broadcast %cst_18 : f32 to vector<16x128xf32>
    %cst_19 = arith.constant 0.000000e+00 : f32
    %288 = vector.broadcast %cst_19 : f32 to vector<16x128xf32>
    %cst_20 = arith.constant 0.000000e+00 : f32
    %289 = vector.broadcast %cst_20 : f32 to vector<16x128xf32>
    %c2_i32_21 = arith.constant 2 : i32
    %290 = tpu.dynamic_rotate %33 by %c2_i32_21 dim 0 : vector<16x128xf32>, i32 -> vector<16x128xf32>
    %cst_22 = arith.constant 0.000000e+00 : f32
    %291 = vector.broadcast %cst_22 : f32 to vector<16x128xf32>
    %292 = arith.select %272, %290, %291 : vector<16x128xi1>, vector<16x128xf32>
    %c2_i32_23 = arith.constant 2 : i32
    %293 = tpu.dynamic_rotate %292 by %c2_i32_23 dim 1 : vector<16x128xf32>, i32 -> vector<16x128xf32>
    %cst_24 = arith.constant 0.000000e+00 : f32
    %294 = vector.broadcast %cst_24 : f32 to vector<16x128xf32>
    %295 = arith.select %274, %293, %294 : vector<16x128xi1>, vector<16x128xf32>
    %296 = vector.broadcast %44 : f32 to vector<16x128xf32>
    %297 = arith.mulf %296, %295 : vector<16x128xf32>
    %298 = arith.addf %287, %297 : vector<16x128xf32>
    %299 = vector.broadcast %119 : f32 to vector<16x128xf32>
    %300 = arith.mulf %299, %295 : vector<16x128xf32>
    %301 = arith.addf %288, %300 : vector<16x128xf32>
    %302 = vector.broadcast %194 : f32 to vector<16x128xf32>
    %303 = arith.mulf %302, %295 : vector<16x128xf32>
    %304 = arith.addf %289, %303 : vector<16x128xf32>
    %c1_i32_25 = arith.constant 1 : i32
    %305 = tpu.dynamic_rotate %292 by %c1_i32_25 dim 1 : vector<16x128xf32>, i32 -> vector<16x128xf32>
    %cst_26 = arith.constant 0.000000e+00 : f32
    %306 = vector.broadcast %cst_26 : f32 to vector<16x128xf32>
    %307 = arith.select %278, %305, %306 : vector<16x128xi1>, vector<16x128xf32>
    %308 = vector.broadcast %45 : f32 to vector<16x128xf32>
    %309 = arith.mulf %308, %307 : vector<16x128xf32>
    %310 = arith.addf %298, %309 : vector<16x128xf32>
    %311 = vector.broadcast %120 : f32 to vector<16x128xf32>
    %312 = arith.mulf %311, %307 : vector<16x128xf32>
    %313 = arith.addf %301, %312 : vector<16x128xf32>
    %314 = vector.broadcast %195 : f32 to vector<16x128xf32>
    %315 = arith.mulf %314, %307 : vector<16x128xf32>
    %316 = arith.addf %304, %315 : vector<16x128xf32>
    %317 = vector.broadcast %46 : f32 to vector<16x128xf32>
    %318 = arith.mulf %317, %292 : vector<16x128xf32>
    %319 = arith.addf %310, %318 : vector<16x128xf32>
    %320 = vector.broadcast %121 : f32 to vector<16x128xf32>
    %321 = arith.mulf %320, %292 : vector<16x128xf32>
    %322 = arith.addf %313, %321 : vector<16x128xf32>
    %323 = vector.broadcast %196 : f32 to vector<16x128xf32>
    %324 = arith.mulf %323, %292 : vector<16x128xf32>
    %325 = arith.addf %316, %324 : vector<16x128xf32>
    %c127_i32_27 = arith.constant 127 : i32
    %326 = tpu.dynamic_rotate %292 by %c127_i32_27 dim 1 : vector<16x128xf32>, i32 -> vector<16x128xf32>
    %cst_28 = arith.constant 0.000000e+00 : f32
    %327 = vector.broadcast %cst_28 : f32 to vector<16x128xf32>
    %328 = arith.select %282, %326, %327 : vector<16x128xi1>, vector<16x128xf32>
    %329 = vector.broadcast %47 : f32 to vector<16x128xf32>
    %330 = arith.mulf %329, %328 : vector<16x128xf32>
    %331 = arith.addf %319, %330 : vector<16x128xf32>
    %332 = vector.broadcast %122 : f32 to vector<16x128xf32>
    %333 = arith.mulf %332, %328 : vector<16x128xf32>
    %334 = arith.addf %322, %333 : vector<16x128xf32>
    %335 = vector.broadcast %197 : f32 to vector<16x128xf32>
    %336 = arith.mulf %335, %328 : vector<16x128xf32>
    %337 = arith.addf %325, %336 : vector<16x128xf32>
    %c126_i32_29 = arith.constant 126 : i32
    %338 = tpu.dynamic_rotate %292 by %c126_i32_29 dim 1 : vector<16x128xf32>, i32 -> vector<16x128xf32>
    %cst_30 = arith.constant 0.000000e+00 : f32
    %339 = vector.broadcast %cst_30 : f32 to vector<16x128xf32>
    %340 = arith.select %286, %338, %339 : vector<16x128xi1>, vector<16x128xf32>
    %341 = vector.broadcast %48 : f32 to vector<16x128xf32>
    %342 = arith.mulf %341, %340 : vector<16x128xf32>
    %343 = arith.addf %331, %342 : vector<16x128xf32>
    %344 = vector.broadcast %123 : f32 to vector<16x128xf32>
    %345 = arith.mulf %344, %340 : vector<16x128xf32>
    %346 = arith.addf %334, %345 : vector<16x128xf32>
    %347 = vector.broadcast %198 : f32 to vector<16x128xf32>
    %348 = arith.mulf %347, %340 : vector<16x128xf32>
    %349 = arith.addf %337, %348 : vector<16x128xf32>
    %c1_i32_31 = arith.constant 1 : i32
    %350 = tpu.dynamic_rotate %33 by %c1_i32_31 dim 0 : vector<16x128xf32>, i32 -> vector<16x128xf32>
    %cst_32 = arith.constant 0.000000e+00 : f32
    %351 = vector.broadcast %cst_32 : f32 to vector<16x128xf32>
    %352 = arith.select %276, %350, %351 : vector<16x128xi1>, vector<16x128xf32>
    %c2_i32_33 = arith.constant 2 : i32
    %353 = tpu.dynamic_rotate %352 by %c2_i32_33 dim 1 : vector<16x128xf32>, i32 -> vector<16x128xf32>
    %cst_34 = arith.constant 0.000000e+00 : f32
    %354 = vector.broadcast %cst_34 : f32 to vector<16x128xf32>
    %355 = arith.select %274, %353, %354 : vector<16x128xi1>, vector<16x128xf32>
    %356 = vector.broadcast %49 : f32 to vector<16x128xf32>
    %357 = arith.mulf %356, %355 : vector<16x128xf32>
    %358 = arith.addf %343, %357 : vector<16x128xf32>
    %359 = vector.broadcast %124 : f32 to vector<16x128xf32>
    %360 = arith.mulf %359, %355 : vector<16x128xf32>
    %361 = arith.addf %346, %360 : vector<16x128xf32>
    %362 = vector.broadcast %199 : f32 to vector<16x128xf32>
    %363 = arith.mulf %362, %355 : vector<16x128xf32>
    %364 = arith.addf %349, %363 : vector<16x128xf32>
    %c1_i32_35 = arith.constant 1 : i32
    %365 = tpu.dynamic_rotate %352 by %c1_i32_35 dim 1 : vector<16x128xf32>, i32 -> vector<16x128xf32>
    %cst_36 = arith.constant 0.000000e+00 : f32
    %366 = vector.broadcast %cst_36 : f32 to vector<16x128xf32>
    %367 = arith.select %278, %365, %366 : vector<16x128xi1>, vector<16x128xf32>
    %368 = vector.broadcast %50 : f32 to vector<16x128xf32>
    %369 = arith.mulf %368, %367 : vector<16x128xf32>
    %370 = arith.addf %358, %369 : vector<16x128xf32>
    %371 = vector.broadcast %125 : f32 to vector<16x128xf32>
    %372 = arith.mulf %371, %367 : vector<16x128xf32>
    %373 = arith.addf %361, %372 : vector<16x128xf32>
    %374 = vector.broadcast %200 : f32 to vector<16x128xf32>
    %375 = arith.mulf %374, %367 : vector<16x128xf32>
    %376 = arith.addf %364, %375 : vector<16x128xf32>
    %377 = vector.broadcast %51 : f32 to vector<16x128xf32>
    %378 = arith.mulf %377, %352 : vector<16x128xf32>
    %379 = arith.addf %370, %378 : vector<16x128xf32>
    %380 = vector.broadcast %126 : f32 to vector<16x128xf32>
    %381 = arith.mulf %380, %352 : vector<16x128xf32>
    %382 = arith.addf %373, %381 : vector<16x128xf32>
    %383 = vector.broadcast %201 : f32 to vector<16x128xf32>
    %384 = arith.mulf %383, %352 : vector<16x128xf32>
    %385 = arith.addf %376, %384 : vector<16x128xf32>
    %c127_i32_37 = arith.constant 127 : i32
    %386 = tpu.dynamic_rotate %352 by %c127_i32_37 dim 1 : vector<16x128xf32>, i32 -> vector<16x128xf32>
    %cst_38 = arith.constant 0.000000e+00 : f32
    %387 = vector.broadcast %cst_38 : f32 to vector<16x128xf32>
    %388 = arith.select %282, %386, %387 : vector<16x128xi1>, vector<16x128xf32>
    %389 = vector.broadcast %52 : f32 to vector<16x128xf32>
    %390 = arith.mulf %389, %388 : vector<16x128xf32>
    %391 = arith.addf %379, %390 : vector<16x128xf32>
    %392 = vector.broadcast %127 : f32 to vector<16x128xf32>
    %393 = arith.mulf %392, %388 : vector<16x128xf32>
    %394 = arith.addf %382, %393 : vector<16x128xf32>
    %395 = vector.broadcast %202 : f32 to vector<16x128xf32>
    %396 = arith.mulf %395, %388 : vector<16x128xf32>
    %397 = arith.addf %385, %396 : vector<16x128xf32>
    %c126_i32_39 = arith.constant 126 : i32
    %398 = tpu.dynamic_rotate %352 by %c126_i32_39 dim 1 : vector<16x128xf32>, i32 -> vector<16x128xf32>
    %cst_40 = arith.constant 0.000000e+00 : f32
    %399 = vector.broadcast %cst_40 : f32 to vector<16x128xf32>
    %400 = arith.select %286, %398, %399 : vector<16x128xi1>, vector<16x128xf32>
    %401 = vector.broadcast %53 : f32 to vector<16x128xf32>
    %402 = arith.mulf %401, %400 : vector<16x128xf32>
    %403 = arith.addf %391, %402 : vector<16x128xf32>
    %404 = vector.broadcast %128 : f32 to vector<16x128xf32>
    %405 = arith.mulf %404, %400 : vector<16x128xf32>
    %406 = arith.addf %394, %405 : vector<16x128xf32>
    %407 = vector.broadcast %203 : f32 to vector<16x128xf32>
    %408 = arith.mulf %407, %400 : vector<16x128xf32>
    %409 = arith.addf %397, %408 : vector<16x128xf32>
    %c2_i32_41 = arith.constant 2 : i32
    %410 = tpu.dynamic_rotate %33 by %c2_i32_41 dim 1 : vector<16x128xf32>, i32 -> vector<16x128xf32>
    %cst_42 = arith.constant 0.000000e+00 : f32
    %411 = vector.broadcast %cst_42 : f32 to vector<16x128xf32>
    %412 = arith.select %274, %410, %411 : vector<16x128xi1>, vector<16x128xf32>
    %413 = vector.broadcast %54 : f32 to vector<16x128xf32>
    %414 = arith.mulf %413, %412 : vector<16x128xf32>
    %415 = arith.addf %403, %414 : vector<16x128xf32>
    %416 = vector.broadcast %129 : f32 to vector<16x128xf32>
    %417 = arith.mulf %416, %412 : vector<16x128xf32>
    %418 = arith.addf %406, %417 : vector<16x128xf32>
    %419 = vector.broadcast %204 : f32 to vector<16x128xf32>
    %420 = arith.mulf %419, %412 : vector<16x128xf32>
    %421 = arith.addf %409, %420 : vector<16x128xf32>
    %c1_i32_43 = arith.constant 1 : i32
    %422 = tpu.dynamic_rotate %33 by %c1_i32_43 dim 1 : vector<16x128xf32>, i32 -> vector<16x128xf32>
    %cst_44 = arith.constant 0.000000e+00 : f32
    %423 = vector.broadcast %cst_44 : f32 to vector<16x128xf32>
    %424 = arith.select %278, %422, %423 : vector<16x128xi1>, vector<16x128xf32>
    %425 = vector.broadcast %55 : f32 to vector<16x128xf32>
    %426 = arith.mulf %425, %424 : vector<16x128xf32>
    %427 = arith.addf %415, %426 : vector<16x128xf32>
    %428 = vector.broadcast %130 : f32 to vector<16x128xf32>
    %429 = arith.mulf %428, %424 : vector<16x128xf32>
    %430 = arith.addf %418, %429 : vector<16x128xf32>
    %431 = vector.broadcast %205 : f32 to vector<16x128xf32>
    %432 = arith.mulf %431, %424 : vector<16x128xf32>
    %433 = arith.addf %421, %432 : vector<16x128xf32>
    %434 = vector.broadcast %56 : f32 to vector<16x128xf32>
    %435 = arith.mulf %434, %33 : vector<16x128xf32>
    %436 = arith.addf %427, %435 : vector<16x128xf32>
    %437 = vector.broadcast %131 : f32 to vector<16x128xf32>
    %438 = arith.mulf %437, %33 : vector<16x128xf32>
    %439 = arith.addf %430, %438 : vector<16x128xf32>
    %440 = vector.broadcast %206 : f32 to vector<16x128xf32>
    %441 = arith.mulf %440, %33 : vector<16x128xf32>
    %442 = arith.addf %433, %441 : vector<16x128xf32>
    %c127_i32_45 = arith.constant 127 : i32
    %443 = tpu.dynamic_rotate %33 by %c127_i32_45 dim 1 : vector<16x128xf32>, i32 -> vector<16x128xf32>
    %cst_46 = arith.constant 0.000000e+00 : f32
    %444 = vector.broadcast %cst_46 : f32 to vector<16x128xf32>
    %445 = arith.select %282, %443, %444 : vector<16x128xi1>, vector<16x128xf32>
    %446 = vector.broadcast %57 : f32 to vector<16x128xf32>
    %447 = arith.mulf %446, %445 : vector<16x128xf32>
    %448 = arith.addf %436, %447 : vector<16x128xf32>
    %449 = vector.broadcast %132 : f32 to vector<16x128xf32>
    %450 = arith.mulf %449, %445 : vector<16x128xf32>
    %451 = arith.addf %439, %450 : vector<16x128xf32>
    %452 = vector.broadcast %207 : f32 to vector<16x128xf32>
    %453 = arith.mulf %452, %445 : vector<16x128xf32>
    %454 = arith.addf %442, %453 : vector<16x128xf32>
    %c126_i32_47 = arith.constant 126 : i32
    %455 = tpu.dynamic_rotate %33 by %c126_i32_47 dim 1 : vector<16x128xf32>, i32 -> vector<16x128xf32>
    %cst_48 = arith.constant 0.000000e+00 : f32
    %456 = vector.broadcast %cst_48 : f32 to vector<16x128xf32>
    %457 = arith.select %286, %455, %456 : vector<16x128xi1>, vector<16x128xf32>
    %458 = vector.broadcast %58 : f32 to vector<16x128xf32>
    %459 = arith.mulf %458, %457 : vector<16x128xf32>
    %460 = arith.addf %448, %459 : vector<16x128xf32>
    %461 = vector.broadcast %133 : f32 to vector<16x128xf32>
    %462 = arith.mulf %461, %457 : vector<16x128xf32>
    %463 = arith.addf %451, %462 : vector<16x128xf32>
    %464 = vector.broadcast %208 : f32 to vector<16x128xf32>
    %465 = arith.mulf %464, %457 : vector<16x128xf32>
    %466 = arith.addf %454, %465 : vector<16x128xf32>
    %c15_i32_49 = arith.constant 15 : i32
    %467 = tpu.dynamic_rotate %33 by %c15_i32_49 dim 0 : vector<16x128xf32>, i32 -> vector<16x128xf32>
    %cst_50 = arith.constant 0.000000e+00 : f32
    %468 = vector.broadcast %cst_50 : f32 to vector<16x128xf32>
    %469 = arith.select %280, %467, %468 : vector<16x128xi1>, vector<16x128xf32>
    %c2_i32_51 = arith.constant 2 : i32
    %470 = tpu.dynamic_rotate %469 by %c2_i32_51 dim 1 : vector<16x128xf32>, i32 -> vector<16x128xf32>
    %cst_52 = arith.constant 0.000000e+00 : f32
    %471 = vector.broadcast %cst_52 : f32 to vector<16x128xf32>
    %472 = arith.select %274, %470, %471 : vector<16x128xi1>, vector<16x128xf32>
    %473 = vector.broadcast %59 : f32 to vector<16x128xf32>
    %474 = arith.mulf %473, %472 : vector<16x128xf32>
    %475 = arith.addf %460, %474 : vector<16x128xf32>
    %476 = vector.broadcast %134 : f32 to vector<16x128xf32>
    %477 = arith.mulf %476, %472 : vector<16x128xf32>
    %478 = arith.addf %463, %477 : vector<16x128xf32>
    %479 = vector.broadcast %209 : f32 to vector<16x128xf32>
    %480 = arith.mulf %479, %472 : vector<16x128xf32>
    %481 = arith.addf %466, %480 : vector<16x128xf32>
    %c1_i32_53 = arith.constant 1 : i32
    %482 = tpu.dynamic_rotate %469 by %c1_i32_53 dim 1 : vector<16x128xf32>, i32 -> vector<16x128xf32>
    %cst_54 = arith.constant 0.000000e+00 : f32
    %483 = vector.broadcast %cst_54 : f32 to vector<16x128xf32>
    %484 = arith.select %278, %482, %483 : vector<16x128xi1>, vector<16x128xf32>
    %485 = vector.broadcast %60 : f32 to vector<16x128xf32>
    %486 = arith.mulf %485, %484 : vector<16x128xf32>
    %487 = arith.addf %475, %486 : vector<16x128xf32>
    %488 = vector.broadcast %135 : f32 to vector<16x128xf32>
    %489 = arith.mulf %488, %484 : vector<16x128xf32>
    %490 = arith.addf %478, %489 : vector<16x128xf32>
    %491 = vector.broadcast %210 : f32 to vector<16x128xf32>
    %492 = arith.mulf %491, %484 : vector<16x128xf32>
    %493 = arith.addf %481, %492 : vector<16x128xf32>
    %494 = vector.broadcast %61 : f32 to vector<16x128xf32>
    %495 = arith.mulf %494, %469 : vector<16x128xf32>
    %496 = arith.addf %487, %495 : vector<16x128xf32>
    %497 = vector.broadcast %136 : f32 to vector<16x128xf32>
    %498 = arith.mulf %497, %469 : vector<16x128xf32>
    %499 = arith.addf %490, %498 : vector<16x128xf32>
    %500 = vector.broadcast %211 : f32 to vector<16x128xf32>
    %501 = arith.mulf %500, %469 : vector<16x128xf32>
    %502 = arith.addf %493, %501 : vector<16x128xf32>
    %c127_i32_55 = arith.constant 127 : i32
    %503 = tpu.dynamic_rotate %469 by %c127_i32_55 dim 1 : vector<16x128xf32>, i32 -> vector<16x128xf32>
    %cst_56 = arith.constant 0.000000e+00 : f32
    %504 = vector.broadcast %cst_56 : f32 to vector<16x128xf32>
    %505 = arith.select %282, %503, %504 : vector<16x128xi1>, vector<16x128xf32>
    %506 = vector.broadcast %62 : f32 to vector<16x128xf32>
    %507 = arith.mulf %506, %505 : vector<16x128xf32>
    %508 = arith.addf %496, %507 : vector<16x128xf32>
    %509 = vector.broadcast %137 : f32 to vector<16x128xf32>
    %510 = arith.mulf %509, %505 : vector<16x128xf32>
    %511 = arith.addf %499, %510 : vector<16x128xf32>
    %512 = vector.broadcast %212 : f32 to vector<16x128xf32>
    %513 = arith.mulf %512, %505 : vector<16x128xf32>
    %514 = arith.addf %502, %513 : vector<16x128xf32>
    %c126_i32_57 = arith.constant 126 : i32
    %515 = tpu.dynamic_rotate %469 by %c126_i32_57 dim 1 : vector<16x128xf32>, i32 -> vector<16x128xf32>
    %cst_58 = arith.constant 0.000000e+00 : f32
    %516 = vector.broadcast %cst_58 : f32 to vector<16x128xf32>
    %517 = arith.select %286, %515, %516 : vector<16x128xi1>, vector<16x128xf32>
    %518 = vector.broadcast %63 : f32 to vector<16x128xf32>
    %519 = arith.mulf %518, %517 : vector<16x128xf32>
    %520 = arith.addf %508, %519 : vector<16x128xf32>
    %521 = vector.broadcast %138 : f32 to vector<16x128xf32>
    %522 = arith.mulf %521, %517 : vector<16x128xf32>
    %523 = arith.addf %511, %522 : vector<16x128xf32>
    %524 = vector.broadcast %213 : f32 to vector<16x128xf32>
    %525 = arith.mulf %524, %517 : vector<16x128xf32>
    %526 = arith.addf %514, %525 : vector<16x128xf32>
    %c14_i32_59 = arith.constant 14 : i32
    %527 = tpu.dynamic_rotate %33 by %c14_i32_59 dim 0 : vector<16x128xf32>, i32 -> vector<16x128xf32>
    %cst_60 = arith.constant 0.000000e+00 : f32
    %528 = vector.broadcast %cst_60 : f32 to vector<16x128xf32>
    %529 = arith.select %284, %527, %528 : vector<16x128xi1>, vector<16x128xf32>
    %c2_i32_61 = arith.constant 2 : i32
    %530 = tpu.dynamic_rotate %529 by %c2_i32_61 dim 1 : vector<16x128xf32>, i32 -> vector<16x128xf32>
    %cst_62 = arith.constant 0.000000e+00 : f32
    %531 = vector.broadcast %cst_62 : f32 to vector<16x128xf32>
    %532 = arith.select %274, %530, %531 : vector<16x128xi1>, vector<16x128xf32>
    %533 = vector.broadcast %64 : f32 to vector<16x128xf32>
    %534 = arith.mulf %533, %532 : vector<16x128xf32>
    %535 = arith.addf %520, %534 : vector<16x128xf32>
    %536 = vector.broadcast %139 : f32 to vector<16x128xf32>
    %537 = arith.mulf %536, %532 : vector<16x128xf32>
    %538 = arith.addf %523, %537 : vector<16x128xf32>
    %539 = vector.broadcast %214 : f32 to vector<16x128xf32>
    %540 = arith.mulf %539, %532 : vector<16x128xf32>
    %541 = arith.addf %526, %540 : vector<16x128xf32>
    %c1_i32_63 = arith.constant 1 : i32
    %542 = tpu.dynamic_rotate %529 by %c1_i32_63 dim 1 : vector<16x128xf32>, i32 -> vector<16x128xf32>
    %cst_64 = arith.constant 0.000000e+00 : f32
    %543 = vector.broadcast %cst_64 : f32 to vector<16x128xf32>
    %544 = arith.select %278, %542, %543 : vector<16x128xi1>, vector<16x128xf32>
    %545 = vector.broadcast %65 : f32 to vector<16x128xf32>
    %546 = arith.mulf %545, %544 : vector<16x128xf32>
    %547 = arith.addf %535, %546 : vector<16x128xf32>
    %548 = vector.broadcast %140 : f32 to vector<16x128xf32>
    %549 = arith.mulf %548, %544 : vector<16x128xf32>
    %550 = arith.addf %538, %549 : vector<16x128xf32>
    %551 = vector.broadcast %215 : f32 to vector<16x128xf32>
    %552 = arith.mulf %551, %544 : vector<16x128xf32>
    %553 = arith.addf %541, %552 : vector<16x128xf32>
    %554 = vector.broadcast %66 : f32 to vector<16x128xf32>
    %555 = arith.mulf %554, %529 : vector<16x128xf32>
    %556 = arith.addf %547, %555 : vector<16x128xf32>
    %557 = vector.broadcast %141 : f32 to vector<16x128xf32>
    %558 = arith.mulf %557, %529 : vector<16x128xf32>
    %559 = arith.addf %550, %558 : vector<16x128xf32>
    %560 = vector.broadcast %216 : f32 to vector<16x128xf32>
    %561 = arith.mulf %560, %529 : vector<16x128xf32>
    %562 = arith.addf %553, %561 : vector<16x128xf32>
    %c127_i32_65 = arith.constant 127 : i32
    %563 = tpu.dynamic_rotate %529 by %c127_i32_65 dim 1 : vector<16x128xf32>, i32 -> vector<16x128xf32>
    %cst_66 = arith.constant 0.000000e+00 : f32
    %564 = vector.broadcast %cst_66 : f32 to vector<16x128xf32>
    %565 = arith.select %282, %563, %564 : vector<16x128xi1>, vector<16x128xf32>
    %566 = vector.broadcast %67 : f32 to vector<16x128xf32>
    %567 = arith.mulf %566, %565 : vector<16x128xf32>
    %568 = arith.addf %556, %567 : vector<16x128xf32>
    %569 = vector.broadcast %142 : f32 to vector<16x128xf32>
    %570 = arith.mulf %569, %565 : vector<16x128xf32>
    %571 = arith.addf %559, %570 : vector<16x128xf32>
    %572 = vector.broadcast %217 : f32 to vector<16x128xf32>
    %573 = arith.mulf %572, %565 : vector<16x128xf32>
    %574 = arith.addf %562, %573 : vector<16x128xf32>
    %c126_i32_67 = arith.constant 126 : i32
    %575 = tpu.dynamic_rotate %529 by %c126_i32_67 dim 1 : vector<16x128xf32>, i32 -> vector<16x128xf32>
    %cst_68 = arith.constant 0.000000e+00 : f32
    %576 = vector.broadcast %cst_68 : f32 to vector<16x128xf32>
    %577 = arith.select %286, %575, %576 : vector<16x128xi1>, vector<16x128xf32>
    %578 = vector.broadcast %68 : f32 to vector<16x128xf32>
    %579 = arith.mulf %578, %577 : vector<16x128xf32>
    %580 = arith.addf %568, %579 : vector<16x128xf32>
    %581 = vector.broadcast %143 : f32 to vector<16x128xf32>
    %582 = arith.mulf %581, %577 : vector<16x128xf32>
    %583 = arith.addf %571, %582 : vector<16x128xf32>
    %584 = vector.broadcast %218 : f32 to vector<16x128xf32>
    %585 = arith.mulf %584, %577 : vector<16x128xf32>
    %586 = arith.addf %574, %585 : vector<16x128xf32>
    %c2_i32_69 = arith.constant 2 : i32
    %587 = tpu.dynamic_rotate %38 by %c2_i32_69 dim 0 : vector<16x128xf32>, i32 -> vector<16x128xf32>
    %cst_70 = arith.constant 0.000000e+00 : f32
    %588 = vector.broadcast %cst_70 : f32 to vector<16x128xf32>
    %589 = arith.select %272, %587, %588 : vector<16x128xi1>, vector<16x128xf32>
    %c2_i32_71 = arith.constant 2 : i32
    %590 = tpu.dynamic_rotate %589 by %c2_i32_71 dim 1 : vector<16x128xf32>, i32 -> vector<16x128xf32>
    %cst_72 = arith.constant 0.000000e+00 : f32
    %591 = vector.broadcast %cst_72 : f32 to vector<16x128xf32>
    %592 = arith.select %274, %590, %591 : vector<16x128xi1>, vector<16x128xf32>
    %593 = vector.broadcast %69 : f32 to vector<16x128xf32>
    %594 = arith.mulf %593, %592 : vector<16x128xf32>
    %595 = arith.addf %580, %594 : vector<16x128xf32>
    %596 = vector.broadcast %144 : f32 to vector<16x128xf32>
    %597 = arith.mulf %596, %592 : vector<16x128xf32>
    %598 = arith.addf %583, %597 : vector<16x128xf32>
    %599 = vector.broadcast %219 : f32 to vector<16x128xf32>
    %600 = arith.mulf %599, %592 : vector<16x128xf32>
    %601 = arith.addf %586, %600 : vector<16x128xf32>
    %c1_i32_73 = arith.constant 1 : i32
    %602 = tpu.dynamic_rotate %589 by %c1_i32_73 dim 1 : vector<16x128xf32>, i32 -> vector<16x128xf32>
    %cst_74 = arith.constant 0.000000e+00 : f32
    %603 = vector.broadcast %cst_74 : f32 to vector<16x128xf32>
    %604 = arith.select %278, %602, %603 : vector<16x128xi1>, vector<16x128xf32>
    %605 = vector.broadcast %70 : f32 to vector<16x128xf32>
    %606 = arith.mulf %605, %604 : vector<16x128xf32>
    %607 = arith.addf %595, %606 : vector<16x128xf32>
    %608 = vector.broadcast %145 : f32 to vector<16x128xf32>
    %609 = arith.mulf %608, %604 : vector<16x128xf32>
    %610 = arith.addf %598, %609 : vector<16x128xf32>
    %611 = vector.broadcast %220 : f32 to vector<16x128xf32>
    %612 = arith.mulf %611, %604 : vector<16x128xf32>
    %613 = arith.addf %601, %612 : vector<16x128xf32>
    %614 = vector.broadcast %71 : f32 to vector<16x128xf32>
    %615 = arith.mulf %614, %589 : vector<16x128xf32>
    %616 = arith.addf %607, %615 : vector<16x128xf32>
    %617 = vector.broadcast %146 : f32 to vector<16x128xf32>
    %618 = arith.mulf %617, %589 : vector<16x128xf32>
    %619 = arith.addf %610, %618 : vector<16x128xf32>
    %620 = vector.broadcast %221 : f32 to vector<16x128xf32>
    %621 = arith.mulf %620, %589 : vector<16x128xf32>
    %622 = arith.addf %613, %621 : vector<16x128xf32>
    %c127_i32_75 = arith.constant 127 : i32
    %623 = tpu.dynamic_rotate %589 by %c127_i32_75 dim 1 : vector<16x128xf32>, i32 -> vector<16x128xf32>
    %cst_76 = arith.constant 0.000000e+00 : f32
    %624 = vector.broadcast %cst_76 : f32 to vector<16x128xf32>
    %625 = arith.select %282, %623, %624 : vector<16x128xi1>, vector<16x128xf32>
    %626 = vector.broadcast %72 : f32 to vector<16x128xf32>
    %627 = arith.mulf %626, %625 : vector<16x128xf32>
    %628 = arith.addf %616, %627 : vector<16x128xf32>
    %629 = vector.broadcast %147 : f32 to vector<16x128xf32>
    %630 = arith.mulf %629, %625 : vector<16x128xf32>
    %631 = arith.addf %619, %630 : vector<16x128xf32>
    %632 = vector.broadcast %222 : f32 to vector<16x128xf32>
    %633 = arith.mulf %632, %625 : vector<16x128xf32>
    %634 = arith.addf %622, %633 : vector<16x128xf32>
    %c126_i32_77 = arith.constant 126 : i32
    %635 = tpu.dynamic_rotate %589 by %c126_i32_77 dim 1 : vector<16x128xf32>, i32 -> vector<16x128xf32>
    %cst_78 = arith.constant 0.000000e+00 : f32
    %636 = vector.broadcast %cst_78 : f32 to vector<16x128xf32>
    %637 = arith.select %286, %635, %636 : vector<16x128xi1>, vector<16x128xf32>
    %638 = vector.broadcast %73 : f32 to vector<16x128xf32>
    %639 = arith.mulf %638, %637 : vector<16x128xf32>
    %640 = arith.addf %628, %639 : vector<16x128xf32>
    %641 = vector.broadcast %148 : f32 to vector<16x128xf32>
    %642 = arith.mulf %641, %637 : vector<16x128xf32>
    %643 = arith.addf %631, %642 : vector<16x128xf32>
    %644 = vector.broadcast %223 : f32 to vector<16x128xf32>
    %645 = arith.mulf %644, %637 : vector<16x128xf32>
    %646 = arith.addf %634, %645 : vector<16x128xf32>
    %c1_i32_79 = arith.constant 1 : i32
    %647 = tpu.dynamic_rotate %38 by %c1_i32_79 dim 0 : vector<16x128xf32>, i32 -> vector<16x128xf32>
    %cst_80 = arith.constant 0.000000e+00 : f32
    %648 = vector.broadcast %cst_80 : f32 to vector<16x128xf32>
    %649 = arith.select %276, %647, %648 : vector<16x128xi1>, vector<16x128xf32>
    %c2_i32_81 = arith.constant 2 : i32
    %650 = tpu.dynamic_rotate %649 by %c2_i32_81 dim 1 : vector<16x128xf32>, i32 -> vector<16x128xf32>
    %cst_82 = arith.constant 0.000000e+00 : f32
    %651 = vector.broadcast %cst_82 : f32 to vector<16x128xf32>
    %652 = arith.select %274, %650, %651 : vector<16x128xi1>, vector<16x128xf32>
    %653 = vector.broadcast %74 : f32 to vector<16x128xf32>
    %654 = arith.mulf %653, %652 : vector<16x128xf32>
    %655 = arith.addf %640, %654 : vector<16x128xf32>
    %656 = vector.broadcast %149 : f32 to vector<16x128xf32>
    %657 = arith.mulf %656, %652 : vector<16x128xf32>
    %658 = arith.addf %643, %657 : vector<16x128xf32>
    %659 = vector.broadcast %224 : f32 to vector<16x128xf32>
    %660 = arith.mulf %659, %652 : vector<16x128xf32>
    %661 = arith.addf %646, %660 : vector<16x128xf32>
    %c1_i32_83 = arith.constant 1 : i32
    %662 = tpu.dynamic_rotate %649 by %c1_i32_83 dim 1 : vector<16x128xf32>, i32 -> vector<16x128xf32>
    %cst_84 = arith.constant 0.000000e+00 : f32
    %663 = vector.broadcast %cst_84 : f32 to vector<16x128xf32>
    %664 = arith.select %278, %662, %663 : vector<16x128xi1>, vector<16x128xf32>
    %665 = vector.broadcast %75 : f32 to vector<16x128xf32>
    %666 = arith.mulf %665, %664 : vector<16x128xf32>
    %667 = arith.addf %655, %666 : vector<16x128xf32>
    %668 = vector.broadcast %150 : f32 to vector<16x128xf32>
    %669 = arith.mulf %668, %664 : vector<16x128xf32>
    %670 = arith.addf %658, %669 : vector<16x128xf32>
    %671 = vector.broadcast %225 : f32 to vector<16x128xf32>
    %672 = arith.mulf %671, %664 : vector<16x128xf32>
    %673 = arith.addf %661, %672 : vector<16x128xf32>
    %674 = vector.broadcast %76 : f32 to vector<16x128xf32>
    %675 = arith.mulf %674, %649 : vector<16x128xf32>
    %676 = arith.addf %667, %675 : vector<16x128xf32>
    %677 = vector.broadcast %151 : f32 to vector<16x128xf32>
    %678 = arith.mulf %677, %649 : vector<16x128xf32>
    %679 = arith.addf %670, %678 : vector<16x128xf32>
    %680 = vector.broadcast %226 : f32 to vector<16x128xf32>
    %681 = arith.mulf %680, %649 : vector<16x128xf32>
    %682 = arith.addf %673, %681 : vector<16x128xf32>
    %c127_i32_85 = arith.constant 127 : i32
    %683 = tpu.dynamic_rotate %649 by %c127_i32_85 dim 1 : vector<16x128xf32>, i32 -> vector<16x128xf32>
    %cst_86 = arith.constant 0.000000e+00 : f32
    %684 = vector.broadcast %cst_86 : f32 to vector<16x128xf32>
    %685 = arith.select %282, %683, %684 : vector<16x128xi1>, vector<16x128xf32>
    %686 = vector.broadcast %77 : f32 to vector<16x128xf32>
    %687 = arith.mulf %686, %685 : vector<16x128xf32>
    %688 = arith.addf %676, %687 : vector<16x128xf32>
    %689 = vector.broadcast %152 : f32 to vector<16x128xf32>
    %690 = arith.mulf %689, %685 : vector<16x128xf32>
    %691 = arith.addf %679, %690 : vector<16x128xf32>
    %692 = vector.broadcast %227 : f32 to vector<16x128xf32>
    %693 = arith.mulf %692, %685 : vector<16x128xf32>
    %694 = arith.addf %682, %693 : vector<16x128xf32>
    %c126_i32_87 = arith.constant 126 : i32
    %695 = tpu.dynamic_rotate %649 by %c126_i32_87 dim 1 : vector<16x128xf32>, i32 -> vector<16x128xf32>
    %cst_88 = arith.constant 0.000000e+00 : f32
    %696 = vector.broadcast %cst_88 : f32 to vector<16x128xf32>
    %697 = arith.select %286, %695, %696 : vector<16x128xi1>, vector<16x128xf32>
    %698 = vector.broadcast %78 : f32 to vector<16x128xf32>
    %699 = arith.mulf %698, %697 : vector<16x128xf32>
    %700 = arith.addf %688, %699 : vector<16x128xf32>
    %701 = vector.broadcast %153 : f32 to vector<16x128xf32>
    %702 = arith.mulf %701, %697 : vector<16x128xf32>
    %703 = arith.addf %691, %702 : vector<16x128xf32>
    %704 = vector.broadcast %228 : f32 to vector<16x128xf32>
    %705 = arith.mulf %704, %697 : vector<16x128xf32>
    %706 = arith.addf %694, %705 : vector<16x128xf32>
    %c2_i32_89 = arith.constant 2 : i32
    %707 = tpu.dynamic_rotate %38 by %c2_i32_89 dim 1 : vector<16x128xf32>, i32 -> vector<16x128xf32>
    %cst_90 = arith.constant 0.000000e+00 : f32
    %708 = vector.broadcast %cst_90 : f32 to vector<16x128xf32>
    %709 = arith.select %274, %707, %708 : vector<16x128xi1>, vector<16x128xf32>
    %710 = vector.broadcast %79 : f32 to vector<16x128xf32>
    %711 = arith.mulf %710, %709 : vector<16x128xf32>
    %712 = arith.addf %700, %711 : vector<16x128xf32>
    %713 = vector.broadcast %154 : f32 to vector<16x128xf32>
    %714 = arith.mulf %713, %709 : vector<16x128xf32>
    %715 = arith.addf %703, %714 : vector<16x128xf32>
    %716 = vector.broadcast %229 : f32 to vector<16x128xf32>
    %717 = arith.mulf %716, %709 : vector<16x128xf32>
    %718 = arith.addf %706, %717 : vector<16x128xf32>
    %c1_i32_91 = arith.constant 1 : i32
    %719 = tpu.dynamic_rotate %38 by %c1_i32_91 dim 1 : vector<16x128xf32>, i32 -> vector<16x128xf32>
    %cst_92 = arith.constant 0.000000e+00 : f32
    %720 = vector.broadcast %cst_92 : f32 to vector<16x128xf32>
    %721 = arith.select %278, %719, %720 : vector<16x128xi1>, vector<16x128xf32>
    %722 = vector.broadcast %80 : f32 to vector<16x128xf32>
    %723 = arith.mulf %722, %721 : vector<16x128xf32>
    %724 = arith.addf %712, %723 : vector<16x128xf32>
    %725 = vector.broadcast %155 : f32 to vector<16x128xf32>
    %726 = arith.mulf %725, %721 : vector<16x128xf32>
    %727 = arith.addf %715, %726 : vector<16x128xf32>
    %728 = vector.broadcast %230 : f32 to vector<16x128xf32>
    %729 = arith.mulf %728, %721 : vector<16x128xf32>
    %730 = arith.addf %718, %729 : vector<16x128xf32>
    %731 = vector.broadcast %81 : f32 to vector<16x128xf32>
    %732 = arith.mulf %731, %38 : vector<16x128xf32>
    %733 = arith.addf %724, %732 : vector<16x128xf32>
    %734 = vector.broadcast %156 : f32 to vector<16x128xf32>
    %735 = arith.mulf %734, %38 : vector<16x128xf32>
    %736 = arith.addf %727, %735 : vector<16x128xf32>
    %737 = vector.broadcast %231 : f32 to vector<16x128xf32>
    %738 = arith.mulf %737, %38 : vector<16x128xf32>
    %739 = arith.addf %730, %738 : vector<16x128xf32>
    %c127_i32_93 = arith.constant 127 : i32
    %740 = tpu.dynamic_rotate %38 by %c127_i32_93 dim 1 : vector<16x128xf32>, i32 -> vector<16x128xf32>
    %cst_94 = arith.constant 0.000000e+00 : f32
    %741 = vector.broadcast %cst_94 : f32 to vector<16x128xf32>
    %742 = arith.select %282, %740, %741 : vector<16x128xi1>, vector<16x128xf32>
    %743 = vector.broadcast %82 : f32 to vector<16x128xf32>
    %744 = arith.mulf %743, %742 : vector<16x128xf32>
    %745 = arith.addf %733, %744 : vector<16x128xf32>
    %746 = vector.broadcast %157 : f32 to vector<16x128xf32>
    %747 = arith.mulf %746, %742 : vector<16x128xf32>
    %748 = arith.addf %736, %747 : vector<16x128xf32>
    %749 = vector.broadcast %232 : f32 to vector<16x128xf32>
    %750 = arith.mulf %749, %742 : vector<16x128xf32>
    %751 = arith.addf %739, %750 : vector<16x128xf32>
    %c126_i32_95 = arith.constant 126 : i32
    %752 = tpu.dynamic_rotate %38 by %c126_i32_95 dim 1 : vector<16x128xf32>, i32 -> vector<16x128xf32>
    %cst_96 = arith.constant 0.000000e+00 : f32
    %753 = vector.broadcast %cst_96 : f32 to vector<16x128xf32>
    %754 = arith.select %286, %752, %753 : vector<16x128xi1>, vector<16x128xf32>
    %755 = vector.broadcast %83 : f32 to vector<16x128xf32>
    %756 = arith.mulf %755, %754 : vector<16x128xf32>
    %757 = arith.addf %745, %756 : vector<16x128xf32>
    %758 = vector.broadcast %158 : f32 to vector<16x128xf32>
    %759 = arith.mulf %758, %754 : vector<16x128xf32>
    %760 = arith.addf %748, %759 : vector<16x128xf32>
    %761 = vector.broadcast %233 : f32 to vector<16x128xf32>
    %762 = arith.mulf %761, %754 : vector<16x128xf32>
    %763 = arith.addf %751, %762 : vector<16x128xf32>
    %c15_i32_97 = arith.constant 15 : i32
    %764 = tpu.dynamic_rotate %38 by %c15_i32_97 dim 0 : vector<16x128xf32>, i32 -> vector<16x128xf32>
    %cst_98 = arith.constant 0.000000e+00 : f32
    %765 = vector.broadcast %cst_98 : f32 to vector<16x128xf32>
    %766 = arith.select %280, %764, %765 : vector<16x128xi1>, vector<16x128xf32>
    %c2_i32_99 = arith.constant 2 : i32
    %767 = tpu.dynamic_rotate %766 by %c2_i32_99 dim 1 : vector<16x128xf32>, i32 -> vector<16x128xf32>
    %cst_100 = arith.constant 0.000000e+00 : f32
    %768 = vector.broadcast %cst_100 : f32 to vector<16x128xf32>
    %769 = arith.select %274, %767, %768 : vector<16x128xi1>, vector<16x128xf32>
    %770 = vector.broadcast %84 : f32 to vector<16x128xf32>
    %771 = arith.mulf %770, %769 : vector<16x128xf32>
    %772 = arith.addf %757, %771 : vector<16x128xf32>
    %773 = vector.broadcast %159 : f32 to vector<16x128xf32>
    %774 = arith.mulf %773, %769 : vector<16x128xf32>
    %775 = arith.addf %760, %774 : vector<16x128xf32>
    %776 = vector.broadcast %234 : f32 to vector<16x128xf32>
    %777 = arith.mulf %776, %769 : vector<16x128xf32>
    %778 = arith.addf %763, %777 : vector<16x128xf32>
    %c1_i32_101 = arith.constant 1 : i32
    %779 = tpu.dynamic_rotate %766 by %c1_i32_101 dim 1 : vector<16x128xf32>, i32 -> vector<16x128xf32>
    %cst_102 = arith.constant 0.000000e+00 : f32
    %780 = vector.broadcast %cst_102 : f32 to vector<16x128xf32>
    %781 = arith.select %278, %779, %780 : vector<16x128xi1>, vector<16x128xf32>
    %782 = vector.broadcast %85 : f32 to vector<16x128xf32>
    %783 = arith.mulf %782, %781 : vector<16x128xf32>
    %784 = arith.addf %772, %783 : vector<16x128xf32>
    %785 = vector.broadcast %160 : f32 to vector<16x128xf32>
    %786 = arith.mulf %785, %781 : vector<16x128xf32>
    %787 = arith.addf %775, %786 : vector<16x128xf32>
    %788 = vector.broadcast %235 : f32 to vector<16x128xf32>
    %789 = arith.mulf %788, %781 : vector<16x128xf32>
    %790 = arith.addf %778, %789 : vector<16x128xf32>
    %791 = vector.broadcast %86 : f32 to vector<16x128xf32>
    %792 = arith.mulf %791, %766 : vector<16x128xf32>
    %793 = arith.addf %784, %792 : vector<16x128xf32>
    %794 = vector.broadcast %161 : f32 to vector<16x128xf32>
    %795 = arith.mulf %794, %766 : vector<16x128xf32>
    %796 = arith.addf %787, %795 : vector<16x128xf32>
    %797 = vector.broadcast %236 : f32 to vector<16x128xf32>
    %798 = arith.mulf %797, %766 : vector<16x128xf32>
    %799 = arith.addf %790, %798 : vector<16x128xf32>
    %c127_i32_103 = arith.constant 127 : i32
    %800 = tpu.dynamic_rotate %766 by %c127_i32_103 dim 1 : vector<16x128xf32>, i32 -> vector<16x128xf32>
    %cst_104 = arith.constant 0.000000e+00 : f32
    %801 = vector.broadcast %cst_104 : f32 to vector<16x128xf32>
    %802 = arith.select %282, %800, %801 : vector<16x128xi1>, vector<16x128xf32>
    %803 = vector.broadcast %87 : f32 to vector<16x128xf32>
    %804 = arith.mulf %803, %802 : vector<16x128xf32>
    %805 = arith.addf %793, %804 : vector<16x128xf32>
    %806 = vector.broadcast %162 : f32 to vector<16x128xf32>
    %807 = arith.mulf %806, %802 : vector<16x128xf32>
    %808 = arith.addf %796, %807 : vector<16x128xf32>
    %809 = vector.broadcast %237 : f32 to vector<16x128xf32>
    %810 = arith.mulf %809, %802 : vector<16x128xf32>
    %811 = arith.addf %799, %810 : vector<16x128xf32>
    %c126_i32_105 = arith.constant 126 : i32
    %812 = tpu.dynamic_rotate %766 by %c126_i32_105 dim 1 : vector<16x128xf32>, i32 -> vector<16x128xf32>
    %cst_106 = arith.constant 0.000000e+00 : f32
    %813 = vector.broadcast %cst_106 : f32 to vector<16x128xf32>
    %814 = arith.select %286, %812, %813 : vector<16x128xi1>, vector<16x128xf32>
    %815 = vector.broadcast %88 : f32 to vector<16x128xf32>
    %816 = arith.mulf %815, %814 : vector<16x128xf32>
    %817 = arith.addf %805, %816 : vector<16x128xf32>
    %818 = vector.broadcast %163 : f32 to vector<16x128xf32>
    %819 = arith.mulf %818, %814 : vector<16x128xf32>
    %820 = arith.addf %808, %819 : vector<16x128xf32>
    %821 = vector.broadcast %238 : f32 to vector<16x128xf32>
    %822 = arith.mulf %821, %814 : vector<16x128xf32>
    %823 = arith.addf %811, %822 : vector<16x128xf32>
    %c14_i32_107 = arith.constant 14 : i32
    %824 = tpu.dynamic_rotate %38 by %c14_i32_107 dim 0 : vector<16x128xf32>, i32 -> vector<16x128xf32>
    %cst_108 = arith.constant 0.000000e+00 : f32
    %825 = vector.broadcast %cst_108 : f32 to vector<16x128xf32>
    %826 = arith.select %284, %824, %825 : vector<16x128xi1>, vector<16x128xf32>
    %c2_i32_109 = arith.constant 2 : i32
    %827 = tpu.dynamic_rotate %826 by %c2_i32_109 dim 1 : vector<16x128xf32>, i32 -> vector<16x128xf32>
    %cst_110 = arith.constant 0.000000e+00 : f32
    %828 = vector.broadcast %cst_110 : f32 to vector<16x128xf32>
    %829 = arith.select %274, %827, %828 : vector<16x128xi1>, vector<16x128xf32>
    %830 = vector.broadcast %89 : f32 to vector<16x128xf32>
    %831 = arith.mulf %830, %829 : vector<16x128xf32>
    %832 = arith.addf %817, %831 : vector<16x128xf32>
    %833 = vector.broadcast %164 : f32 to vector<16x128xf32>
    %834 = arith.mulf %833, %829 : vector<16x128xf32>
    %835 = arith.addf %820, %834 : vector<16x128xf32>
    %836 = vector.broadcast %239 : f32 to vector<16x128xf32>
    %837 = arith.mulf %836, %829 : vector<16x128xf32>
    %838 = arith.addf %823, %837 : vector<16x128xf32>
    %c1_i32_111 = arith.constant 1 : i32
    %839 = tpu.dynamic_rotate %826 by %c1_i32_111 dim 1 : vector<16x128xf32>, i32 -> vector<16x128xf32>
    %cst_112 = arith.constant 0.000000e+00 : f32
    %840 = vector.broadcast %cst_112 : f32 to vector<16x128xf32>
    %841 = arith.select %278, %839, %840 : vector<16x128xi1>, vector<16x128xf32>
    %842 = vector.broadcast %90 : f32 to vector<16x128xf32>
    %843 = arith.mulf %842, %841 : vector<16x128xf32>
    %844 = arith.addf %832, %843 : vector<16x128xf32>
    %845 = vector.broadcast %165 : f32 to vector<16x128xf32>
    %846 = arith.mulf %845, %841 : vector<16x128xf32>
    %847 = arith.addf %835, %846 : vector<16x128xf32>
    %848 = vector.broadcast %240 : f32 to vector<16x128xf32>
    %849 = arith.mulf %848, %841 : vector<16x128xf32>
    %850 = arith.addf %838, %849 : vector<16x128xf32>
    %851 = vector.broadcast %91 : f32 to vector<16x128xf32>
    %852 = arith.mulf %851, %826 : vector<16x128xf32>
    %853 = arith.addf %844, %852 : vector<16x128xf32>
    %854 = vector.broadcast %166 : f32 to vector<16x128xf32>
    %855 = arith.mulf %854, %826 : vector<16x128xf32>
    %856 = arith.addf %847, %855 : vector<16x128xf32>
    %857 = vector.broadcast %241 : f32 to vector<16x128xf32>
    %858 = arith.mulf %857, %826 : vector<16x128xf32>
    %859 = arith.addf %850, %858 : vector<16x128xf32>
    %c127_i32_113 = arith.constant 127 : i32
    %860 = tpu.dynamic_rotate %826 by %c127_i32_113 dim 1 : vector<16x128xf32>, i32 -> vector<16x128xf32>
    %cst_114 = arith.constant 0.000000e+00 : f32
    %861 = vector.broadcast %cst_114 : f32 to vector<16x128xf32>
    %862 = arith.select %282, %860, %861 : vector<16x128xi1>, vector<16x128xf32>
    %863 = vector.broadcast %92 : f32 to vector<16x128xf32>
    %864 = arith.mulf %863, %862 : vector<16x128xf32>
    %865 = arith.addf %853, %864 : vector<16x128xf32>
    %866 = vector.broadcast %167 : f32 to vector<16x128xf32>
    %867 = arith.mulf %866, %862 : vector<16x128xf32>
    %868 = arith.addf %856, %867 : vector<16x128xf32>
    %869 = vector.broadcast %242 : f32 to vector<16x128xf32>
    %870 = arith.mulf %869, %862 : vector<16x128xf32>
    %871 = arith.addf %859, %870 : vector<16x128xf32>
    %c126_i32_115 = arith.constant 126 : i32
    %872 = tpu.dynamic_rotate %826 by %c126_i32_115 dim 1 : vector<16x128xf32>, i32 -> vector<16x128xf32>
    %cst_116 = arith.constant 0.000000e+00 : f32
    %873 = vector.broadcast %cst_116 : f32 to vector<16x128xf32>
    %874 = arith.select %286, %872, %873 : vector<16x128xi1>, vector<16x128xf32>
    %875 = vector.broadcast %93 : f32 to vector<16x128xf32>
    %876 = arith.mulf %875, %874 : vector<16x128xf32>
    %877 = arith.addf %865, %876 : vector<16x128xf32>
    %878 = vector.broadcast %168 : f32 to vector<16x128xf32>
    %879 = arith.mulf %878, %874 : vector<16x128xf32>
    %880 = arith.addf %868, %879 : vector<16x128xf32>
    %881 = vector.broadcast %243 : f32 to vector<16x128xf32>
    %882 = arith.mulf %881, %874 : vector<16x128xf32>
    %883 = arith.addf %871, %882 : vector<16x128xf32>
    %c2_i32_117 = arith.constant 2 : i32
    %884 = tpu.dynamic_rotate %43 by %c2_i32_117 dim 0 : vector<16x128xf32>, i32 -> vector<16x128xf32>
    %cst_118 = arith.constant 0.000000e+00 : f32
    %885 = vector.broadcast %cst_118 : f32 to vector<16x128xf32>
    %886 = arith.select %272, %884, %885 : vector<16x128xi1>, vector<16x128xf32>
    %c2_i32_119 = arith.constant 2 : i32
    %887 = tpu.dynamic_rotate %886 by %c2_i32_119 dim 1 : vector<16x128xf32>, i32 -> vector<16x128xf32>
    %cst_120 = arith.constant 0.000000e+00 : f32
    %888 = vector.broadcast %cst_120 : f32 to vector<16x128xf32>
    %889 = arith.select %274, %887, %888 : vector<16x128xi1>, vector<16x128xf32>
    %890 = vector.broadcast %94 : f32 to vector<16x128xf32>
    %891 = arith.mulf %890, %889 : vector<16x128xf32>
    %892 = arith.addf %877, %891 : vector<16x128xf32>
    %893 = vector.broadcast %169 : f32 to vector<16x128xf32>
    %894 = arith.mulf %893, %889 : vector<16x128xf32>
    %895 = arith.addf %880, %894 : vector<16x128xf32>
    %896 = vector.broadcast %244 : f32 to vector<16x128xf32>
    %897 = arith.mulf %896, %889 : vector<16x128xf32>
    %898 = arith.addf %883, %897 : vector<16x128xf32>
    %c1_i32_121 = arith.constant 1 : i32
    %899 = tpu.dynamic_rotate %886 by %c1_i32_121 dim 1 : vector<16x128xf32>, i32 -> vector<16x128xf32>
    %cst_122 = arith.constant 0.000000e+00 : f32
    %900 = vector.broadcast %cst_122 : f32 to vector<16x128xf32>
    %901 = arith.select %278, %899, %900 : vector<16x128xi1>, vector<16x128xf32>
    %902 = vector.broadcast %95 : f32 to vector<16x128xf32>
    %903 = arith.mulf %902, %901 : vector<16x128xf32>
    %904 = arith.addf %892, %903 : vector<16x128xf32>
    %905 = vector.broadcast %170 : f32 to vector<16x128xf32>
    %906 = arith.mulf %905, %901 : vector<16x128xf32>
    %907 = arith.addf %895, %906 : vector<16x128xf32>
    %908 = vector.broadcast %245 : f32 to vector<16x128xf32>
    %909 = arith.mulf %908, %901 : vector<16x128xf32>
    %910 = arith.addf %898, %909 : vector<16x128xf32>
    %911 = vector.broadcast %96 : f32 to vector<16x128xf32>
    %912 = arith.mulf %911, %886 : vector<16x128xf32>
    %913 = arith.addf %904, %912 : vector<16x128xf32>
    %914 = vector.broadcast %171 : f32 to vector<16x128xf32>
    %915 = arith.mulf %914, %886 : vector<16x128xf32>
    %916 = arith.addf %907, %915 : vector<16x128xf32>
    %917 = vector.broadcast %246 : f32 to vector<16x128xf32>
    %918 = arith.mulf %917, %886 : vector<16x128xf32>
    %919 = arith.addf %910, %918 : vector<16x128xf32>
    %c127_i32_123 = arith.constant 127 : i32
    %920 = tpu.dynamic_rotate %886 by %c127_i32_123 dim 1 : vector<16x128xf32>, i32 -> vector<16x128xf32>
    %cst_124 = arith.constant 0.000000e+00 : f32
    %921 = vector.broadcast %cst_124 : f32 to vector<16x128xf32>
    %922 = arith.select %282, %920, %921 : vector<16x128xi1>, vector<16x128xf32>
    %923 = vector.broadcast %97 : f32 to vector<16x128xf32>
    %924 = arith.mulf %923, %922 : vector<16x128xf32>
    %925 = arith.addf %913, %924 : vector<16x128xf32>
    %926 = vector.broadcast %172 : f32 to vector<16x128xf32>
    %927 = arith.mulf %926, %922 : vector<16x128xf32>
    %928 = arith.addf %916, %927 : vector<16x128xf32>
    %929 = vector.broadcast %247 : f32 to vector<16x128xf32>
    %930 = arith.mulf %929, %922 : vector<16x128xf32>
    %931 = arith.addf %919, %930 : vector<16x128xf32>
    %c126_i32_125 = arith.constant 126 : i32
    %932 = tpu.dynamic_rotate %886 by %c126_i32_125 dim 1 : vector<16x128xf32>, i32 -> vector<16x128xf32>
    %cst_126 = arith.constant 0.000000e+00 : f32
    %933 = vector.broadcast %cst_126 : f32 to vector<16x128xf32>
    %934 = arith.select %286, %932, %933 : vector<16x128xi1>, vector<16x128xf32>
    %935 = vector.broadcast %98 : f32 to vector<16x128xf32>
    %936 = arith.mulf %935, %934 : vector<16x128xf32>
    %937 = arith.addf %925, %936 : vector<16x128xf32>
    %938 = vector.broadcast %173 : f32 to vector<16x128xf32>
    %939 = arith.mulf %938, %934 : vector<16x128xf32>
    %940 = arith.addf %928, %939 : vector<16x128xf32>
    %941 = vector.broadcast %248 : f32 to vector<16x128xf32>
    %942 = arith.mulf %941, %934 : vector<16x128xf32>
    %943 = arith.addf %931, %942 : vector<16x128xf32>
    %c1_i32_127 = arith.constant 1 : i32
    %944 = tpu.dynamic_rotate %43 by %c1_i32_127 dim 0 : vector<16x128xf32>, i32 -> vector<16x128xf32>
    %cst_128 = arith.constant 0.000000e+00 : f32
    %945 = vector.broadcast %cst_128 : f32 to vector<16x128xf32>
    %946 = arith.select %276, %944, %945 : vector<16x128xi1>, vector<16x128xf32>
    %c2_i32_129 = arith.constant 2 : i32
    %947 = tpu.dynamic_rotate %946 by %c2_i32_129 dim 1 : vector<16x128xf32>, i32 -> vector<16x128xf32>
    %cst_130 = arith.constant 0.000000e+00 : f32
    %948 = vector.broadcast %cst_130 : f32 to vector<16x128xf32>
    %949 = arith.select %274, %947, %948 : vector<16x128xi1>, vector<16x128xf32>
    %950 = vector.broadcast %99 : f32 to vector<16x128xf32>
    %951 = arith.mulf %950, %949 : vector<16x128xf32>
    %952 = arith.addf %937, %951 : vector<16x128xf32>
    %953 = vector.broadcast %174 : f32 to vector<16x128xf32>
    %954 = arith.mulf %953, %949 : vector<16x128xf32>
    %955 = arith.addf %940, %954 : vector<16x128xf32>
    %956 = vector.broadcast %249 : f32 to vector<16x128xf32>
    %957 = arith.mulf %956, %949 : vector<16x128xf32>
    %958 = arith.addf %943, %957 : vector<16x128xf32>
    %c1_i32_131 = arith.constant 1 : i32
    %959 = tpu.dynamic_rotate %946 by %c1_i32_131 dim 1 : vector<16x128xf32>, i32 -> vector<16x128xf32>
    %cst_132 = arith.constant 0.000000e+00 : f32
    %960 = vector.broadcast %cst_132 : f32 to vector<16x128xf32>
    %961 = arith.select %278, %959, %960 : vector<16x128xi1>, vector<16x128xf32>
    %962 = vector.broadcast %100 : f32 to vector<16x128xf32>
    %963 = arith.mulf %962, %961 : vector<16x128xf32>
    %964 = arith.addf %952, %963 : vector<16x128xf32>
    %965 = vector.broadcast %175 : f32 to vector<16x128xf32>
    %966 = arith.mulf %965, %961 : vector<16x128xf32>
    %967 = arith.addf %955, %966 : vector<16x128xf32>
    %968 = vector.broadcast %250 : f32 to vector<16x128xf32>
    %969 = arith.mulf %968, %961 : vector<16x128xf32>
    %970 = arith.addf %958, %969 : vector<16x128xf32>
    %971 = vector.broadcast %101 : f32 to vector<16x128xf32>
    %972 = arith.mulf %971, %946 : vector<16x128xf32>
    %973 = arith.addf %964, %972 : vector<16x128xf32>
    %974 = vector.broadcast %176 : f32 to vector<16x128xf32>
    %975 = arith.mulf %974, %946 : vector<16x128xf32>
    %976 = arith.addf %967, %975 : vector<16x128xf32>
    %977 = vector.broadcast %251 : f32 to vector<16x128xf32>
    %978 = arith.mulf %977, %946 : vector<16x128xf32>
    %979 = arith.addf %970, %978 : vector<16x128xf32>
    %c127_i32_133 = arith.constant 127 : i32
    %980 = tpu.dynamic_rotate %946 by %c127_i32_133 dim 1 : vector<16x128xf32>, i32 -> vector<16x128xf32>
    %cst_134 = arith.constant 0.000000e+00 : f32
    %981 = vector.broadcast %cst_134 : f32 to vector<16x128xf32>
    %982 = arith.select %282, %980, %981 : vector<16x128xi1>, vector<16x128xf32>
    %983 = vector.broadcast %102 : f32 to vector<16x128xf32>
    %984 = arith.mulf %983, %982 : vector<16x128xf32>
    %985 = arith.addf %973, %984 : vector<16x128xf32>
    %986 = vector.broadcast %177 : f32 to vector<16x128xf32>
    %987 = arith.mulf %986, %982 : vector<16x128xf32>
    %988 = arith.addf %976, %987 : vector<16x128xf32>
    %989 = vector.broadcast %252 : f32 to vector<16x128xf32>
    %990 = arith.mulf %989, %982 : vector<16x128xf32>
    %991 = arith.addf %979, %990 : vector<16x128xf32>
    %c126_i32_135 = arith.constant 126 : i32
    %992 = tpu.dynamic_rotate %946 by %c126_i32_135 dim 1 : vector<16x128xf32>, i32 -> vector<16x128xf32>
    %cst_136 = arith.constant 0.000000e+00 : f32
    %993 = vector.broadcast %cst_136 : f32 to vector<16x128xf32>
    %994 = arith.select %286, %992, %993 : vector<16x128xi1>, vector<16x128xf32>
    %995 = vector.broadcast %103 : f32 to vector<16x128xf32>
    %996 = arith.mulf %995, %994 : vector<16x128xf32>
    %997 = arith.addf %985, %996 : vector<16x128xf32>
    %998 = vector.broadcast %178 : f32 to vector<16x128xf32>
    %999 = arith.mulf %998, %994 : vector<16x128xf32>
    %1000 = arith.addf %988, %999 : vector<16x128xf32>
    %1001 = vector.broadcast %253 : f32 to vector<16x128xf32>
    %1002 = arith.mulf %1001, %994 : vector<16x128xf32>
    %1003 = arith.addf %991, %1002 : vector<16x128xf32>
    %c2_i32_137 = arith.constant 2 : i32
    %1004 = tpu.dynamic_rotate %43 by %c2_i32_137 dim 1 : vector<16x128xf32>, i32 -> vector<16x128xf32>
    %cst_138 = arith.constant 0.000000e+00 : f32
    %1005 = vector.broadcast %cst_138 : f32 to vector<16x128xf32>
    %1006 = arith.select %274, %1004, %1005 : vector<16x128xi1>, vector<16x128xf32>
    %1007 = vector.broadcast %104 : f32 to vector<16x128xf32>
    %1008 = arith.mulf %1007, %1006 : vector<16x128xf32>
    %1009 = arith.addf %997, %1008 : vector<16x128xf32>
    %1010 = vector.broadcast %179 : f32 to vector<16x128xf32>
    %1011 = arith.mulf %1010, %1006 : vector<16x128xf32>
    %1012 = arith.addf %1000, %1011 : vector<16x128xf32>
    %1013 = vector.broadcast %254 : f32 to vector<16x128xf32>
    %1014 = arith.mulf %1013, %1006 : vector<16x128xf32>
    %1015 = arith.addf %1003, %1014 : vector<16x128xf32>
    %c1_i32_139 = arith.constant 1 : i32
    %1016 = tpu.dynamic_rotate %43 by %c1_i32_139 dim 1 : vector<16x128xf32>, i32 -> vector<16x128xf32>
    %cst_140 = arith.constant 0.000000e+00 : f32
    %1017 = vector.broadcast %cst_140 : f32 to vector<16x128xf32>
    %1018 = arith.select %278, %1016, %1017 : vector<16x128xi1>, vector<16x128xf32>
    %1019 = vector.broadcast %105 : f32 to vector<16x128xf32>
    %1020 = arith.mulf %1019, %1018 : vector<16x128xf32>
    %1021 = arith.addf %1009, %1020 : vector<16x128xf32>
    %1022 = vector.broadcast %180 : f32 to vector<16x128xf32>
    %1023 = arith.mulf %1022, %1018 : vector<16x128xf32>
    %1024 = arith.addf %1012, %1023 : vector<16x128xf32>
    %1025 = vector.broadcast %255 : f32 to vector<16x128xf32>
    %1026 = arith.mulf %1025, %1018 : vector<16x128xf32>
    %1027 = arith.addf %1015, %1026 : vector<16x128xf32>
    %1028 = vector.broadcast %106 : f32 to vector<16x128xf32>
    %1029 = arith.mulf %1028, %43 : vector<16x128xf32>
    %1030 = arith.addf %1021, %1029 : vector<16x128xf32>
    %1031 = vector.broadcast %181 : f32 to vector<16x128xf32>
    %1032 = arith.mulf %1031, %43 : vector<16x128xf32>
    %1033 = arith.addf %1024, %1032 : vector<16x128xf32>
    %1034 = vector.broadcast %256 : f32 to vector<16x128xf32>
    %1035 = arith.mulf %1034, %43 : vector<16x128xf32>
    %1036 = arith.addf %1027, %1035 : vector<16x128xf32>
    %c127_i32_141 = arith.constant 127 : i32
    %1037 = tpu.dynamic_rotate %43 by %c127_i32_141 dim 1 : vector<16x128xf32>, i32 -> vector<16x128xf32>
    %cst_142 = arith.constant 0.000000e+00 : f32
    %1038 = vector.broadcast %cst_142 : f32 to vector<16x128xf32>
    %1039 = arith.select %282, %1037, %1038 : vector<16x128xi1>, vector<16x128xf32>
    %1040 = vector.broadcast %107 : f32 to vector<16x128xf32>
    %1041 = arith.mulf %1040, %1039 : vector<16x128xf32>
    %1042 = arith.addf %1030, %1041 : vector<16x128xf32>
    %1043 = vector.broadcast %182 : f32 to vector<16x128xf32>
    %1044 = arith.mulf %1043, %1039 : vector<16x128xf32>
    %1045 = arith.addf %1033, %1044 : vector<16x128xf32>
    %1046 = vector.broadcast %257 : f32 to vector<16x128xf32>
    %1047 = arith.mulf %1046, %1039 : vector<16x128xf32>
    %1048 = arith.addf %1036, %1047 : vector<16x128xf32>
    %c126_i32_143 = arith.constant 126 : i32
    %1049 = tpu.dynamic_rotate %43 by %c126_i32_143 dim 1 : vector<16x128xf32>, i32 -> vector<16x128xf32>
    %cst_144 = arith.constant 0.000000e+00 : f32
    %1050 = vector.broadcast %cst_144 : f32 to vector<16x128xf32>
    %1051 = arith.select %286, %1049, %1050 : vector<16x128xi1>, vector<16x128xf32>
    %1052 = vector.broadcast %108 : f32 to vector<16x128xf32>
    %1053 = arith.mulf %1052, %1051 : vector<16x128xf32>
    %1054 = arith.addf %1042, %1053 : vector<16x128xf32>
    %1055 = vector.broadcast %183 : f32 to vector<16x128xf32>
    %1056 = arith.mulf %1055, %1051 : vector<16x128xf32>
    %1057 = arith.addf %1045, %1056 : vector<16x128xf32>
    %1058 = vector.broadcast %258 : f32 to vector<16x128xf32>
    %1059 = arith.mulf %1058, %1051 : vector<16x128xf32>
    %1060 = arith.addf %1048, %1059 : vector<16x128xf32>
    %c15_i32_145 = arith.constant 15 : i32
    %1061 = tpu.dynamic_rotate %43 by %c15_i32_145 dim 0 : vector<16x128xf32>, i32 -> vector<16x128xf32>
    %cst_146 = arith.constant 0.000000e+00 : f32
    %1062 = vector.broadcast %cst_146 : f32 to vector<16x128xf32>
    %1063 = arith.select %280, %1061, %1062 : vector<16x128xi1>, vector<16x128xf32>
    %c2_i32_147 = arith.constant 2 : i32
    %1064 = tpu.dynamic_rotate %1063 by %c2_i32_147 dim 1 : vector<16x128xf32>, i32 -> vector<16x128xf32>
    %cst_148 = arith.constant 0.000000e+00 : f32
    %1065 = vector.broadcast %cst_148 : f32 to vector<16x128xf32>
    %1066 = arith.select %274, %1064, %1065 : vector<16x128xi1>, vector<16x128xf32>
    %1067 = vector.broadcast %109 : f32 to vector<16x128xf32>
    %1068 = arith.mulf %1067, %1066 : vector<16x128xf32>
    %1069 = arith.addf %1054, %1068 : vector<16x128xf32>
    %1070 = vector.broadcast %184 : f32 to vector<16x128xf32>
    %1071 = arith.mulf %1070, %1066 : vector<16x128xf32>
    %1072 = arith.addf %1057, %1071 : vector<16x128xf32>
    %1073 = vector.broadcast %259 : f32 to vector<16x128xf32>
    %1074 = arith.mulf %1073, %1066 : vector<16x128xf32>
    %1075 = arith.addf %1060, %1074 : vector<16x128xf32>
    %c1_i32_149 = arith.constant 1 : i32
    %1076 = tpu.dynamic_rotate %1063 by %c1_i32_149 dim 1 : vector<16x128xf32>, i32 -> vector<16x128xf32>
    %cst_150 = arith.constant 0.000000e+00 : f32
    %1077 = vector.broadcast %cst_150 : f32 to vector<16x128xf32>
    %1078 = arith.select %278, %1076, %1077 : vector<16x128xi1>, vector<16x128xf32>
    %1079 = vector.broadcast %110 : f32 to vector<16x128xf32>
    %1080 = arith.mulf %1079, %1078 : vector<16x128xf32>
    %1081 = arith.addf %1069, %1080 : vector<16x128xf32>
    %1082 = vector.broadcast %185 : f32 to vector<16x128xf32>
    %1083 = arith.mulf %1082, %1078 : vector<16x128xf32>
    %1084 = arith.addf %1072, %1083 : vector<16x128xf32>
    %1085 = vector.broadcast %260 : f32 to vector<16x128xf32>
    %1086 = arith.mulf %1085, %1078 : vector<16x128xf32>
    %1087 = arith.addf %1075, %1086 : vector<16x128xf32>
    %1088 = vector.broadcast %111 : f32 to vector<16x128xf32>
    %1089 = arith.mulf %1088, %1063 : vector<16x128xf32>
    %1090 = arith.addf %1081, %1089 : vector<16x128xf32>
    %1091 = vector.broadcast %186 : f32 to vector<16x128xf32>
    %1092 = arith.mulf %1091, %1063 : vector<16x128xf32>
    %1093 = arith.addf %1084, %1092 : vector<16x128xf32>
    %1094 = vector.broadcast %261 : f32 to vector<16x128xf32>
    %1095 = arith.mulf %1094, %1063 : vector<16x128xf32>
    %1096 = arith.addf %1087, %1095 : vector<16x128xf32>
    %c127_i32_151 = arith.constant 127 : i32
    %1097 = tpu.dynamic_rotate %1063 by %c127_i32_151 dim 1 : vector<16x128xf32>, i32 -> vector<16x128xf32>
    %cst_152 = arith.constant 0.000000e+00 : f32
    %1098 = vector.broadcast %cst_152 : f32 to vector<16x128xf32>
    %1099 = arith.select %282, %1097, %1098 : vector<16x128xi1>, vector<16x128xf32>
    %1100 = vector.broadcast %112 : f32 to vector<16x128xf32>
    %1101 = arith.mulf %1100, %1099 : vector<16x128xf32>
    %1102 = arith.addf %1090, %1101 : vector<16x128xf32>
    %1103 = vector.broadcast %187 : f32 to vector<16x128xf32>
    %1104 = arith.mulf %1103, %1099 : vector<16x128xf32>
    %1105 = arith.addf %1093, %1104 : vector<16x128xf32>
    %1106 = vector.broadcast %262 : f32 to vector<16x128xf32>
    %1107 = arith.mulf %1106, %1099 : vector<16x128xf32>
    %1108 = arith.addf %1096, %1107 : vector<16x128xf32>
    %c126_i32_153 = arith.constant 126 : i32
    %1109 = tpu.dynamic_rotate %1063 by %c126_i32_153 dim 1 : vector<16x128xf32>, i32 -> vector<16x128xf32>
    %cst_154 = arith.constant 0.000000e+00 : f32
    %1110 = vector.broadcast %cst_154 : f32 to vector<16x128xf32>
    %1111 = arith.select %286, %1109, %1110 : vector<16x128xi1>, vector<16x128xf32>
    %1112 = vector.broadcast %113 : f32 to vector<16x128xf32>
    %1113 = arith.mulf %1112, %1111 : vector<16x128xf32>
    %1114 = arith.addf %1102, %1113 : vector<16x128xf32>
    %1115 = vector.broadcast %188 : f32 to vector<16x128xf32>
    %1116 = arith.mulf %1115, %1111 : vector<16x128xf32>
    %1117 = arith.addf %1105, %1116 : vector<16x128xf32>
    %1118 = vector.broadcast %263 : f32 to vector<16x128xf32>
    %1119 = arith.mulf %1118, %1111 : vector<16x128xf32>
    %1120 = arith.addf %1108, %1119 : vector<16x128xf32>
    %c14_i32_155 = arith.constant 14 : i32
    %1121 = tpu.dynamic_rotate %43 by %c14_i32_155 dim 0 : vector<16x128xf32>, i32 -> vector<16x128xf32>
    %cst_156 = arith.constant 0.000000e+00 : f32
    %1122 = vector.broadcast %cst_156 : f32 to vector<16x128xf32>
    %1123 = arith.select %284, %1121, %1122 : vector<16x128xi1>, vector<16x128xf32>
    %c2_i32_157 = arith.constant 2 : i32
    %1124 = tpu.dynamic_rotate %1123 by %c2_i32_157 dim 1 : vector<16x128xf32>, i32 -> vector<16x128xf32>
    %cst_158 = arith.constant 0.000000e+00 : f32
    %1125 = vector.broadcast %cst_158 : f32 to vector<16x128xf32>
    %1126 = arith.select %274, %1124, %1125 : vector<16x128xi1>, vector<16x128xf32>
    %1127 = vector.broadcast %114 : f32 to vector<16x128xf32>
    %1128 = arith.mulf %1127, %1126 : vector<16x128xf32>
    %1129 = arith.addf %1114, %1128 : vector<16x128xf32>
    %1130 = vector.broadcast %189 : f32 to vector<16x128xf32>
    %1131 = arith.mulf %1130, %1126 : vector<16x128xf32>
    %1132 = arith.addf %1117, %1131 : vector<16x128xf32>
    %1133 = vector.broadcast %264 : f32 to vector<16x128xf32>
    %1134 = arith.mulf %1133, %1126 : vector<16x128xf32>
    %1135 = arith.addf %1120, %1134 : vector<16x128xf32>
    %c1_i32_159 = arith.constant 1 : i32
    %1136 = tpu.dynamic_rotate %1123 by %c1_i32_159 dim 1 : vector<16x128xf32>, i32 -> vector<16x128xf32>
    %cst_160 = arith.constant 0.000000e+00 : f32
    %1137 = vector.broadcast %cst_160 : f32 to vector<16x128xf32>
    %1138 = arith.select %278, %1136, %1137 : vector<16x128xi1>, vector<16x128xf32>
    %1139 = vector.broadcast %115 : f32 to vector<16x128xf32>
    %1140 = arith.mulf %1139, %1138 : vector<16x128xf32>
    %1141 = arith.addf %1129, %1140 : vector<16x128xf32>
    %1142 = vector.broadcast %190 : f32 to vector<16x128xf32>
    %1143 = arith.mulf %1142, %1138 : vector<16x128xf32>
    %1144 = arith.addf %1132, %1143 : vector<16x128xf32>
    %1145 = vector.broadcast %265 : f32 to vector<16x128xf32>
    %1146 = arith.mulf %1145, %1138 : vector<16x128xf32>
    %1147 = arith.addf %1135, %1146 : vector<16x128xf32>
    %1148 = vector.broadcast %116 : f32 to vector<16x128xf32>
    %1149 = arith.mulf %1148, %1123 : vector<16x128xf32>
    %1150 = arith.addf %1141, %1149 : vector<16x128xf32>
    %1151 = vector.broadcast %191 : f32 to vector<16x128xf32>
    %1152 = arith.mulf %1151, %1123 : vector<16x128xf32>
    %1153 = arith.addf %1144, %1152 : vector<16x128xf32>
    %1154 = vector.broadcast %266 : f32 to vector<16x128xf32>
    %1155 = arith.mulf %1154, %1123 : vector<16x128xf32>
    %1156 = arith.addf %1147, %1155 : vector<16x128xf32>
    %c127_i32_161 = arith.constant 127 : i32
    %1157 = tpu.dynamic_rotate %1123 by %c127_i32_161 dim 1 : vector<16x128xf32>, i32 -> vector<16x128xf32>
    %cst_162 = arith.constant 0.000000e+00 : f32
    %1158 = vector.broadcast %cst_162 : f32 to vector<16x128xf32>
    %1159 = arith.select %282, %1157, %1158 : vector<16x128xi1>, vector<16x128xf32>
    %1160 = vector.broadcast %117 : f32 to vector<16x128xf32>
    %1161 = arith.mulf %1160, %1159 : vector<16x128xf32>
    %1162 = arith.addf %1150, %1161 : vector<16x128xf32>
    %1163 = vector.broadcast %192 : f32 to vector<16x128xf32>
    %1164 = arith.mulf %1163, %1159 : vector<16x128xf32>
    %1165 = arith.addf %1153, %1164 : vector<16x128xf32>
    %1166 = vector.broadcast %267 : f32 to vector<16x128xf32>
    %1167 = arith.mulf %1166, %1159 : vector<16x128xf32>
    %1168 = arith.addf %1156, %1167 : vector<16x128xf32>
    %c126_i32_163 = arith.constant 126 : i32
    %1169 = tpu.dynamic_rotate %1123 by %c126_i32_163 dim 1 : vector<16x128xf32>, i32 -> vector<16x128xf32>
    %cst_164 = arith.constant 0.000000e+00 : f32
    %1170 = vector.broadcast %cst_164 : f32 to vector<16x128xf32>
    %1171 = arith.select %286, %1169, %1170 : vector<16x128xi1>, vector<16x128xf32>
    %1172 = vector.broadcast %118 : f32 to vector<16x128xf32>
    %1173 = arith.mulf %1172, %1171 : vector<16x128xf32>
    %1174 = arith.addf %1162, %1173 : vector<16x128xf32>
    %1175 = vector.broadcast %193 : f32 to vector<16x128xf32>
    %1176 = arith.mulf %1175, %1171 : vector<16x128xf32>
    %1177 = arith.addf %1165, %1176 : vector<16x128xf32>
    %1178 = vector.broadcast %268 : f32 to vector<16x128xf32>
    %1179 = arith.mulf %1178, %1171 : vector<16x128xf32>
    %1180 = arith.addf %1168, %1179 : vector<16x128xf32>
    %c0_165 = arith.constant 0 : index
    %c0_166 = arith.constant 0 : index
    %c0_167 = arith.constant 0 : index
    %c0_168 = arith.constant 0 : index
    %1181 = vector.load %arg5[%c0_165, %c0_166, %c0_167, %c0_168] : memref<1x3x16x128xf32, #tpu.memory_space<vmem>>, vector<1x1x16x128xf32>
    %1182 = vector.shape_cast %1181 : vector<1x1x16x128xf32> to vector<16x128xf32>
    %1183 = vector.shape_cast %1174 : vector<16x128xf32> to vector<1x1x16x128xf32>
    tpu.vector_store %arg5[%c0_165, %c0_166, %c0_167, %c0_168], %1183 {strides = array<i32>} : memref<1x3x16x128xf32, #tpu.memory_space<vmem>>, vector<1x1x16x128xf32>,
    %c0_169 = arith.constant 0 : index
    %c1_170 = arith.constant 1 : index
    %c0_171 = arith.constant 0 : index
    %c0_172 = arith.constant 0 : index
    %1184 = vector.load %arg5[%c0_169, %c1_170, %c0_171, %c0_172] : memref<1x3x16x128xf32, #tpu.memory_space<vmem>>, vector<1x1x16x128xf32>
    %1185 = vector.shape_cast %1184 : vector<1x1x16x128xf32> to vector<16x128xf32>
    %1186 = vector.shape_cast %1177 : vector<16x128xf32> to vector<1x1x16x128xf32>
    tpu.vector_store %arg5[%c0_169, %c1_170, %c0_171, %c0_172], %1186 {strides = array<i32>} : memref<1x3x16x128xf32, #tpu.memory_space<vmem>>, vector<1x1x16x128xf32>,
    %c0_173 = arith.constant 0 : index
    %c2_174 = arith.constant 2 : index
    %c0_175 = arith.constant 0 : index
    %c0_176 = arith.constant 0 : index
    %1187 = vector.load %arg5[%c0_173, %c2_174, %c0_175, %c0_176] : memref<1x3x16x128xf32, #tpu.memory_space<vmem>>, vector<1x1x16x128xf32>
    %1188 = vector.shape_cast %1187 : vector<1x1x16x128xf32> to vector<16x128xf32>
    %1189 = vector.shape_cast %1180 : vector<16x128xf32> to vector<1x1x16x128xf32>
    tpu.vector_store %arg5[%c0_173, %c2_174, %c0_175, %c0_176], %1189 {strides = array<i32>} : memref<1x3x16x128xf32, #tpu.memory_space<vmem>>, vector<1x1x16x128xf32>,
    return
  }
  func.func @transform_0(%arg0: i32) -> i32 {
    %c0_i32 = arith.constant 0 : i32
    %c0_i32_0 = arith.constant 0 : i32
    return %c0_i32 : i32
  }
  func.func @transform_1(%arg0: i32) -> i32 {
    %c0_i32 = arith.constant 0 : i32
    %c0_i32_0 = arith.constant 0 : i32
    return %c0_i32 : i32
  }
  func.func @transform_2(%arg0: i32) -> i32 {
    %c0_i32 = arith.constant 0 : i32
    %c0_i32_0 = arith.constant 0 : i32
    return %c0_i32 : i32
  }
  func.func @transform_3(%arg0: i32) -> (i32, i32, i32, i32) {
    %c0_i32 = arith.constant 0 : i32
    %c0_i32_0 = arith.constant 0 : i32
    %c0_i32_1 = arith.constant 0 : i32
    %c0_i32_2 = arith.constant 0 : i32
    return %arg0, %c0_i32, %c0_i32_0, %c0_i32_1 : i32, i32, i32, i32
  }
  func.func @transform_4(%arg0: i32) -> (i32, i32, i32, i32) {
    %c0_i32 = arith.constant 0 : i32
    %c0_i32_0 = arith.constant 0 : i32
    %c0_i32_1 = arith.constant 0 : i32
    %c0_i32_2 = arith.constant 0 : i32
    return %arg0, %c0_i32, %c0_i32_0, %c0_i32_1 : i32, i32, i32, i32
  }
}

</mosaic_0001>

<llo_original>
// kernel: _transform_conv.1
$region0: #{_transform_conv.1}
  #allocation0 [shape = 'u32[]', space=smem, size = 0x4, offset = 0x4, fixed_abs, tag = 'smem constant byte address 0x4 - core index']
  #allocation1 [shape = 'u32[144,128]{1,0:T(1,128)}', space=vmem, size = 0x12000, scoped, tag = 'internal scratch']
  %s0 = inlined_call_operand.vmem [shape: f32[2], index: 0, kind: input, shape index: {}]
  %s1 = inlined_call_operand.vmem [shape: f32[2], index: 1, kind: input, shape index: {}]
  %s2 = inlined_call_operand.vmem [shape: f32[225], index: 2, kind: input, shape index: {}]
  %s3 = inlined_call_operand.vmem [shape: f32[2,3,16,128], index: 3, kind: input, shape index: {}]
  %s4 = inlined_call_operand.hbm [shape: f32[2,3,16,128], index: 4, kind: output, shape index: {}]
  %s5 = sld [smem:[#allocation0]]
  $region61: #{_transform_conv.1} parent=0
    _
  %s7 = ssub.s32 1, %s5
  %s8 = scalar_select 0, %s7, %s5
  $region1: #{_transform_conv.1} parent=0
    #allocation2 [shape = 'u8[512]{0}', space=smem, size = 0x200, scoped, tag = 'input window, operand 0, single buffered']
    #allocation3 [shape = 's32[2]{0}', space=sflag, size = 0x8, scoped, tag = 'scoped memory for _transform_conv.1']
    #allocation4 [shape = 's32[2]{0}', space=sflag, size = 0x8, scoped, tag = 'scoped memory for _transform_conv.1']
    #allocation5 [shape = 'u8[512]{0}', space=smem, size = 0x200, scoped, tag = 'input window, operand 1, single buffered']
    #allocation6 [shape = 's32[1]{0}', space=sflag, size = 0x4, scoped, tag = 'scoped memory for _transform_conv.1']
    #allocation7 [shape = 'u8[1024]{0}', space=smem, size = 0x400, scoped, tag = 'input window, operand 2, single buffered']
    #allocation8 [shape = 'u8[49152]{0}', space=vmem, size = 0xc000, scoped, tag = 'output window, operand 0']
    %9 = vsyncpa [#allocation4], 0
    %10 = vsyncpa [#allocation6], 0
    %11 = vsyncpa [#allocation3], 0
    %s12 = scalar_lea.sflag [#allocation3], 1
    %13 = vsyncpa %s12, 0
    loop: start=0, step=1, limit=4
    $region2: #{_transform_conv.1} parent=1 // loop_pre_header
      _
    $region3: #{_transform_conv.1} parent=1 // loop_header
      %s15 = sphi 0, %s19
      %p16 = scmp.ge.s32.totalorder %s15, 4
      %s23 = sphi 0, %s23
      %s25 = sphi 0, %s23
      %s26 = sphi 0, %s25
      %s40 = sphi 0, %s26
      %s44 = sphi 0, %s44
      %s46 = sphi 0, %s44
      %s47 = sphi 0, %s46
      %s61 = sphi 0, %s47
      %s65 = sphi 0, %s65
      %s67 = sphi 0, %s65
      %s68 = sphi 0, %s67
      %s82 = sphi 0, %s68
      %s88 = sphi 0, %s90
      %s91 = sphi 0, %s88
      %s92 = sphi 0, %s91
      %s108 = sphi 0, %s92
      %s114 = sphi 0, %s116
      %s117 = sphi 0, %s114
      %s118 = sphi 0, %s117
      %s134 = sphi 0, %s118
    $region4: #{_transform_conv.1} parent=1 // loop_header_branch
      %18 = sbr.rel (%p16) target = $region8
    $region5: #{_transform_conv.1} parent=1 // loop_body
      %s20 = ssub.s32 %s15, 1
      %s21 = ssub.s32 %s15, 2
      %s22 = sadd.s32 %s15, 1
      %s24 = sadd.s32 %s23, 1
      %p27 = scmp.eq.s32.totalorder %s15, 1
      %p28 = scmp.ne.s32.totalorder %s23, %s25
      %p29 = scmp.eq.s32.totalorder %s15, 0
      %p30 = por %p28, %p29
      %p31 = scmp.ne.s32.totalorder %s23, %s25
      %p32 = scmp.eq.s32.totalorder %s20, 1
      %p33 = por %p31, %p32
      %p34 = scmp.ne.s32.totalorder %s25, %s26
      %p35 = scmp.eq.s32.totalorder %s20, 0
      %p36 = por %p34, %p35
      %p37 = scmp.ne.s32.totalorder %s25, %s26
      %p38 = scmp.eq.s32.totalorder %s21, 1
      %p39 = por %p37, %p38
      %p41 = scmp.ne.s32.totalorder %s26, %s40
      %p42 = scmp.eq.s32.totalorder %s21, 0
      %p43 = por %p41, %p42
      %s45 = sadd.s32 %s44, 1
      %p48 = scmp.eq.s32.totalorder %s15, 1
      %p49 = scmp.ne.s32.totalorder %s44, %s46
      %p50 = scmp.eq.s32.totalorder %s15, 0
      %p51 = por %p49, %p50
      %p52 = scmp.ne.s32.totalorder %s44, %s46
      %p53 = scmp.eq.s32.totalorder %s20, 1
      %p54 = por %p52, %p53
      %p55 = scmp.ne.s32.totalorder %s46, %s47
      %p56 = scmp.eq.s32.totalorder %s20, 0
      %p57 = por %p55, %p56
      %p58 = scmp.ne.s32.totalorder %s46, %s47
      %p59 = scmp.eq.s32.totalorder %s21, 1
      %p60 = por %p58, %p59
      %p62 = scmp.ne.s32.totalorder %s47, %s61
      %p63 = scmp.eq.s32.totalorder %s21, 0
      %p64 = por %p62, %p63
      %s66 = sadd.s32 %s65, 1
      %p69 = scmp.eq.s32.totalorder %s15, 1
      %p70 = scmp.ne.s32.totalorder %s65, %s67
      %p71 = scmp.eq.s32.totalorder %s15, 0
      %p72 = por %p70, %p71
      %p73 = scmp.ne.s32.totalorder %s65, %s67
      %p74 = scmp.eq.s32.totalorder %s20, 1
      %p75 = por %p73, %p74
      %p76 = scmp.ne.s32.totalorder %s67, %s68
      %p77 = scmp.eq.s32.totalorder %s20, 0
      %p78 = por %p76, %p77
      %p79 = scmp.ne.s32.totalorder %s67, %s68
      %p80 = scmp.eq.s32.totalorder %s21, 1
      %p81 = por %p79, %p80
      %p83 = scmp.ne.s32.totalorder %s68, %s82
      %p84 = scmp.eq.s32.totalorder %s21, 0
      %p85 = por %p83, %p84
      %s86 = ssub.s32 %s15, %s22
      %p87 = scmp.eq.s32.totalorder %s86, 0
      %s89 = sadd.s32 %s88, 1
      %s90 = scalar_select %p87, %s88, %s89
      %p93 = pneg %p87
      %p94 = scmp.eq.s32.totalorder %s15, 1
      %p95 = por %p93, %p94
      %p96 = scmp.ne.s32.totalorder %s88, %s91
      %p97 = scmp.eq.s32.totalorder %s15, 0
      %p98 = por %p96, %p97
      %p99 = scmp.ne.s32.totalorder %s88, %s91
      %p100 = scmp.eq.s32.totalorder %s20, 1
      %p101 = por %p99, %p100
      %p102 = scmp.ne.s32.totalorder %s91, %s92
      %p103 = scmp.eq.s32.totalorder %s20, 0
      %p104 = por %p102, %p103
      %p105 = scmp.ne.s32.totalorder %s91, %s92
      %p106 = scmp.eq.s32.totalorder %s21, 1
      %p107 = por %p105, %p106
      %p109 = scmp.ne.s32.totalorder %s92, %s108
      %p110 = scmp.eq.s32.totalorder %s21, 0
      %p111 = por %p109, %p110
      %s112 = ssub.s32 %s15, %s22
      %p113 = scmp.eq.s32.totalorder %s112, 0
      %s115 = sadd.s32 %s114, 1
      %s116 = scalar_select %p113, %s114, %s115
      %p119 = pneg %p113
      %p120 = scmp.eq.s32.totalorder %s15, 1
      %p121 = por %p119, %p120
      %p122 = scmp.ne.s32.totalorder %s114, %s117
      %p123 = scmp.eq.s32.totalorder %s15, 0
      %p124 = por %p122, %p123
      %p125 = scmp.ne.s32.totalorder %s114, %s117
      %p126 = scmp.eq.s32.totalorder %s20, 1
      %p127 = por %p125, %p126
      %p128 = scmp.ne.s32.totalorder %s117, %s118
      %p129 = scmp.eq.s32.totalorder %s20, 0
      %p130 = por %p128, %p129
      %p131 = scmp.ne.s32.totalorder %s117, %s118
      %p132 = scmp.eq.s32.totalorder %s21, 1
      %p133 = por %p131, %p132
      %p135 = scmp.ne.s32.totalorder %s118, %s134
      %p136 = scmp.eq.s32.totalorder %s21, 0
      %p137 = por %p135, %p136
      %p138 = scmp.le.s32.totalorder 1, %s15
      %p139 = scmp.lt.s32.totalorder %s15, 3
      %p140 = pnand %p138, %p139
      %p141 = pneg %p140
      // Predicated region
      $region9: #{_transform_conv.1} parent=5 // pred_check
        _
      $region10: #{_transform_conv.1} parent=5 // pred_check_branch
        %143 = sbr.rel (%p140) target = $region12
      $region11: #{_transform_conv.1} parent=5 // pred_region
        %s144 = ssub.s32 %s15, 1
        // Predicated region
        $region13: #{_transform_conv.1} parent=11 // pred_check
          %p145 = pneg %p36
        $region14: #{_transform_conv.1} parent=11 // pred_check_branch
          %147 = sbr.rel (%p145) target = $region16
        $region15: #{_transform_conv.1} parent=11 // pred_region
          %s149 = ssub.s32 16, 16
          %150 = vsyncadd [#allocation4], %s149
          %s152 = sshll.u32 %s0, 4
          %s153 = int_to_ptr.vmem [resolvable:$true] %s152
          %155 = dma.vmem_to_smem %s153, 16, [#allocation2], [#allocation4]
        $region16: #{_transform_conv.1} parent=11 // pred_fallthru
          _
        // Predicated region
        $region17: #{_transform_conv.1} parent=11 // pred_check
          %p156 = pneg %p57
        $region18: #{_transform_conv.1} parent=11 // pred_check_branch
          %158 = sbr.rel (%p156) target = $region20
        $region19: #{_transform_conv.1} parent=11 // pred_region
          %s160 = ssub.s32 16, 16
          %161 = vsyncadd [#allocation6], %s160
          %s163 = sshll.u32 %s1, 4
          %s164 = int_to_ptr.vmem [resolvable:$true] %s163
          %166 = dma.vmem_to_smem %s164, 16, [#allocation5], [#allocation6]
        $region20: #{_transform_conv.1} parent=11 // pred_fallthru
          _
        // Predicated region
        $region21: #{_transform_conv.1} parent=11 // pred_check
          %p167 = pneg %p78
        $region22: #{_transform_conv.1} parent=11 // pred_check_branch
          %169 = sbr.rel (%p167) target = $region24
        $region23: #{_transform_conv.1} parent=11 // pred_region
          %s171 = ssub.s32 32, 32
          %172 = vsyncadd [#allocation6], %s171
          %s174 = sshll.u32 %s2, 4
          %s175 = int_to_ptr.vmem [resolvable:$true] %s174
          %177 = dma.vmem_to_smem %s175, 32, [#allocation7], [#allocation6]
        $region24: #{_transform_conv.1} parent=11 // pred_fallthru
          _
      $region12: #{_transform_conv.1} parent=5 // pred_fallthru
        _
      %p178 = scmp.lt.s32.totalorder %s15, 2
      // Predicated region
      $region25: #{_transform_conv.1} parent=5 // pred_check
        %p179 = pneg %p178
      $region26: #{_transform_conv.1} parent=5 // pred_check_branch
        %181 = sbr.rel (%p179) target = $region28
      $region27: #{_transform_conv.1} parent=5 // pred_region
        // Predicated region
        $region29: #{_transform_conv.1} parent=27 // pred_check
          %p182 = pneg %p98
        $region30: #{_transform_conv.1} parent=27 // pred_check_branch
          %184 = sbr.rel (%p182) target = $region32
        $region31: #{_transform_conv.1} parent=27 // pred_region
          %p185 = scmp.lt.s32.totalorder %s15, 1
          %s186 = scalar_select %p185, %s15, 1
          %s187 = smul.addr %s186, 6
          %s188 = smul.addr %s187, 8
          %s189 = scalar_lea.vmem %s3, %s188
        $region32: #{_transform_conv.1} parent=27 // pred_fallthru
          _
      $region28: #{_transform_conv.1} parent=5 // pred_fallthru
        _
      %p190 = scmp.le.s32.totalorder 1, %s15
      %p191 = scmp.lt.s32.totalorder %s15, 3
      %p192 = pnand %p190, %p191
      %p193 = pneg %p192
      // Predicated region
      $region33: #{_transform_conv.1} parent=5 // pred_check
        _
      $region34: #{_transform_conv.1} parent=5 // pred_check_branch
        %195 = sbr.rel (%p192) target = $region36
      $region35: #{_transform_conv.1} parent=5 // pred_region
        %s196 = ssub.s32 %s15, 1
        // Predicated region
        $region37: #{_transform_conv.1} parent=35 // pred_check
          %p197 = pneg %p36
        $region38: #{_transform_conv.1} parent=35 // pred_check_branch
          %199 = sbr.rel (%p197) target = $region40
        $region39: #{_transform_conv.1} parent=35 // pred_region
          %200 = dma.done [#allocation4], 16
        $region40: #{_transform_conv.1} parent=35 // pred_fallthru
          _
        // Predicated region
        $region41: #{_transform_conv.1} parent=35 // pred_check
          %p201 = pneg %p57
        $region42: #{_transform_conv.1} parent=35 // pred_check_branch
          %203 = sbr.rel (%p201) target = $region44
        $region43: #{_transform_conv.1} parent=35 // pred_region
          %204 = dma.done [#allocation6], 16
        $region44: #{_transform_conv.1} parent=35 // pred_fallthru
          _
        // Predicated region
        $region45: #{_transform_conv.1} parent=35 // pred_check
          %p205 = pneg %p78
        $region46: #{_transform_conv.1} parent=35 // pred_check_branch
          %207 = sbr.rel (%p205) target = $region48
        $region47: #{_transform_conv.1} parent=35 // pred_region
          %208 = dma.done [#allocation6], 32
        $region48: #{_transform_conv.1} parent=35 // pred_fallthru
          _
        %209 = sfence
        %p210 = pneg %p36
        %p211 = pneg %p33
        %p212 = pneg %p57
        %p213 = pneg %p54
        %p214 = pneg %p78
        %p215 = pneg %p75
        %p216 = scmp.lt.s32.totalorder %s20, 1
        %s217 = scalar_select %p216, %s20, 1
        %s218 = smul.addr %s217, 6
        %s219 = smul.addr %s218, 8
        %s220 = scalar_lea.vmem %s3, %s219
        %p221 = pneg %p104
        %p222 = pneg %p101
        %p223 = pneg %p130
        %p224 = pneg %p127
        %s225 = sand.u32 %s117, 1
        %s226 = scalar_lea.sflag [#allocation3], %s225
        %s227 = sand.u32 %s117, 1
        %s228 = smul.addr %s227, 48
        %s229 = scalar_lea.vmem [#allocation8], %s228
        %p230 = scmp.lt.s32.totalorder %s20, 1
        %s231 = scalar_select %p230, %s20, 1
        %s232 = smul.addr %s231, 6
        %s233 = smul.addr %s232, 8
        %s234 = scalar_lea.vmem %s3, %s233
        %s235 = sld [smem:[#allocation2 + %s20]]
        %s236 = sld [smem:[#allocation5 + %s20]]
        %v237 = vld [vmem:[%s234] sm:$0xff]
        %v238 = vld [vmem:[%s234 + $0x8] sm:$0xff]
        %s239 = scalar_lea.vmem %s234, 16
        %v240 = vld [vmem:[%s239] sm:$0xff]
        %v241 = vld [vmem:[%s239 + $0x8] sm:$0xff]
        %s242 = scalar_lea.vmem %s234, 32
        %v243 = vld [vmem:[%s242] sm:$0xff]
        %v244 = vld [vmem:[%s242 + $0x8] sm:$0xff]
        %v245 = vadd.f32 %v237, %v240
        %v246 = vadd.f32 %v238, %v241
        %v247 = vadd.f32 %v245, %v243
        %v248 = vadd.f32 %v246, %v244
        %vm249 = vcmp.eq.f32.partialorder %v247, 0.0
        %vm250 = vcmp.eq.f32.partialorder %v248, 0.0
        %v251 = vsel %vm249, 1, 0
        %v252 = vsel %vm250, 1, 0
        %v253 = vcvt.s32.f32 %v251
        %v254 = vcvt.s32.f32 %v252
        %255 = vadd.xlane.f32.xlu0 %v253
        %v256 = vpop.xlane.xlu0 %255
        %257 = vadd.xlane.f32.xlu0 %v254
        %v258 = vpop.xlane.xlu0 %257
        %v259 = vadd.f32 %v253, %v254
        %v260 = vrot.slane %v259, 4
        %v261 = vadd.f32 %v259, %v260
        %v262 = vrot.slane %v261, 2
        %v263 = vadd.f32 %v261, %v262
        %v264 = vrot.slane %v263, 1
        %v265 = vadd.f32 %v263, %v264
        %vm266 = vcmp.lt.f32.partialorder %v256, 128.0
        %vm267 = vcmp.lt.f32.partialorder %v258, 128.0
        %vm268 = vcmp.lt.f32.partialorder %v265, 16.0
        %v269 = vsel %vm266, 1, 0
        %v270 = vsel %vm267, 1, 0
        %vm271 = vcmp.eq.s32.totalorder %v269, 1
        %vm272 = vcmp.eq.s32.totalorder %v270, 1
        %v273 = vsel %vm268, 1, 0
        %vm274 = vcmp.eq.s32.totalorder %v273, 1
        %vm275 = vmand %vm271, %vm274
        %vm276 = vmand %vm272, %vm274
        %v277 = vsel %vm275, 1, 0
        %v278 = vsel %vm276, 1, 0
        %v279 = vcvt.s32.f32 %v277
        %v280 = vcvt.s32.f32 %v278
        %v281 = vstv %s235
        %v282 = vmul.f32 %v281, %v237
        %v283 = vmul.f32 %v281, %v238
        %v284 = vstv %s236
        %v285 = vadd.f32 %v282, %v284
        %v286 = vadd.f32 %v283, %v284
        %v287 = vmul.f32 %v285, %v279
        %v288 = vmul.f32 %v286, %v280
        %v289 = vmul.f32 %v281, %v240
        %v290 = vmul.f32 %v281, %v241
        %v291 = vadd.f32 %v289, %v284
        %v292 = vadd.f32 %v290, %v284
        %v293 = vmul.f32 %v291, %v279
        %v294 = vmul.f32 %v292, %v280
        %v295 = vmul.f32 %v281, %v243
        %v296 = vmul.f32 %v281, %v244
        %v297 = vadd.f32 %v295, %v284
        %v298 = vadd.f32 %v296, %v284
        %v299 = vmul.f32 %v297, %v279
        %v300 = vmul.f32 %v298, %v280
        %s301 = sld [smem:[#allocation7]]
        %s302 = sld [smem:[#allocation7 + $0x1]]
        %s303 = sld [smem:[#allocation7 + $0x2]]
        %s304 = sld [smem:[#allocation7 + $0x3]]
        %s305 = sld [smem:[#allocation7 + $0x4]]
        %s306 = sld [smem:[#allocation7 + $0x5]]
        %s307 = sld [smem:[#allocation7 + $0x6]]
        %s308 = sld [smem:[#allocation7 + $0x7]]
        %s309 = sld [smem:[#allocation7 + $0x8]]
        %s310 = sld [smem:[#allocation7 + $0x9]]
        %s311 = sld [smem:[#allocation7 + $0xa]]
        %s312 = sld [smem:[#allocation7 + $0xb]]
        %s313 = sld [smem:[#allocation7 + $0xc]]
        %s314 = sld [smem:[#allocation7 + $0xd]]
        %s315 = sld [smem:[#allocation7 + $0xe]]
        %s316 = sld [smem:[#allocation7 + $0xf]]
        %s317 = sld [smem:[#allocation7 + $0x10]]
        %s318 = sld [smem:[#allocation7 + $0x11]]
        %s319 = sld [smem:[#allocation7 + $0x12]]
        %s320 = sld [smem:[#allocation7 + $0x13]]
        %s321 = sld [smem:[#allocation7 + $0x14]]
        %s322 = sld [smem:[#allocation7 + $0x15]]
        %s323 = sld [smem:[#allocation7 + $0x16]]
        %s324 = sld [smem:[#allocation7 + $0x17]]
        %s325 = sld [smem:[#allocation7 + $0x18]]
        %s326 = sld [smem:[#allocation7 + $0x19]]
        %s327 = sld [smem:[#allocation7 + $0x1a]]
        %s328 = sld [smem:[#allocation7 + $0x1b]]
        %s329 = sld [smem:[#allocation7 + $0x1c]]
        %s330 = sld [smem:[#allocation7 + $0x1d]]
        %s331 = sld [smem:[#allocation7 + $0x1e]]
        %s332 = sld [smem:[#allocation7 + $0x1f]]
        %s333 = sld [smem:[#allocation7 + $0x20]]
        %s334 = sld [smem:[#allocation7 + $0x21]]
        %s335 = sld [smem:[#allocation7 + $0x22]]
        %s336 = sld [smem:[#allocation7 + $0x23]]
        %s337 = sld [smem:[#allocation7 + $0x24]]
        %s338 = sld [smem:[#allocation7 + $0x25]]
        %s339 = sld [smem:[#allocation7 + $0x26]]
        %s340 = sld [smem:[#allocation7 + $0x27]]
        %s341 = sld [smem:[#allocation7 + $0x28]]
        %s342 = sld [smem:[#allocation7 + $0x29]]
        %s343 = sld [smem:[#allocation7 + $0x2a]]
        %s344 = sld [smem:[#allocation7 + $0x2b]]
        %s345 = sld [smem:[#allocation7 + $0x2c]]
        %s346 = sld [smem:[#allocation7 + $0x2d]]
        %s347 = sld [smem:[#allocation7 + $0x2e]]
        %s348 = sld [smem:[#allocation7 + $0x2f]]
        %s349 = sld [smem:[#allocation7 + $0x30]]
        %s350 = sld [smem:[#allocation7 + $0x31]]
        %s351 = sld [smem:[#allocation7 + $0x32]]
        %s352 = sld [smem:[#allocation7 + $0x33]]
        %s353 = sld [smem:[#allocation7 + $0x34]]
        %s354 = sld [smem:[#allocation7 + $0x35]]
        %s355 = sld [smem:[#allocation7 + $0x36]]
        %s356 = sld [smem:[#allocation7 + $0x37]]
        %s357 = sld [smem:[#allocation7 + $0x38]]
        %s358 = sld [smem:[#allocation7 + $0x39]]
        %s359 = sld [smem:[#allocation7 + $0x3a]]
        %s360 = sld [smem:[#allocation7 + $0x3b]]
        %s361 = sld [smem:[#allocation7 + $0x3c]]
        %s362 = sld [smem:[#allocation7 + $0x3d]]
        %s363 = sld [smem:[#allocation7 + $0x3e]]
        %s364 = sld [smem:[#allocation7 + $0x3f]]
        %s365 = sld [smem:[#allocation7 + $0x40]]
        %s366 = sld [smem:[#allocation7 + $0x41]]
        %s367 = sld [smem:[#allocation7 + $0x42]]
        %s368 = sld [smem:[#allocation7 + $0x43]]
        %s369 = sld [smem:[#allocation7 + $0x44]]
        %s370 = sld [smem:[#allocation7 + $0x45]]
        %s371 = sld [smem:[#allocation7 + $0x46]]
        %s372 = sld [smem:[#allocation7 + $0x47]]
        %s373 = sld [smem:[#allocation7 + $0x48]]
        %s374 = sld [smem:[#allocation7 + $0x49]]
        %s375 = sld [smem:[#allocation7 + $0x4a]]
        %s376 = sld [smem:[#allocation7 + $0x4b]]
        %s377 = sld [smem:[#allocation7 + $0x4c]]
        %s378 = sld [smem:[#allocation7 + $0x4d]]
        %s379 = sld [smem:[#allocation7 + $0x4e]]
        %s380 = sld [smem:[#allocation7 + $0x4f]]
        %s381 = sld [smem:[#allocation7 + $0x50]]
        %s382 = sld [smem:[#allocation7 + $0x51]]
        %s383 = sld [smem:[#allocation7 + $0x52]]
        %s384 = sld [smem:[#allocation7 + $0x53]]
        %s385 = sld [smem:[#allocation7 + $0x54]]
        %s386 = sld [smem:[#allocation7 + $0x55]]
        %s387 = sld [smem:[#allocation7 + $0x56]]
        %s388 = sld [smem:[#allocation7 + $0x57]]
        %s389 = sld [smem:[#allocation7 + $0x58]]
        %s390 = sld [smem:[#allocation7 + $0x59]]
        %s391 = sld [smem:[#allocation7 + $0x5a]]
        %s392 = sld [smem:[#allocation7 + $0x5b]]
        %s393 = sld [smem:[#allocation7 + $0x5c]]
        %s394 = sld [smem:[#allocation7 + $0x5d]]
        %s395 = sld [smem:[#allocation7 + $0x5e]]
        %s396 = sld [smem:[#allocation7 + $0x5f]]
        %s397 = sld [smem:[#allocation7 + $0x60]]
        %s398 = sld [smem:[#allocation7 + $0x61]]
        %s399 = sld [smem:[#allocation7 + $0x62]]
        %s400 = sld [smem:[#allocation7 + $0x63]]
        %s401 = sld [smem:[#allocation7 + $0x64]]
        %s402 = sld [smem:[#allocation7 + $0x65]]
        %s403 = sld [smem:[#allocation7 + $0x66]]
        %s404 = sld [smem:[#allocation7 + $0x67]]
        %s405 = sld [smem:[#allocation7 + $0x68]]
        %s406 = sld [smem:[#allocation7 + $0x69]]
        %s407 = sld [smem:[#allocation7 + $0x6a]]
        %s408 = sld [smem:[#allocation7 + $0x6b]]
        %s409 = sld [smem:[#allocation7 + $0x6c]]
        %s410 = sld [smem:[#allocation7 + $0x6d]]
        %s411 = sld [smem:[#allocation7 + $0x6e]]
        %s412 = sld [smem:[#allocation7 + $0x6f]]
        %s413 = sld [smem:[#allocation7 + $0x70]]
        %s414 = sld [smem:[#allocation7 + $0x71]]
        %s415 = sld [smem:[#allocation7 + $0x72]]
        %s416 = sld [smem:[#allocation7 + $0x73]]
        %s417 = sld [smem:[#allocation7 + $0x74]]
        %s418 = sld [smem:[#allocation7 + $0x75]]
        %s419 = sld [smem:[#allocation7 + $0x76]]
        %s420 = sld [smem:[#allocation7 + $0x77]]
        %s421 = sld [smem:[#allocation7 + $0x78]]
        %s422 = sld [smem:[#allocation7 + $0x79]]
        %s423 = sld [smem:[#allocation7 + $0x7a]]
        %s424 = sld [smem:[#allocation7 + $0x7b]]
        %s425 = sld [smem:[#allocation7 + $0x7c]]
        %s426 = sld [smem:[#allocation7 + $0x7d]]
        %s427 = sld [smem:[#allocation7 + $0x7e]]
        %s428 = sld [smem:[#allocation7 + $0x7f]]
        %s429 = sld [smem:[#allocation7 + $0x80]]
        %s430 = sld [smem:[#allocation7 + $0x81]]
        %s431 = sld [smem:[#allocation7 + $0x82]]
        %s432 = sld [smem:[#allocation7 + $0x83]]
        %s433 = sld [smem:[#allocation7 + $0x84]]
        %s434 = sld [smem:[#allocation7 + $0x85]]
        %s435 = sld [smem:[#allocation7 + $0x86]]
        %s436 = sld [smem:[#allocation7 + $0x87]]
        %s437 = sld [smem:[#allocation7 + $0x88]]
        %s438 = sld [smem:[#allocation7 + $0x89]]
        %s439 = sld [smem:[#allocation7 + $0x8a]]
        %s440 = sld [smem:[#allocation7 + $0x8b]]
        %s441 = sld [smem:[#allocation7 + $0x8c]]
        %s442 = sld [smem:[#allocation7 + $0x8d]]
        %s443 = sld [smem:[#allocation7 + $0x8e]]
        %s444 = sld [smem:[#allocation7 + $0x8f]]
        %s445 = sld [smem:[#allocation7 + $0x90]]
        %s446 = sld [smem:[#allocation7 + $0x91]]
        %s447 = sld [smem:[#allocation7 + $0x92]]
        %s448 = sld [smem:[#allocation7 + $0x93]]
        %s449 = sld [smem:[#allocation7 + $0x94]]
        %s450 = sld [smem:[#allocation7 + $0x95]]
        %s451 = sld [smem:[#allocation7 + $0x96]]
        %s452 = sld [smem:[#allocation7 + $0x97]]
        %s453 = sld [smem:[#allocation7 + $0x98]]
        %s454 = sld [smem:[#allocation7 + $0x99]]
        %s455 = sld [smem:[#allocation7 + $0x9a]]
        %s456 = sld [smem:[#allocation7 + $0x9b]]
        %s457 = sld [smem:[#allocation7 + $0x9c]]
        %s458 = sld [smem:[#allocation7 + $0x9d]]
        %s459 = sld [smem:[#allocation7 + $0x9e]]
        %s460 = sld [smem:[#allocation7 + $0x9f]]
        %s461 = sld [smem:[#allocation7 + $0xa0]]
        %s462 = sld [smem:[#allocation7 + $0xa1]]
        %s463 = sld [smem:[#allocation7 + $0xa2]]
        %s464 = sld [smem:[#allocation7 + $0xa3]]
        %s465 = sld [smem:[#allocation7 + $0xa4]]
        %s466 = sld [smem:[#allocation7 + $0xa5]]
        %s467 = sld [smem:[#allocation7 + $0xa6]]
        %s468 = sld [smem:[#allocation7 + $0xa7]]
        %s469 = sld [smem:[#allocation7 + $0xa8]]
        %s470 = sld [smem:[#allocation7 + $0xa9]]
        %s471 = sld [smem:[#allocation7 + $0xaa]]
        %s472 = sld [smem:[#allocation7 + $0xab]]
        %s473 = sld [smem:[#allocation7 + $0xac]]
        %s474 = sld [smem:[#allocation7 + $0xad]]
        %s475 = sld [smem:[#allocation7 + $0xae]]
        %s476 = sld [smem:[#allocation7 + $0xaf]]
        %s477 = sld [smem:[#allocation7 + $0xb0]]
        %s478 = sld [smem:[#allocation7 + $0xb1]]
        %s479 = sld [smem:[#allocation7 + $0xb2]]
        %s480 = sld [smem:[#allocation7 + $0xb3]]
        %s481 = sld [smem:[#allocation7 + $0xb4]]
        %s482 = sld [smem:[#allocation7 + $0xb5]]
        %s483 = sld [smem:[#allocation7 + $0xb6]]
        %s484 = sld [smem:[#allocation7 + $0xb7]]
        %s485 = sld [smem:[#allocation7 + $0xb8]]
        %s486 = sld [smem:[#allocation7 + $0xb9]]
        %s487 = sld [smem:[#allocation7 + $0xba]]
        %s488 = sld [smem:[#allocation7 + $0xbb]]
        %s489 = sld [smem:[#allocation7 + $0xbc]]
        %s490 = sld [smem:[#allocation7 + $0xbd]]
        %s491 = sld [smem:[#allocation7 + $0xbe]]
        %s492 = sld [smem:[#allocation7 + $0xbf]]
        %s493 = sld [smem:[#allocation7 + $0xc0]]
        %s494 = sld [smem:[#allocation7 + $0xc1]]
        %s495 = sld [smem:[#allocation7 + $0xc2]]
        %s496 = sld [smem:[#allocation7 + $0xc3]]
        %s497 = sld [smem:[#allocation7 + $0xc4]]
        %s498 = sld [smem:[#allocation7 + $0xc5]]
        %s499 = sld [smem:[#allocation7 + $0xc6]]
        %s500 = sld [smem:[#allocation7 + $0xc7]]
        %s501 = sld [smem:[#allocation7 + $0xc8]]
        %s502 = sld [smem:[#allocation7 + $0xc9]]
        %s503 = sld [smem:[#allocation7 + $0xca]]
        %s504 = sld [smem:[#allocation7 + $0xcb]]
        %s505 = sld [smem:[#allocation7 + $0xcc]]
        %s506 = sld [smem:[#allocation7 + $0xcd]]
        %s507 = sld [smem:[#allocation7 + $0xce]]
        %s508 = sld [smem:[#allocation7 + $0xcf]]
        %s509 = sld [smem:[#allocation7 + $0xd0]]
        %s510 = sld [smem:[#allocation7 + $0xd1]]
        %s511 = sld [smem:[#allocation7 + $0xd2]]
        %s512 = sld [smem:[#allocation7 + $0xd3]]
        %s513 = sld [smem:[#allocation7 + $0xd4]]
        %s514 = sld [smem:[#allocation7 + $0xd5]]
        %s515 = sld [smem:[#allocation7 + $0xd6]]
        %s516 = sld [smem:[#allocation7 + $0xd7]]
        %s517 = sld [smem:[#allocation7 + $0xd8]]
        %s518 = sld [smem:[#allocation7 + $0xd9]]
        %s519 = sld [smem:[#allocation7 + $0xda]]
        %s520 = sld [smem:[#allocation7 + $0xdb]]
        %s521 = sld [smem:[#allocation7 + $0xdc]]
        %s522 = sld [smem:[#allocation7 + $0xdd]]
        %s523 = sld [smem:[#allocation7 + $0xde]]
        %s524 = sld [smem:[#allocation7 + $0xdf]]
        %s525 = sld [smem:[#allocation7 + $0xe0]]
        %v526 = vlaneseq
        %v527 = vshrl.u32 %v526, 7
        %v528 = vadd.s32 %v527, 8
        %v529 = vlaneseq
        %v530 = vand.u32 %v529, 127
        %vm531 = vcmp.ge.s32.totalorder %v527, 2
        %vm532 = vcmp.ge.s32.totalorder %v528, 2
        %vm533 = vcmp.ge.s32.totalorder %v530, 2
        %vm534 = vcmp.ge.s32.totalorder %v527, 1
        %vm535 = vcmp.ge.s32.totalorder %v528, 1
        %vm536 = vcmp.ge.s32.totalorder %v530, 1
        %vm537 = vcmp.lt.s32.totalorder %v527, 15
        %vm538 = vcmp.lt.s32.totalorder %v528, 15
        %vm539 = vcmp.lt.s32.totalorder %v530, 127
        %vm540 = vcmp.lt.s32.totalorder %v527, 14
        %vm541 = vcmp.lt.s32.totalorder %v528, 14
        %vm542 = vcmp.lt.s32.totalorder %v530, 126
        %v543 = vrot.slane %v287, 6
        %v544 = vrot.slane %v288, 6
        %vm545 = vcmp.lt.s32.totalorder %v527, 2
        %v546 = vsel %vm545, %v543, %v544
        %v547 = vsel %vm545, %v544, %v543
        %v548 = vsel %vm531, %v547, 0.0
        %v549 = vsel %vm532, %v546, 0.0
        %550 = vrot.lane.b32.xlu0 %v548, 2
        %v551 = vpop.permute.xlu0 %550
        %552 = vrot.lane.b32.xlu0 %v549, 2
        %v553 = vpop.permute.xlu0 %552
        %v554 = vsel %vm533, %v551, 0.0
        %v555 = vsel %vm533, %v553, 0.0
        %v556 = vstv %s301
        %v557 = vmul.f32 %v556, %v554
        %v558 = vmul.f32 %v556, %v555
        %v559 = vadd.f32 %v557, 0.0
        %v560 = vadd.f32 %v558, 0.0
        %v561 = vstv %s376
        %v562 = vmul.f32 %v561, %v554
        %v563 = vmul.f32 %v561, %v555
        %v564 = vadd.f32 %v562, 0.0
        %v565 = vadd.f32 %v563, 0.0
        %v566 = vstv %s451
        %v567 = vmul.f32 %v566, %v554
        %v568 = vmul.f32 %v566, %v555
        %v569 = vadd.f32 %v567, 0.0
        %v570 = vadd.f32 %v568, 0.0
        %571 = vrot.lane.b32.xlu0 %v548, 1
        %v572 = vpop.permute.xlu0 %571
        %573 = vrot.lane.b32.xlu0 %v549, 1
        %v574 = vpop.permute.xlu0 %573
        %v575 = vsel %vm536, %v572, 0.0
        %v576 = vsel %vm536, %v574, 0.0
        %v577 = vstv %s302
        %v578 = vmul.f32 %v577, %v575
        %v579 = vmul.f32 %v577, %v576
        %v580 = vadd.f32 %v559, %v578
        %v581 = vadd.f32 %v560, %v579
        %v582 = vstv %s377
        %v583 = vmul.f32 %v582, %v575
        %v584 = vmul.f32 %v582, %v576
        %v585 = vadd.f32 %v564, %v583
        %v586 = vadd.f32 %v565, %v584
        %v587 = vstv %s452
        %v588 = vmul.f32 %v587, %v575
        %v589 = vmul.f32 %v587, %v576
        %v590 = vadd.f32 %v569, %v588
        %v591 = vadd.f32 %v570, %v589
        %v592 = vstv %s303
        %v593 = vmul.f32 %v592, %v548
        %v594 = vmul.f32 %v592, %v549
        %v595 = vadd.f32 %v580, %v593
        %v596 = vadd.f32 %v581, %v594
        %v597 = vstv %s378
        %v598 = vmul.f32 %v597, %v548
        %v599 = vmul.f32 %v597, %v549
        %v600 = vadd.f32 %v585, %v598
        %v601 = vadd.f32 %v586, %v599
        %v602 = vstv %s453
        %v603 = vmul.f32 %v602, %v548
        %v604 = vmul.f32 %v602, %v549
        %v605 = vadd.f32 %v590, %v603
        %v606 = vadd.f32 %v591, %v604
        %607 = vrot.lane.b32.xlu0 %v548, 127
        %v608 = vpop.permute.xlu0 %607
        %609 = vrot.lane.b32.xlu0 %v549, 127
        %v610 = vpop.permute.xlu0 %609
        %v611 = vsel %vm539, %v608, 0.0
        %v612 = vsel %vm539, %v610, 0.0
        %v613 = vstv %s304
        %v614 = vmul.f32 %v613, %v611
        %v615 = vmul.f32 %v613, %v612
        %v616 = vadd.f32 %v595, %v614
        %v617 = vadd.f32 %v596, %v615
        %v618 = vstv %s379
        %v619 = vmul.f32 %v618, %v611
        %v620 = vmul.f32 %v618, %v612
        %v621 = vadd.f32 %v600, %v619
        %v622 = vadd.f32 %v601, %v620
        %v623 = vstv %s454
        %v624 = vmul.f32 %v623, %v611
        %v625 = vmul.f32 %v623, %v612
        %v626 = vadd.f32 %v605, %v624
        %v627 = vadd.f32 %v606, %v625
        %628 = vrot.lane.b32.xlu0 %v548, 126
        %v629 = vpop.permute.xlu0 %628
        %630 = vrot.lane.b32.xlu0 %v549, 126
        %v631 = vpop.permute.xlu0 %630
        %v632 = vsel %vm542, %v629, 0.0
        %v633 = vsel %vm542, %v631, 0.0
        %v634 = vstv %s305
        %v635 = vmul.f32 %v634, %v632
        %v636 = vmul.f32 %v634, %v633
        %v637 = vadd.f32 %v616, %v635
        %v638 = vadd.f32 %v617, %v636
        %v639 = vstv %s380
        %v640 = vmul.f32 %v639, %v632
        %v641 = vmul.f32 %v639, %v633
        %v642 = vadd.f32 %v621, %v640
        %v643 = vadd.f32 %v622, %v641
        %v644 = vstv %s455
        %v645 = vmul.f32 %v644, %v632
        %v646 = vmul.f32 %v644, %v633
        %v647 = vadd.f32 %v626, %v645
        %v648 = vadd.f32 %v627, %v646
        %v649 = vrot.slane %v287, 7
        %v650 = vrot.slane %v288, 7
        %vm651 = vcmp.lt.s32.totalorder %v527, 1
        %v652 = vsel %vm651, %v649, %v650
        %v653 = vsel %vm651, %v650, %v649
        %v654 = vsel %vm534, %v653, 0.0
        %v655 = vsel %vm535, %v652, 0.0
        %656 = vrot.lane.b32.xlu0 %v654, 2
        %v657 = vpop.permute.xlu0 %656
        %658 = vrot.lane.b32.xlu0 %v655, 2
        %v659 = vpop.permute.xlu0 %658
        %v660 = vsel %vm533, %v657, 0.0
        %v661 = vsel %vm533, %v659, 0.0
        %v662 = vstv %s306
        %v663 = vmul.f32 %v662, %v660
        %v664 = vmul.f32 %v662, %v661
        %v665 = vadd.f32 %v637, %v663
        %v666 = vadd.f32 %v638, %v664
        %v667 = vstv %s381
        %v668 = vmul.f32 %v667, %v660
        %v669 = vmul.f32 %v667, %v661
        %v670 = vadd.f32 %v642, %v668
        %v671 = vadd.f32 %v643, %v669
        %v672 = vstv %s456
        %v673 = vmul.f32 %v672, %v660
        %v674 = vmul.f32 %v672, %v661
        %v675 = vadd.f32 %v647, %v673
        %v676 = vadd.f32 %v648, %v674
        %677 = vrot.lane.b32.xlu0 %v654, 1
        %v678 = vpop.permute.xlu0 %677
        %679 = vrot.lane.b32.xlu0 %v655, 1
        %v680 = vpop.permute.xlu0 %679
        %v681 = vsel %vm536, %v678, 0.0
        %v682 = vsel %vm536, %v680, 0.0
        %v683 = vstv %s307
        %v684 = vmul.f32 %v683, %v681
        %v685 = vmul.f32 %v683, %v682
        %v686 = vadd.f32 %v665, %v684
        %v687 = vadd.f32 %v666, %v685
        %v688 = vstv %s382
        %v689 = vmul.f32 %v688, %v681
        %v690 = vmul.f32 %v688, %v682
        %v691 = vadd.f32 %v670, %v689
        %v692 = vadd.f32 %v671, %v690
        %v693 = vstv %s457
        %v694 = vmul.f32 %v693, %v681
        %v695 = vmul.f32 %v693, %v682
        %v696 = vadd.f32 %v675, %v694
        %v697 = vadd.f32 %v676, %v695
        %v698 = vstv %s308
        %v699 = vmul.f32 %v698, %v654
        %v700 = vmul.f32 %v698, %v655
        %v701 = vadd.f32 %v686, %v699
        %v702 = vadd.f32 %v687, %v700
        %v703 = vstv %s383
        %v704 = vmul.f32 %v703, %v654
        %v705 = vmul.f32 %v703, %v655
        %v706 = vadd.f32 %v691, %v704
        %v707 = vadd.f32 %v692, %v705
        %v708 = vstv %s458
        %v709 = vmul.f32 %v708, %v654
        %v710 = vmul.f32 %v708, %v655
        %v711 = vadd.f32 %v696, %v709
        %v712 = vadd.f32 %v697, %v710
        %713 = vrot.lane.b32.xlu0 %v654, 127
        %v714 = vpop.permute.xlu0 %713
        %715 = vrot.lane.b32.xlu0 %v655, 127
        %v716 = vpop.permute.xlu0 %715
        %v717 = vsel %vm539, %v714, 0.0
        %v718 = vsel %vm539, %v716, 0.0
        %v719 = vstv %s309
        %v720 = vmul.f32 %v719, %v717
        %v721 = vmul.f32 %v719, %v718
        %v722 = vadd.f32 %v701, %v720
        %v723 = vadd.f32 %v702, %v721
        %v724 = vstv %s384
        %v725 = vmul.f32 %v724, %v717
        %v726 = vmul.f32 %v724, %v718
        %v727 = vadd.f32 %v706, %v725
        %v728 = vadd.f32 %v707, %v726
        %v729 = vstv %s459
        %v730 = vmul.f32 %v729, %v717
        %v731 = vmul.f32 %v729, %v718
        %v732 = vadd.f32 %v711, %v730
        %v733 = vadd.f32 %v712, %v731
        %734 = vrot.lane.b32.xlu0 %v654, 126
        %v735 = vpop.permute.xlu0 %734
        %736 = vrot.lane.b32.xlu0 %v655, 126
        %v737 = vpop.permute.xlu0 %736
        %v738 = vsel %vm542, %v735, 0.0
        %v739 = vsel %vm542, %v737, 0.0
        %v740 = vstv %s310
        %v741 = vmul.f32 %v740, %v738
        %v742 = vmul.f32 %v740, %v739
        %v743 = vadd.f32 %v722, %v741
        %v744 = vadd.f32 %v723, %v742
        %v745 = vstv %s385
        %v746 = vmul.f32 %v745, %v738
        %v747 = vmul.f32 %v745, %v739
        %v748 = vadd.f32 %v727, %v746
        %v749 = vadd.f32 %v728, %v747
        %v750 = vstv %s460
        %v751 = vmul.f32 %v750, %v738
        %v752 = vmul.f32 %v750, %v739
        %v753 = vadd.f32 %v732, %v751
        %v754 = vadd.f32 %v733, %v752
        %755 = vrot.lane.b32.xlu0 %v287, 2
        %v756 = vpop.permute.xlu0 %755
        %757 = vrot.lane.b32.xlu0 %v288, 2
        %v758 = vpop.permute.xlu0 %757
        %v759 = vsel %vm533, %v756, 0.0
        %v760 = vsel %vm533, %v758, 0.0
        %v761 = vstv %s311
        %v762 = vmul.f32 %v761, %v759
        %v763 = vmul.f32 %v761, %v760
        %v764 = vadd.f32 %v743, %v762
        %v765 = vadd.f32 %v744, %v763
        %v766 = vstv %s386
        %v767 = vmul.f32 %v766, %v759
        %v768 = vmul.f32 %v766, %v760
        %v769 = vadd.f32 %v748, %v767
        %v770 = vadd.f32 %v749, %v768
        %v771 = vstv %s461
        %v772 = vmul.f32 %v771, %v759
        %v773 = vmul.f32 %v771, %v760
        %v774 = vadd.f32 %v753, %v772
        %v775 = vadd.f32 %v754, %v773
        %776 = vrot.lane.b32.xlu0 %v287, 1
        %v777 = vpop.permute.xlu0 %776
        %778 = vrot.lane.b32.xlu0 %v288, 1
        %v779 = vpop.permute.xlu0 %778
        %v780 = vsel %vm536, %v777, 0.0
        %v781 = vsel %vm536, %v779, 0.0
        %v782 = vstv %s312
        %v783 = vmul.f32 %v782, %v780
        %v784 = vmul.f32 %v782, %v781
        %v785 = vadd.f32 %v764, %v783
        %v786 = vadd.f32 %v765, %v784
        %v787 = vstv %s387
        %v788 = vmul.f32 %v787, %v780
        %v789 = vmul.f32 %v787, %v781
        %v790 = vadd.f32 %v769, %v788
        %v791 = vadd.f32 %v770, %v789
        %v792 = vstv %s462
        %v793 = vmul.f32 %v792, %v780
        %v794 = vmul.f32 %v792, %v781
        %v795 = vadd.f32 %v774, %v793
        %v796 = vadd.f32 %v775, %v794
        %v797 = vstv %s313
        %v798 = vmul.f32 %v797, %v287
        %v799 = vmul.f32 %v797, %v288
        %v800 = vadd.f32 %v785, %v798
        %v801 = vadd.f32 %v786, %v799
        %v802 = vstv %s388
        %v803 = vmul.f32 %v802, %v287
        %v804 = vmul.f32 %v802, %v288
        %v805 = vadd.f32 %v790, %v803
        %v806 = vadd.f32 %v791, %v804
        %v807 = vstv %s463
        %v808 = vmul.f32 %v807, %v287
        %v809 = vmul.f32 %v807, %v288
        %v810 = vadd.f32 %v795, %v808
        %v811 = vadd.f32 %v796, %v809
        %812 = vrot.lane.b32.xlu0 %v287, 127
        %v813 = vpop.permute.xlu0 %812
        %814 = vrot.lane.b32.xlu0 %v288, 127
        %v815 = vpop.permute.xlu0 %814
        %v816 = vsel %vm539, %v813, 0.0
        %v817 = vsel %vm539, %v815, 0.0
        %v818 = vstv %s314
        %v819 = vmul.f32 %v818, %v816
        %v820 = vmul.f32 %v818, %v817
        %v821 = vadd.f32 %v800, %v819
        %v822 = vadd.f32 %v801, %v820
        %v823 = vstv %s389
        %v824 = vmul.f32 %v823, %v816
        %v825 = vmul.f32 %v823, %v817
        %v826 = vadd.f32 %v805, %v824
        %v827 = vadd.f32 %v806, %v825
        %v828 = vstv %s464
        %v829 = vmul.f32 %v828, %v816
        %v830 = vmul.f32 %v828, %v817
        %v831 = vadd.f32 %v810, %v829
        %v832 = vadd.f32 %v811, %v830
        %833 = vrot.lane.b32.xlu0 %v287, 126
        %v834 = vpop.permute.xlu0 %833
        %835 = vrot.lane.b32.xlu0 %v288, 126
        %v836 = vpop.permute.xlu0 %835
        %v837 = vsel %vm542, %v834, 0.0
        %v838 = vsel %vm542, %v836, 0.0
        %v839 = vstv %s315
        %v840 = vmul.f32 %v839, %v837
        %v841 = vmul.f32 %v839, %v838
        %v842 = vadd.f32 %v821, %v840
        %v843 = vadd.f32 %v822, %v841
        %v844 = vstv %s390
        %v845 = vmul.f32 %v844, %v837
        %v846 = vmul.f32 %v844, %v838
        %v847 = vadd.f32 %v826, %v845
        %v848 = vadd.f32 %v827, %v846
        %v849 = vstv %s465
        %v850 = vmul.f32 %v849, %v837
        %v851 = vmul.f32 %v849, %v838
        %v852 = vadd.f32 %v831, %v850
        %v853 = vadd.f32 %v832, %v851
        %v854 = vrot.slane %v287, 1
        %v855 = vrot.slane %v288, 1
        %vm856 = vcmp.lt.s32.totalorder %v527, 7
        %v857 = vsel %vm856, %v854, %v855
        %v858 = vsel %vm856, %v855, %v854
        %v859 = vsel %vm537, %v857, 0.0
        %v860 = vsel %vm538, %v858, 0.0
        %861 = vrot.lane.b32.xlu0 %v859, 2
        %v862 = vpop.permute.xlu0 %861
        %863 = vrot.lane.b32.xlu0 %v860, 2
        %v864 = vpop.permute.xlu0 %863
        %v865 = vsel %vm533, %v862, 0.0
        %v866 = vsel %vm533, %v864, 0.0
        %v867 = vstv %s316
        %v868 = vmul.f32 %v867, %v865
        %v869 = vmul.f32 %v867, %v866
        %v870 = vadd.f32 %v842, %v868
        %v871 = vadd.f32 %v843, %v869
        %v872 = vstv %s391
        %v873 = vmul.f32 %v872, %v865
        %v874 = vmul.f32 %v872, %v866
        %v875 = vadd.f32 %v847, %v873
        %v876 = vadd.f32 %v848, %v874
        %v877 = vstv %s466
        %v878 = vmul.f32 %v877, %v865
        %v879 = vmul.f32 %v877, %v866
        %v880 = vadd.f32 %v852, %v878
        %v881 = vadd.f32 %v853, %v879
        %882 = vrot.lane.b32.xlu0 %v859, 1
        %v883 = vpop.permute.xlu0 %882
        %884 = vrot.lane.b32.xlu0 %v860, 1
        %v885 = vpop.permute.xlu0 %884
        %v886 = vsel %vm536, %v883, 0.0
        %v887 = vsel %vm536, %v885, 0.0
        %v888 = vstv %s317
        %v889 = vmul.f32 %v888, %v886
        %v890 = vmul.f32 %v888, %v887
        %v891 = vadd.f32 %v870, %v889
        %v892 = vadd.f32 %v871, %v890
        %v893 = vstv %s392
        %v894 = vmul.f32 %v893, %v886
        %v895 = vmul.f32 %v893, %v887
        %v896 = vadd.f32 %v875, %v894
        %v897 = vadd.f32 %v876, %v895
        %v898 = vstv %s467
        %v899 = vmul.f32 %v898, %v886
        %v900 = vmul.f32 %v898, %v887
        %v901 = vadd.f32 %v880, %v899
        %v902 = vadd.f32 %v881, %v900
        %v903 = vstv %s318
        %v904 = vmul.f32 %v903, %v859
        %v905 = vmul.f32 %v903, %v860
        %v906 = vadd.f32 %v891, %v904
        %v907 = vadd.f32 %v892, %v905
        %v908 = vstv %s393
        %v909 = vmul.f32 %v908, %v859
        %v910 = vmul.f32 %v908, %v860
        %v911 = vadd.f32 %v896, %v909
        %v912 = vadd.f32 %v897, %v910
        %v913 = vstv %s468
        %v914 = vmul.f32 %v913, %v859
        %v915 = vmul.f32 %v913, %v860
        %v916 = vadd.f32 %v901, %v914
        %v917 = vadd.f32 %v902, %v915
        %918 = vrot.lane.b32.xlu0 %v859, 127
        %v919 = vpop.permute.xlu0 %918
        %920 = vrot.lane.b32.xlu0 %v860, 127
        %v921 = vpop.permute.xlu0 %920
        %v922 = vsel %vm539, %v919, 0.0
        %v923 = vsel %vm539, %v921, 0.0
        %v924 = vstv %s319
        %v925 = vmul.f32 %v924, %v922
        %v926 = vmul.f32 %v924, %v923
        %v927 = vadd.f32 %v906, %v925
        %v928 = vadd.f32 %v907, %v926
        %v929 = vstv %s394
        %v930 = vmul.f32 %v929, %v922
        %v931 = vmul.f32 %v929, %v923
        %v932 = vadd.f32 %v911, %v930
        %v933 = vadd.f32 %v912, %v931
        %v934 = vstv %s469
        %v935 = vmul.f32 %v934, %v922
        %v936 = vmul.f32 %v934, %v923
        %v937 = vadd.f32 %v916, %v935
        %v938 = vadd.f32 %v917, %v936
        %939 = vrot.lane.b32.xlu0 %v859, 126
        %v940 = vpop.permute.xlu0 %939
        %941 = vrot.lane.b32.xlu0 %v860, 126
        %v942 = vpop.permute.xlu0 %941
        %v943 = vsel %vm542, %v940, 0.0
        %v944 = vsel %vm542, %v942, 0.0
        %v945 = vstv %s320
        %v946 = vmul.f32 %v945, %v943
        %v947 = vmul.f32 %v945, %v944
        %v948 = vadd.f32 %v927, %v946
        %v949 = vadd.f32 %v928, %v947
        %v950 = vstv %s395
        %v951 = vmul.f32 %v950, %v943
        %v952 = vmul.f32 %v950, %v944
        %v953 = vadd.f32 %v932, %v951
        %v954 = vadd.f32 %v933, %v952
        %v955 = vstv %s470
        %v956 = vmul.f32 %v955, %v943
        %v957 = vmul.f32 %v955, %v944
        %v958 = vadd.f32 %v937, %v956
        %v959 = vadd.f32 %v938, %v957
        %v960 = vrot.slane %v287, 2
        %v961 = vrot.slane %v288, 2
        %vm962 = vcmp.lt.s32.totalorder %v527, 6
        %v963 = vsel %vm962, %v960, %v961
        %v964 = vsel %vm962, %v961, %v960
        %v965 = vsel %vm540, %v963, 0.0
        %v966 = vsel %vm541, %v964, 0.0
        %967 = vrot.lane.b32.xlu0 %v965, 2
        %v968 = vpop.permute.xlu0 %967
        %969 = vrot.lane.b32.xlu0 %v966, 2
        %v970 = vpop.permute.xlu0 %969
        %v971 = vsel %vm533, %v968, 0.0
        %v972 = vsel %vm533, %v970, 0.0
        %v973 = vstv %s321
        %v974 = vmul.f32 %v973, %v971
        %v975 = vmul.f32 %v973, %v972
        %v976 = vadd.f32 %v948, %v974
        %v977 = vadd.f32 %v949, %v975
        %v978 = vstv %s396
        %v979 = vmul.f32 %v978, %v971
        %v980 = vmul.f32 %v978, %v972
        %v981 = vadd.f32 %v953, %v979
        %v982 = vadd.f32 %v954, %v980
        %v983 = vstv %s471
        %v984 = vmul.f32 %v983, %v971
        %v985 = vmul.f32 %v983, %v972
        %v986 = vadd.f32 %v958, %v984
        %v987 = vadd.f32 %v959, %v985
        %988 = vrot.lane.b32.xlu0 %v965, 1
        %v989 = vpop.permute.xlu0 %988
        %990 = vrot.lane.b32.xlu0 %v966, 1
        %v991 = vpop.permute.xlu0 %990
        %v992 = vsel %vm536, %v989, 0.0
        %v993 = vsel %vm536, %v991, 0.0
        %v994 = vstv %s322
        %v995 = vmul.f32 %v994, %v992
        %v996 = vmul.f32 %v994, %v993
        %v997 = vadd.f32 %v976, %v995
        %v998 = vadd.f32 %v977, %v996
        %v999 = vstv %s397
        %v1000 = vmul.f32 %v999, %v992
        %v1001 = vmul.f32 %v999, %v993
        %v1002 = vadd.f32 %v981, %v1000
        %v1003 = vadd.f32 %v982, %v1001
        %v1004 = vstv %s472
        %v1005 = vmul.f32 %v1004, %v992
        %v1006 = vmul.f32 %v1004, %v993
        %v1007 = vadd.f32 %v986, %v1005
        %v1008 = vadd.f32 %v987, %v1006
        %v1009 = vstv %s323
        %v1010 = vmul.f32 %v1009, %v965
        %v1011 = vmul.f32 %v1009, %v966
        %v1012 = vadd.f32 %v997, %v1010
        %v1013 = vadd.f32 %v998, %v1011
        %v1014 = vstv %s398
        %v1015 = vmul.f32 %v1014, %v965
        %v1016 = vmul.f32 %v1014, %v966
        %v1017 = vadd.f32 %v1002, %v1015
        %v1018 = vadd.f32 %v1003, %v1016
        %v1019 = vstv %s473
        %v1020 = vmul.f32 %v1019, %v965
        %v1021 = vmul.f32 %v1019, %v966
        %v1022 = vadd.f32 %v1007, %v1020
        %v1023 = vadd.f32 %v1008, %v1021
        %1024 = vrot.lane.b32.xlu0 %v965, 127
        %v1025 = vpop.permute.xlu0 %1024
        %1026 = vrot.lane.b32.xlu0 %v966, 127
        %v1027 = vpop.permute.xlu0 %1026
        %v1028 = vsel %vm539, %v1025, 0.0
        %v1029 = vsel %vm539, %v1027, 0.0
        %v1030 = vstv %s324
        %v1031 = vmul.f32 %v1030, %v1028
        %v1032 = vmul.f32 %v1030, %v1029
        %v1033 = vadd.f32 %v1012, %v1031
        %v1034 = vadd.f32 %v1013, %v1032
        %v1035 = vstv %s399
        %v1036 = vmul.f32 %v1035, %v1028
        %v1037 = vmul.f32 %v1035, %v1029
        %v1038 = vadd.f32 %v1017, %v1036
        %v1039 = vadd.f32 %v1018, %v1037
        %v1040 = vstv %s474
        %v1041 = vmul.f32 %v1040, %v1028
        %v1042 = vmul.f32 %v1040, %v1029
        %v1043 = vadd.f32 %v1022, %v1041
        %v1044 = vadd.f32 %v1023, %v1042
        %1045 = vrot.lane.b32.xlu0 %v965, 126
        %v1046 = vpop.permute.xlu0 %1045
        %1047 = vrot.lane.b32.xlu0 %v966, 126
        %v1048 = vpop.permute.xlu0 %1047
        %v1049 = vsel %vm542, %v1046, 0.0
        %v1050 = vsel %vm542, %v1048, 0.0
        %v1051 = vstv %s325
        %v1052 = vmul.f32 %v1051, %v1049
        %v1053 = vmul.f32 %v1051, %v1050
        %v1054 = vadd.f32 %v1033, %v1052
        %v1055 = vadd.f32 %v1034, %v1053
        %v1056 = vstv %s400
        %v1057 = vmul.f32 %v1056, %v1049
        %v1058 = vmul.f32 %v1056, %v1050
        %v1059 = vadd.f32 %v1038, %v1057
        %v1060 = vadd.f32 %v1039, %v1058
        %v1061 = vstv %s475
        %v1062 = vmul.f32 %v1061, %v1049
        %v1063 = vmul.f32 %v1061, %v1050
        %v1064 = vadd.f32 %v1043, %v1062
        %v1065 = vadd.f32 %v1044, %v1063
        %v1066 = vrot.slane %v293, 6
        %v1067 = vrot.slane %v294, 6
        %v1068 = vsel %vm545, %v1066, %v1067
        %v1069 = vsel %vm545, %v1067, %v1066
        %v1070 = vsel %vm531, %v1069, 0.0
        %v1071 = vsel %vm532, %v1068, 0.0
        %1072 = vrot.lane.b32.xlu0 %v1070, 2
        %v1073 = vpop.permute.xlu0 %1072
        %1074 = vrot.lane.b32.xlu0 %v1071, 2
        %v1075 = vpop.permute.xlu0 %1074
        %v1076 = vsel %vm533, %v1073, 0.0
        %v1077 = vsel %vm533, %v1075, 0.0
        %v1078 = vstv %s326
        %v1079 = vmul.f32 %v1078, %v1076
        %v1080 = vmul.f32 %v1078, %v1077
        %v1081 = vadd.f32 %v1054, %v1079
        %v1082 = vadd.f32 %v1055, %v1080
        %v1083 = vstv %s401
        %v1084 = vmul.f32 %v1083, %v1076
        %v1085 = vmul.f32 %v1083, %v1077
        %v1086 = vadd.f32 %v1059, %v1084
        %v1087 = vadd.f32 %v1060, %v1085
        %v1088 = vstv %s476
        %v1089 = vmul.f32 %v1088, %v1076
        %v1090 = vmul.f32 %v1088, %v1077
        %v1091 = vadd.f32 %v1064, %v1089
        %v1092 = vadd.f32 %v1065, %v1090
        %1093 = vrot.lane.b32.xlu0 %v1070, 1
        %v1094 = vpop.permute.xlu0 %1093
        %1095 = vrot.lane.b32.xlu0 %v1071, 1
        %v1096 = vpop.permute.xlu0 %1095
        %v1097 = vsel %vm536, %v1094, 0.0
        %v1098 = vsel %vm536, %v1096, 0.0
        %v1099 = vstv %s327
        %v1100 = vmul.f32 %v1099, %v1097
        %v1101 = vmul.f32 %v1099, %v1098
        %v1102 = vadd.f32 %v1081, %v1100
        %v1103 = vadd.f32 %v1082, %v1101
        %v1104 = vstv %s402
        %v1105 = vmul.f32 %v1104, %v1097
        %v1106 = vmul.f32 %v1104, %v1098
        %v1107 = vadd.f32 %v1086, %v1105
        %v1108 = vadd.f32 %v1087, %v1106
        %v1109 = vstv %s477
        %v1110 = vmul.f32 %v1109, %v1097
        %v1111 = vmul.f32 %v1109, %v1098
        %v1112 = vadd.f32 %v1091, %v1110
        %v1113 = vadd.f32 %v1092, %v1111
        %v1114 = vstv %s328
        %v1115 = vmul.f32 %v1114, %v1070
        %v1116 = vmul.f32 %v1114, %v1071
        %v1117 = vadd.f32 %v1102, %v1115
        %v1118 = vadd.f32 %v1103, %v1116
        %v1119 = vstv %s403
        %v1120 = vmul.f32 %v1119, %v1070
        %v1121 = vmul.f32 %v1119, %v1071
        %v1122 = vadd.f32 %v1107, %v1120
        %v1123 = vadd.f32 %v1108, %v1121
        %v1124 = vstv %s478
        %v1125 = vmul.f32 %v1124, %v1070
        %v1126 = vmul.f32 %v1124, %v1071
        %v1127 = vadd.f32 %v1112, %v1125
        %v1128 = vadd.f32 %v1113, %v1126
        %1129 = vrot.lane.b32.xlu0 %v1070, 127
        %v1130 = vpop.permute.xlu0 %1129
        %1131 = vrot.lane.b32.xlu0 %v1071, 127
        %v1132 = vpop.permute.xlu0 %1131
        %v1133 = vsel %vm539, %v1130, 0.0
        %v1134 = vsel %vm539, %v1132, 0.0
        %v1135 = vstv %s329
        %v1136 = vmul.f32 %v1135, %v1133
        %v1137 = vmul.f32 %v1135, %v1134
        %v1138 = vadd.f32 %v1117, %v1136
        %v1139 = vadd.f32 %v1118, %v1137
        %v1140 = vstv %s404
        %v1141 = vmul.f32 %v1140, %v1133
        %v1142 = vmul.f32 %v1140, %v1134
        %v1143 = vadd.f32 %v1122, %v1141
        %v1144 = vadd.f32 %v1123, %v1142
        %v1145 = vstv %s479
        %v1146 = vmul.f32 %v1145, %v1133
        %v1147 = vmul.f32 %v1145, %v1134
        %v1148 = vadd.f32 %v1127, %v1146
        %v1149 = vadd.f32 %v1128, %v1147
        %1150 = vrot.lane.b32.xlu0 %v1070, 126
        %v1151 = vpop.permute.xlu0 %1150
        %1152 = vrot.lane.b32.xlu0 %v1071, 126
        %v1153 = vpop.permute.xlu0 %1152
        %v1154 = vsel %vm542, %v1151, 0.0
        %v1155 = vsel %vm542, %v1153, 0.0
        %v1156 = vstv %s330
        %v1157 = vmul.f32 %v1156, %v1154
        %v1158 = vmul.f32 %v1156, %v1155
        %v1159 = vadd.f32 %v1138, %v1157
        %v1160 = vadd.f32 %v1139, %v1158
        %v1161 = vstv %s405
        %v1162 = vmul.f32 %v1161, %v1154
        %v1163 = vmul.f32 %v1161, %v1155
        %v1164 = vadd.f32 %v1143, %v1162
        %v1165 = vadd.f32 %v1144, %v1163
        %v1166 = vstv %s480
        %v1167 = vmul.f32 %v1166, %v1154
        %v1168 = vmul.f32 %v1166, %v1155
        %v1169 = vadd.f32 %v1148, %v1167
        %v1170 = vadd.f32 %v1149, %v1168
        %v1171 = vrot.slane %v293, 7
        %v1172 = vrot.slane %v294, 7
        %v1173 = vsel %vm651, %v1171, %v1172
        %v1174 = vsel %vm651, %v1172, %v1171
        %v1175 = vsel %vm534, %v1174, 0.0
        %v1176 = vsel %vm535, %v1173, 0.0
        %1177 = vrot.lane.b32.xlu0 %v1175, 2
        %v1178 = vpop.permute.xlu0 %1177
        %1179 = vrot.lane.b32.xlu0 %v1176, 2
        %v1180 = vpop.permute.xlu0 %1179
        %v1181 = vsel %vm533, %v1178, 0.0
        %v1182 = vsel %vm533, %v1180, 0.0
        %v1183 = vstv %s331
        %v1184 = vmul.f32 %v1183, %v1181
        %v1185 = vmul.f32 %v1183, %v1182
        %v1186 = vadd.f32 %v1159, %v1184
        %v1187 = vadd.f32 %v1160, %v1185
        %v1188 = vstv %s406
        %v1189 = vmul.f32 %v1188, %v1181
        %v1190 = vmul.f32 %v1188, %v1182
        %v1191 = vadd.f32 %v1164, %v1189
        %v1192 = vadd.f32 %v1165, %v1190
        %v1193 = vstv %s481
        %v1194 = vmul.f32 %v1193, %v1181
        %v1195 = vmul.f32 %v1193, %v1182
        %v1196 = vadd.f32 %v1169, %v1194
        %v1197 = vadd.f32 %v1170, %v1195
        %1198 = vrot.lane.b32.xlu0 %v1175, 1
        %v1199 = vpop.permute.xlu0 %1198
        %1200 = vrot.lane.b32.xlu0 %v1176, 1
        %v1201 = vpop.permute.xlu0 %1200
        %v1202 = vsel %vm536, %v1199, 0.0
        %v1203 = vsel %vm536, %v1201, 0.0
        %v1204 = vstv %s332
        %v1205 = vmul.f32 %v1204, %v1202
        %v1206 = vmul.f32 %v1204, %v1203
        %v1207 = vadd.f32 %v1186, %v1205
        %v1208 = vadd.f32 %v1187, %v1206
        %v1209 = vstv %s407
        %v1210 = vmul.f32 %v1209, %v1202
        %v1211 = vmul.f32 %v1209, %v1203
        %v1212 = vadd.f32 %v1191, %v1210
        %v1213 = vadd.f32 %v1192, %v1211
        %v1214 = vstv %s482
        %v1215 = vmul.f32 %v1214, %v1202
        %v1216 = vmul.f32 %v1214, %v1203
        %v1217 = vadd.f32 %v1196, %v1215
        %v1218 = vadd.f32 %v1197, %v1216
        %v1219 = vstv %s333
        %v1220 = vmul.f32 %v1219, %v1175
        %v1221 = vmul.f32 %v1219, %v1176
        %v1222 = vadd.f32 %v1207, %v1220
        %v1223 = vadd.f32 %v1208, %v1221
        %v1224 = vstv %s408
        %v1225 = vmul.f32 %v1224, %v1175
        %v1226 = vmul.f32 %v1224, %v1176
        %v1227 = vadd.f32 %v1212, %v1225
        %v1228 = vadd.f32 %v1213, %v1226
        %v1229 = vstv %s483
        %v1230 = vmul.f32 %v1229, %v1175
        %v1231 = vmul.f32 %v1229, %v1176
        %v1232 = vadd.f32 %v1217, %v1230
        %v1233 = vadd.f32 %v1218, %v1231
        %1234 = vrot.lane.b32.xlu0 %v1175, 127
        %v1235 = vpop.permute.xlu0 %1234
        %1236 = vrot.lane.b32.xlu0 %v1176, 127
        %v1237 = vpop.permute.xlu0 %1236
        %v1238 = vsel %vm539, %v1235, 0.0
        %v1239 = vsel %vm539, %v1237, 0.0
        %v1240 = vstv %s334
        %v1241 = vmul.f32 %v1240, %v1238
        %v1242 = vmul.f32 %v1240, %v1239
        %v1243 = vadd.f32 %v1222, %v1241
        %v1244 = vadd.f32 %v1223, %v1242
        %v1245 = vstv %s409
        %v1246 = vmul.f32 %v1245, %v1238
        %v1247 = vmul.f32 %v1245, %v1239
        %v1248 = vadd.f32 %v1227, %v1246
        %v1249 = vadd.f32 %v1228, %v1247
        %v1250 = vstv %s484
        %v1251 = vmul.f32 %v1250, %v1238
        %v1252 = vmul.f32 %v1250, %v1239
        %v1253 = vadd.f32 %v1232, %v1251
        %v1254 = vadd.f32 %v1233, %v1252
        %1255 = vrot.lane.b32.xlu0 %v1175, 126
        %v1256 = vpop.permute.xlu0 %1255
        %1257 = vrot.lane.b32.xlu0 %v1176, 126
        %v1258 = vpop.permute.xlu0 %1257
        %v1259 = vsel %vm542, %v1256, 0.0
        %v1260 = vsel %vm542, %v1258, 0.0
        %v1261 = vstv %s335
        %v1262 = vmul.f32 %v1261, %v1259
        %v1263 = vmul.f32 %v1261, %v1260
        %v1264 = vadd.f32 %v1243, %v1262
        %v1265 = vadd.f32 %v1244, %v1263
        %v1266 = vstv %s410
        %v1267 = vmul.f32 %v1266, %v1259
        %v1268 = vmul.f32 %v1266, %v1260
        %v1269 = vadd.f32 %v1248, %v1267
        %v1270 = vadd.f32 %v1249, %v1268
        %v1271 = vstv %s485
        %v1272 = vmul.f32 %v1271, %v1259
        %v1273 = vmul.f32 %v1271, %v1260
        %v1274 = vadd.f32 %v1253, %v1272
        %v1275 = vadd.f32 %v1254, %v1273
        %1276 = vrot.lane.b32.xlu0 %v293, 2
        %v1277 = vpop.permute.xlu0 %1276
        %1278 = vrot.lane.b32.xlu0 %v294, 2
        %v1279 = vpop.permute.xlu0 %1278
        %v1280 = vsel %vm533, %v1277, 0.0
        %v1281 = vsel %vm533, %v1279, 0.0
        %v1282 = vstv %s336
        %v1283 = vmul.f32 %v1282, %v1280
        %v1284 = vmul.f32 %v1282, %v1281
        %v1285 = vadd.f32 %v1264, %v1283
        %v1286 = vadd.f32 %v1265, %v1284
        %v1287 = vstv %s411
        %v1288 = vmul.f32 %v1287, %v1280
        %v1289 = vmul.f32 %v1287, %v1281
        %v1290 = vadd.f32 %v1269, %v1288
        %v1291 = vadd.f32 %v1270, %v1289
        %v1292 = vstv %s486
        %v1293 = vmul.f32 %v1292, %v1280
        %v1294 = vmul.f32 %v1292, %v1281
        %v1295 = vadd.f32 %v1274, %v1293
        %v1296 = vadd.f32 %v1275, %v1294
        %1297 = vrot.lane.b32.xlu0 %v293, 1
        %v1298 = vpop.permute.xlu0 %1297
        %1299 = vrot.lane.b32.xlu0 %v294, 1
        %v1300 = vpop.permute.xlu0 %1299
        %v1301 = vsel %vm536, %v1298, 0.0
        %v1302 = vsel %vm536, %v1300, 0.0
        %v1303 = vstv %s337
        %v1304 = vmul.f32 %v1303, %v1301
        %v1305 = vmul.f32 %v1303, %v1302
        %v1306 = vadd.f32 %v1285, %v1304
        %v1307 = vadd.f32 %v1286, %v1305
        %v1308 = vstv %s412
        %v1309 = vmul.f32 %v1308, %v1301
        %v1310 = vmul.f32 %v1308, %v1302
        %v1311 = vadd.f32 %v1290, %v1309
        %v1312 = vadd.f32 %v1291, %v1310
        %v1313 = vstv %s487
        %v1314 = vmul.f32 %v1313, %v1301
        %v1315 = vmul.f32 %v1313, %v1302
        %v1316 = vadd.f32 %v1295, %v1314
        %v1317 = vadd.f32 %v1296, %v1315
        %v1318 = vstv %s338
        %v1319 = vmul.f32 %v1318, %v293
        %v1320 = vmul.f32 %v1318, %v294
        %v1321 = vadd.f32 %v1306, %v1319
        %v1322 = vadd.f32 %v1307, %v1320
        %v1323 = vstv %s413
        %v1324 = vmul.f32 %v1323, %v293
        %v1325 = vmul.f32 %v1323, %v294
        %v1326 = vadd.f32 %v1311, %v1324
        %v1327 = vadd.f32 %v1312, %v1325
        %v1328 = vstv %s488
        %v1329 = vmul.f32 %v1328, %v293
        %v1330 = vmul.f32 %v1328, %v294
        %v1331 = vadd.f32 %v1316, %v1329
        %v1332 = vadd.f32 %v1317, %v1330
        %1333 = vrot.lane.b32.xlu0 %v293, 127
        %v1334 = vpop.permute.xlu0 %1333
        %1335 = vrot.lane.b32.xlu0 %v294, 127
        %v1336 = vpop.permute.xlu0 %1335
        %v1337 = vsel %vm539, %v1334, 0.0
        %v1338 = vsel %vm539, %v1336, 0.0
        %v1339 = vstv %s339
        %v1340 = vmul.f32 %v1339, %v1337
        %v1341 = vmul.f32 %v1339, %v1338
        %v1342 = vadd.f32 %v1321, %v1340
        %v1343 = vadd.f32 %v1322, %v1341
        %v1344 = vstv %s414
        %v1345 = vmul.f32 %v1344, %v1337
        %v1346 = vmul.f32 %v1344, %v1338
        %v1347 = vadd.f32 %v1326, %v1345
        %v1348 = vadd.f32 %v1327, %v1346
        %v1349 = vstv %s489
        %v1350 = vmul.f32 %v1349, %v1337
        %v1351 = vmul.f32 %v1349, %v1338
        %v1352 = vadd.f32 %v1331, %v1350
        %v1353 = vadd.f32 %v1332, %v1351
        %1354 = vrot.lane.b32.xlu0 %v293, 126
        %v1355 = vpop.permute.xlu0 %1354
        %1356 = vrot.lane.b32.xlu0 %v294, 126
        %v1357 = vpop.permute.xlu0 %1356
        %v1358 = vsel %vm542, %v1355, 0.0
        %v1359 = vsel %vm542, %v1357, 0.0
        %v1360 = vstv %s340
        %v1361 = vmul.f32 %v1360, %v1358
        %v1362 = vmul.f32 %v1360, %v1359
        %v1363 = vadd.f32 %v1342, %v1361
        %v1364 = vadd.f32 %v1343, %v1362
        %v1365 = vstv %s415
        %v1366 = vmul.f32 %v1365, %v1358
        %v1367 = vmul.f32 %v1365, %v1359
        %v1368 = vadd.f32 %v1347, %v1366
        %v1369 = vadd.f32 %v1348, %v1367
        %v1370 = vstv %s490
        %v1371 = vmul.f32 %v1370, %v1358
        %v1372 = vmul.f32 %v1370, %v1359
        %v1373 = vadd.f32 %v1352, %v1371
        %v1374 = vadd.f32 %v1353, %v1372
        %v1375 = vrot.slane %v293, 1
        %v1376 = vrot.slane %v294, 1
        %v1377 = vsel %vm856, %v1375, %v1376
        %v1378 = vsel %vm856, %v1376, %v1375
        %v1379 = vsel %vm537, %v1377, 0.0
        %v1380 = vsel %vm538, %v1378, 0.0
        %1381 = vrot.lane.b32.xlu0 %v1379, 2
        %v1382 = vpop.permute.xlu0 %1381
        %1383 = vrot.lane.b32.xlu0 %v1380, 2
        %v1384 = vpop.permute.xlu0 %1383
        %v1385 = vsel %vm533, %v1382, 0.0
        %v1386 = vsel %vm533, %v1384, 0.0
        %v1387 = vstv %s341
        %v1388 = vmul.f32 %v1387, %v1385
        %v1389 = vmul.f32 %v1387, %v1386
        %v1390 = vadd.f32 %v1363, %v1388
        %v1391 = vadd.f32 %v1364, %v1389
        %v1392 = vstv %s416
        %v1393 = vmul.f32 %v1392, %v1385
        %v1394 = vmul.f32 %v1392, %v1386
        %v1395 = vadd.f32 %v1368, %v1393
        %v1396 = vadd.f32 %v1369, %v1394
        %v1397 = vstv %s491
        %v1398 = vmul.f32 %v1397, %v1385
        %v1399 = vmul.f32 %v1397, %v1386
        %v1400 = vadd.f32 %v1373, %v1398
        %v1401 = vadd.f32 %v1374, %v1399
        %1402 = vrot.lane.b32.xlu0 %v1379, 1
        %v1403 = vpop.permute.xlu0 %1402
        %1404 = vrot.lane.b32.xlu0 %v1380, 1
        %v1405 = vpop.permute.xlu0 %1404
        %v1406 = vsel %vm536, %v1403, 0.0
        %v1407 = vsel %vm536, %v1405, 0.0
        %v1408 = vstv %s342
        %v1409 = vmul.f32 %v1408, %v1406
        %v1410 = vmul.f32 %v1408, %v1407
        %v1411 = vadd.f32 %v1390, %v1409
        %v1412 = vadd.f32 %v1391, %v1410
        %v1413 = vstv %s417
        %v1414 = vmul.f32 %v1413, %v1406
        %v1415 = vmul.f32 %v1413, %v1407
        %v1416 = vadd.f32 %v1395, %v1414
        %v1417 = vadd.f32 %v1396, %v1415
        %v1418 = vstv %s492
        %v1419 = vmul.f32 %v1418, %v1406
        %v1420 = vmul.f32 %v1418, %v1407
        %v1421 = vadd.f32 %v1400, %v1419
        %v1422 = vadd.f32 %v1401, %v1420
        %v1423 = vstv %s343
        %v1424 = vmul.f32 %v1423, %v1379
        %v1425 = vmul.f32 %v1423, %v1380
        %v1426 = vadd.f32 %v1411, %v1424
        %v1427 = vadd.f32 %v1412, %v1425
        %v1428 = vstv %s418
        %v1429 = vmul.f32 %v1428, %v1379
        %v1430 = vmul.f32 %v1428, %v1380
        %v1431 = vadd.f32 %v1416, %v1429
        %v1432 = vadd.f32 %v1417, %v1430
        %v1433 = vstv %s493
        %v1434 = vmul.f32 %v1433, %v1379
        %v1435 = vmul.f32 %v1433, %v1380
        %v1436 = vadd.f32 %v1421, %v1434
        %v1437 = vadd.f32 %v1422, %v1435
        %1438 = vrot.lane.b32.xlu0 %v1379, 127
        %v1439 = vpop.permute.xlu0 %1438
        %1440 = vrot.lane.b32.xlu0 %v1380, 127
        %v1441 = vpop.permute.xlu0 %1440
        %v1442 = vsel %vm539, %v1439, 0.0
        %v1443 = vsel %vm539, %v1441, 0.0
        %v1444 = vstv %s344
        %v1445 = vmul.f32 %v1444, %v1442
        %v1446 = vmul.f32 %v1444, %v1443
        %v1447 = vadd.f32 %v1426, %v1445
        %v1448 = vadd.f32 %v1427, %v1446
        %v1449 = vstv %s419
        %v1450 = vmul.f32 %v1449, %v1442
        %v1451 = vmul.f32 %v1449, %v1443
        %v1452 = vadd.f32 %v1431, %v1450
        %v1453 = vadd.f32 %v1432, %v1451
        %v1454 = vstv %s494
        %v1455 = vmul.f32 %v1454, %v1442
        %v1456 = vmul.f32 %v1454, %v1443
        %v1457 = vadd.f32 %v1436, %v1455
        %v1458 = vadd.f32 %v1437, %v1456
        %1459 = vrot.lane.b32.xlu0 %v1379, 126
        %v1460 = vpop.permute.xlu0 %1459
        %1461 = vrot.lane.b32.xlu0 %v1380, 126
        %v1462 = vpop.permute.xlu0 %1461
        %v1463 = vsel %vm542, %v1460, 0.0
        %v1464 = vsel %vm542, %v1462, 0.0
        %v1465 = vstv %s345
        %v1466 = vmul.f32 %v1465, %v1463
        %v1467 = vmul.f32 %v1465, %v1464
        %v1468 = vadd.f32 %v1447, %v1466
        %v1469 = vadd.f32 %v1448, %v1467
        %v1470 = vstv %s420
        %v1471 = vmul.f32 %v1470, %v1463
        %v1472 = vmul.f32 %v1470, %v1464
        %v1473 = vadd.f32 %v1452, %v1471
        %v1474 = vadd.f32 %v1453, %v1472
        %v1475 = vstv %s495
        %v1476 = vmul.f32 %v1475, %v1463
        %v1477 = vmul.f32 %v1475, %v1464
        %v1478 = vadd.f32 %v1457, %v1476
        %v1479 = vadd.f32 %v1458, %v1477
        %v1480 = vrot.slane %v293, 2
        %v1481 = vrot.slane %v294, 2
        %v1482 = vsel %vm962, %v1480, %v1481
        %v1483 = vsel %vm962, %v1481, %v1480
        %v1484 = vsel %vm540, %v1482, 0.0
        %v1485 = vsel %vm541, %v1483, 0.0
        %1486 = vrot.lane.b32.xlu0 %v1484, 2
        %v1487 = vpop.permute.xlu0 %1486
        %1488 = vrot.lane.b32.xlu0 %v1485, 2
        %v1489 = vpop.permute.xlu0 %1488
        %v1490 = vsel %vm533, %v1487, 0.0
        %v1491 = vsel %vm533, %v1489, 0.0
        %v1492 = vstv %s346
        %v1493 = vmul.f32 %v1492, %v1490
        %v1494 = vmul.f32 %v1492, %v1491
        %v1495 = vadd.f32 %v1468, %v1493
        %v1496 = vadd.f32 %v1469, %v1494
        %v1497 = vstv %s421
        %v1498 = vmul.f32 %v1497, %v1490
        %v1499 = vmul.f32 %v1497, %v1491
        %v1500 = vadd.f32 %v1473, %v1498
        %v1501 = vadd.f32 %v1474, %v1499
        %v1502 = vstv %s496
        %v1503 = vmul.f32 %v1502, %v1490
        %v1504 = vmul.f32 %v1502, %v1491
        %v1505 = vadd.f32 %v1478, %v1503
        %v1506 = vadd.f32 %v1479, %v1504
        %1507 = vrot.lane.b32.xlu0 %v1484, 1
        %v1508 = vpop.permute.xlu0 %1507
        %1509 = vrot.lane.b32.xlu0 %v1485, 1
        %v1510 = vpop.permute.xlu0 %1509
        %v1511 = vsel %vm536, %v1508, 0.0
        %v1512 = vsel %vm536, %v1510, 0.0
        %v1513 = vstv %s347
        %v1514 = vmul.f32 %v1513, %v1511
        %v1515 = vmul.f32 %v1513, %v1512
        %v1516 = vadd.f32 %v1495, %v1514
        %v1517 = vadd.f32 %v1496, %v1515
        %v1518 = vstv %s422
        %v1519 = vmul.f32 %v1518, %v1511
        %v1520 = vmul.f32 %v1518, %v1512
        %v1521 = vadd.f32 %v1500, %v1519
        %v1522 = vadd.f32 %v1501, %v1520
        %v1523 = vstv %s497
        %v1524 = vmul.f32 %v1523, %v1511
        %v1525 = vmul.f32 %v1523, %v1512
        %v1526 = vadd.f32 %v1505, %v1524
        %v1527 = vadd.f32 %v1506, %v1525
        %v1528 = vstv %s348
        %v1529 = vmul.f32 %v1528, %v1484
        %v1530 = vmul.f32 %v1528, %v1485
        %v1531 = vadd.f32 %v1516, %v1529
        %v1532 = vadd.f32 %v1517, %v1530
        %v1533 = vstv %s423
        %v1534 = vmul.f32 %v1533, %v1484
        %v1535 = vmul.f32 %v1533, %v1485
        %v1536 = vadd.f32 %v1521, %v1534
        %v1537 = vadd.f32 %v1522, %v1535
        %v1538 = vstv %s498
        %v1539 = vmul.f32 %v1538, %v1484
        %v1540 = vmul.f32 %v1538, %v1485
        %v1541 = vadd.f32 %v1526, %v1539
        %v1542 = vadd.f32 %v1527, %v1540
        %1543 = vrot.lane.b32.xlu0 %v1484, 127
        %v1544 = vpop.permute.xlu0 %1543
        %1545 = vrot.lane.b32.xlu0 %v1485, 127
        %v1546 = vpop.permute.xlu0 %1545
        %v1547 = vsel %vm539, %v1544, 0.0
        %v1548 = vsel %vm539, %v1546, 0.0
        %v1549 = vstv %s349
        %v1550 = vmul.f32 %v1549, %v1547
        %v1551 = vmul.f32 %v1549, %v1548
        %v1552 = vadd.f32 %v1531, %v1550
        %v1553 = vadd.f32 %v1532, %v1551
        %v1554 = vstv %s424
        %v1555 = vmul.f32 %v1554, %v1547
        %v1556 = vmul.f32 %v1554, %v1548
        %v1557 = vadd.f32 %v1536, %v1555
        %v1558 = vadd.f32 %v1537, %v1556
        %v1559 = vstv %s499
        %v1560 = vmul.f32 %v1559, %v1547
        %v1561 = vmul.f32 %v1559, %v1548
        %v1562 = vadd.f32 %v1541, %v1560
        %v1563 = vadd.f32 %v1542, %v1561
        %1564 = vrot.lane.b32.xlu0 %v1484, 126
        %v1565 = vpop.permute.xlu0 %1564
        %1566 = vrot.lane.b32.xlu0 %v1485, 126
        %v1567 = vpop.permute.xlu0 %1566
        %v1568 = vsel %vm542, %v1565, 0.0
        %v1569 = vsel %vm542, %v1567, 0.0
        %v1570 = vstv %s350
        %v1571 = vmul.f32 %v1570, %v1568
        %v1572 = vmul.f32 %v1570, %v1569
        %v1573 = vadd.f32 %v1552, %v1571
        %v1574 = vadd.f32 %v1553, %v1572
        %v1575 = vstv %s425
        %v1576 = vmul.f32 %v1575, %v1568
        %v1577 = vmul.f32 %v1575, %v1569
        %v1578 = vadd.f32 %v1557, %v1576
        %v1579 = vadd.f32 %v1558, %v1577
        %v1580 = vstv %s500
        %v1581 = vmul.f32 %v1580, %v1568
        %v1582 = vmul.f32 %v1580, %v1569
        %v1583 = vadd.f32 %v1562, %v1581
        %v1584 = vadd.f32 %v1563, %v1582
        %v1585 = vrot.slane %v299, 6
        %v1586 = vrot.slane %v300, 6
        %v1587 = vsel %vm545, %v1585, %v1586
        %v1588 = vsel %vm545, %v1586, %v1585
        %v1589 = vsel %vm531, %v1588, 0.0
        %v1590 = vsel %vm532, %v1587, 0.0
        %1591 = vrot.lane.b32.xlu0 %v1589, 2
        %v1592 = vpop.permute.xlu0 %1591
        %1593 = vrot.lane.b32.xlu0 %v1590, 2
        %v1594 = vpop.permute.xlu0 %1593
        %v1595 = vsel %vm533, %v1592, 0.0
        %v1596 = vsel %vm533, %v1594, 0.0
        %v1597 = vstv %s351
        %v1598 = vmul.f32 %v1597, %v1595
        %v1599 = vmul.f32 %v1597, %v1596
        %v1600 = vadd.f32 %v1573, %v1598
        %v1601 = vadd.f32 %v1574, %v1599
        %v1602 = vstv %s426
        %v1603 = vmul.f32 %v1602, %v1595
        %v1604 = vmul.f32 %v1602, %v1596
        %v1605 = vadd.f32 %v1578, %v1603
        %v1606 = vadd.f32 %v1579, %v1604
        %v1607 = vstv %s501
        %v1608 = vmul.f32 %v1607, %v1595
        %v1609 = vmul.f32 %v1607, %v1596
        %v1610 = vadd.f32 %v1583, %v1608
        %v1611 = vadd.f32 %v1584, %v1609
        %1612 = vrot.lane.b32.xlu0 %v1589, 1
        %v1613 = vpop.permute.xlu0 %1612
        %1614 = vrot.lane.b32.xlu0 %v1590, 1
        %v1615 = vpop.permute.xlu0 %1614
        %v1616 = vsel %vm536, %v1613, 0.0
        %v1617 = vsel %vm536, %v1615, 0.0
        %v1618 = vstv %s352
        %v1619 = vmul.f32 %v1618, %v1616
        %v1620 = vmul.f32 %v1618, %v1617
        %v1621 = vadd.f32 %v1600, %v1619
        %v1622 = vadd.f32 %v1601, %v1620
        %v1623 = vstv %s427
        %v1624 = vmul.f32 %v1623, %v1616
        %v1625 = vmul.f32 %v1623, %v1617
        %v1626 = vadd.f32 %v1605, %v1624
        %v1627 = vadd.f32 %v1606, %v1625
        %v1628 = vstv %s502
        %v1629 = vmul.f32 %v1628, %v1616
        %v1630 = vmul.f32 %v1628, %v1617
        %v1631 = vadd.f32 %v1610, %v1629
        %v1632 = vadd.f32 %v1611, %v1630
        %v1633 = vstv %s353
        %v1634 = vmul.f32 %v1633, %v1589
        %v1635 = vmul.f32 %v1633, %v1590
        %v1636 = vadd.f32 %v1621, %v1634
        %v1637 = vadd.f32 %v1622, %v1635
        %v1638 = vstv %s428
        %v1639 = vmul.f32 %v1638, %v1589
        %v1640 = vmul.f32 %v1638, %v1590
        %v1641 = vadd.f32 %v1626, %v1639
        %v1642 = vadd.f32 %v1627, %v1640
        %v1643 = vstv %s503
        %v1644 = vmul.f32 %v1643, %v1589
        %v1645 = vmul.f32 %v1643, %v1590
        %v1646 = vadd.f32 %v1631, %v1644
        %v1647 = vadd.f32 %v1632, %v1645
        %1648 = vrot.lane.b32.xlu0 %v1589, 127
        %v1649 = vpop.permute.xlu0 %1648
        %1650 = vrot.lane.b32.xlu0 %v1590, 127
        %v1651 = vpop.permute.xlu0 %1650
        %v1652 = vsel %vm539, %v1649, 0.0
        %v1653 = vsel %vm539, %v1651, 0.0
        %v1654 = vstv %s354
        %v1655 = vmul.f32 %v1654, %v1652
        %v1656 = vmul.f32 %v1654, %v1653
        %v1657 = vadd.f32 %v1636, %v1655
        %v1658 = vadd.f32 %v1637, %v1656
        %v1659 = vstv %s429
        %v1660 = vmul.f32 %v1659, %v1652
        %v1661 = vmul.f32 %v1659, %v1653
        %v1662 = vadd.f32 %v1641, %v1660
        %v1663 = vadd.f32 %v1642, %v1661
        %v1664 = vstv %s504
        %v1665 = vmul.f32 %v1664, %v1652
        %v1666 = vmul.f32 %v1664, %v1653
        %v1667 = vadd.f32 %v1646, %v1665
        %v1668 = vadd.f32 %v1647, %v1666
        %1669 = vrot.lane.b32.xlu0 %v1589, 126
        %v1670 = vpop.permute.xlu0 %1669
        %1671 = vrot.lane.b32.xlu0 %v1590, 126
        %v1672 = vpop.permute.xlu0 %1671
        %v1673 = vsel %vm542, %v1670, 0.0
        %v1674 = vsel %vm542, %v1672, 0.0
        %v1675 = vstv %s355
        %v1676 = vmul.f32 %v1675, %v1673
        %v1677 = vmul.f32 %v1675, %v1674
        %v1678 = vadd.f32 %v1657, %v1676
        %v1679 = vadd.f32 %v1658, %v1677
        %v1680 = vstv %s430
        %v1681 = vmul.f32 %v1680, %v1673
        %v1682 = vmul.f32 %v1680, %v1674
        %v1683 = vadd.f32 %v1662, %v1681
        %v1684 = vadd.f32 %v1663, %v1682
        %v1685 = vstv %s505
        %v1686 = vmul.f32 %v1685, %v1673
        %v1687 = vmul.f32 %v1685, %v1674
        %v1688 = vadd.f32 %v1667, %v1686
        %v1689 = vadd.f32 %v1668, %v1687
        %v1690 = vrot.slane %v299, 7
        %v1691 = vrot.slane %v300, 7
        %v1692 = vsel %vm651, %v1690, %v1691
        %v1693 = vsel %vm651, %v1691, %v1690
        %v1694 = vsel %vm534, %v1693, 0.0
        %v1695 = vsel %vm535, %v1692, 0.0
        %1696 = vrot.lane.b32.xlu0 %v1694, 2
        %v1697 = vpop.permute.xlu0 %1696
        %1698 = vrot.lane.b32.xlu0 %v1695, 2
        %v1699 = vpop.permute.xlu0 %1698
        %v1700 = vsel %vm533, %v1697, 0.0
        %v1701 = vsel %vm533, %v1699, 0.0
        %v1702 = vstv %s356
        %v1703 = vmul.f32 %v1702, %v1700
        %v1704 = vmul.f32 %v1702, %v1701
        %v1705 = vadd.f32 %v1678, %v1703
        %v1706 = vadd.f32 %v1679, %v1704
        %v1707 = vstv %s431
        %v1708 = vmul.f32 %v1707, %v1700
        %v1709 = vmul.f32 %v1707, %v1701
        %v1710 = vadd.f32 %v1683, %v1708
        %v1711 = vadd.f32 %v1684, %v1709
        %v1712 = vstv %s506
        %v1713 = vmul.f32 %v1712, %v1700
        %v1714 = vmul.f32 %v1712, %v1701
        %v1715 = vadd.f32 %v1688, %v1713
        %v1716 = vadd.f32 %v1689, %v1714
        %1717 = vrot.lane.b32.xlu0 %v1694, 1
        %v1718 = vpop.permute.xlu0 %1717
        %1719 = vrot.lane.b32.xlu0 %v1695, 1
        %v1720 = vpop.permute.xlu0 %1719
        %v1721 = vsel %vm536, %v1718, 0.0
        %v1722 = vsel %vm536, %v1720, 0.0
        %v1723 = vstv %s357
        %v1724 = vmul.f32 %v1723, %v1721
        %v1725 = vmul.f32 %v1723, %v1722
        %v1726 = vadd.f32 %v1705, %v1724
        %v1727 = vadd.f32 %v1706, %v1725
        %v1728 = vstv %s432
        %v1729 = vmul.f32 %v1728, %v1721
        %v1730 = vmul.f32 %v1728, %v1722
        %v1731 = vadd.f32 %v1710, %v1729
        %v1732 = vadd.f32 %v1711, %v1730
        %v1733 = vstv %s507
        %v1734 = vmul.f32 %v1733, %v1721
        %v1735 = vmul.f32 %v1733, %v1722
        %v1736 = vadd.f32 %v1715, %v1734
        %v1737 = vadd.f32 %v1716, %v1735
        %v1738 = vstv %s358
        %v1739 = vmul.f32 %v1738, %v1694
        %v1740 = vmul.f32 %v1738, %v1695
        %v1741 = vadd.f32 %v1726, %v1739
        %v1742 = vadd.f32 %v1727, %v1740
        %v1743 = vstv %s433
        %v1744 = vmul.f32 %v1743, %v1694
        %v1745 = vmul.f32 %v1743, %v1695
        %v1746 = vadd.f32 %v1731, %v1744
        %v1747 = vadd.f32 %v1732, %v1745
        %v1748 = vstv %s508
        %v1749 = vmul.f32 %v1748, %v1694
        %v1750 = vmul.f32 %v1748, %v1695
        %v1751 = vadd.f32 %v1736, %v1749
        %v1752 = vadd.f32 %v1737, %v1750
        %1753 = vrot.lane.b32.xlu0 %v1694, 127
        %v1754 = vpop.permute.xlu0 %1753
        %1755 = vrot.lane.b32.xlu0 %v1695, 127
        %v1756 = vpop.permute.xlu0 %1755
        %v1757 = vsel %vm539, %v1754, 0.0
        %v1758 = vsel %vm539, %v1756, 0.0
        %v1759 = vstv %s359
        %v1760 = vmul.f32 %v1759, %v1757
        %v1761 = vmul.f32 %v1759, %v1758
        %v1762 = vadd.f32 %v1741, %v1760
        %v1763 = vadd.f32 %v1742, %v1761
        %v1764 = vstv %s434
        %v1765 = vmul.f32 %v1764, %v1757
        %v1766 = vmul.f32 %v1764, %v1758
        %v1767 = vadd.f32 %v1746, %v1765
        %v1768 = vadd.f32 %v1747, %v1766
        %v1769 = vstv %s509
        %v1770 = vmul.f32 %v1769, %v1757
        %v1771 = vmul.f32 %v1769, %v1758
        %v1772 = vadd.f32 %v1751, %v1770
        %v1773 = vadd.f32 %v1752, %v1771
        %1774 = vrot.lane.b32.xlu0 %v1694, 126
        %v1775 = vpop.permute.xlu0 %1774
        %1776 = vrot.lane.b32.xlu0 %v1695, 126
        %v1777 = vpop.permute.xlu0 %1776
        %v1778 = vsel %vm542, %v1775, 0.0
        %v1779 = vsel %vm542, %v1777, 0.0
        %v1780 = vstv %s360
        %v1781 = vmul.f32 %v1780, %v1778
        %v1782 = vmul.f32 %v1780, %v1779
        %v1783 = vadd.f32 %v1762, %v1781
        %v1784 = vadd.f32 %v1763, %v1782
        %v1785 = vstv %s435
        %v1786 = vmul.f32 %v1785, %v1778
        %v1787 = vmul.f32 %v1785, %v1779
        %v1788 = vadd.f32 %v1767, %v1786
        %v1789 = vadd.f32 %v1768, %v1787
        %v1790 = vstv %s510
        %v1791 = vmul.f32 %v1790, %v1778
        %v1792 = vmul.f32 %v1790, %v1779
        %v1793 = vadd.f32 %v1772, %v1791
        %v1794 = vadd.f32 %v1773, %v1792
        %1795 = vrot.lane.b32.xlu0 %v299, 2
        %v1796 = vpop.permute.xlu0 %1795
        %1797 = vrot.lane.b32.xlu0 %v300, 2
        %v1798 = vpop.permute.xlu0 %1797
        %v1799 = vsel %vm533, %v1796, 0.0
        %v1800 = vsel %vm533, %v1798, 0.0
        %v1801 = vstv %s361
        %v1802 = vmul.f32 %v1801, %v1799
        %v1803 = vmul.f32 %v1801, %v1800
        %v1804 = vadd.f32 %v1783, %v1802
        %v1805 = vadd.f32 %v1784, %v1803
        %v1806 = vstv %s436
        %v1807 = vmul.f32 %v1806, %v1799
        %v1808 = vmul.f32 %v1806, %v1800
        %v1809 = vadd.f32 %v1788, %v1807
        %v1810 = vadd.f32 %v1789, %v1808
        %v1811 = vstv %s511
        %v1812 = vmul.f32 %v1811, %v1799
        %v1813 = vmul.f32 %v1811, %v1800
        %v1814 = vadd.f32 %v1793, %v1812
        %v1815 = vadd.f32 %v1794, %v1813
        %1816 = vrot.lane.b32.xlu0 %v299, 1
        %v1817 = vpop.permute.xlu0 %1816
        %1818 = vrot.lane.b32.xlu0 %v300, 1
        %v1819 = vpop.permute.xlu0 %1818
        %v1820 = vsel %vm536, %v1817, 0.0
        %v1821 = vsel %vm536, %v1819, 0.0
        %v1822 = vstv %s362
        %v1823 = vmul.f32 %v1822, %v1820
        %v1824 = vmul.f32 %v1822, %v1821
        %v1825 = vadd.f32 %v1804, %v1823
        %v1826 = vadd.f32 %v1805, %v1824
        %v1827 = vstv %s437
        %v1828 = vmul.f32 %v1827, %v1820
        %v1829 = vmul.f32 %v1827, %v1821
        %v1830 = vadd.f32 %v1809, %v1828
        %v1831 = vadd.f32 %v1810, %v1829
        %v1832 = vstv %s512
        %v1833 = vmul.f32 %v1832, %v1820
        %v1834 = vmul.f32 %v1832, %v1821
        %v1835 = vadd.f32 %v1814, %v1833
        %v1836 = vadd.f32 %v1815, %v1834
        %v1837 = vstv %s363
        %v1838 = vmul.f32 %v1837, %v299
        %v1839 = vmul.f32 %v1837, %v300
        %v1840 = vadd.f32 %v1825, %v1838
        %v1841 = vadd.f32 %v1826, %v1839
        %v1842 = vstv %s438
        %v1843 = vmul.f32 %v1842, %v299
        %v1844 = vmul.f32 %v1842, %v300
        %v1845 = vadd.f32 %v1830, %v1843
        %v1846 = vadd.f32 %v1831, %v1844
        %v1847 = vstv %s513
        %v1848 = vmul.f32 %v1847, %v299
        %v1849 = vmul.f32 %v1847, %v300
        %v1850 = vadd.f32 %v1835, %v1848
        %v1851 = vadd.f32 %v1836, %v1849
        %1852 = vrot.lane.b32.xlu0 %v299, 127
        %v1853 = vpop.permute.xlu0 %1852
        %1854 = vrot.lane.b32.xlu0 %v300, 127
        %v1855 = vpop.permute.xlu0 %1854
        %v1856 = vsel %vm539, %v1853, 0.0
        %v1857 = vsel %vm539, %v1855, 0.0
        %v1858 = vstv %s364
        %v1859 = vmul.f32 %v1858, %v1856
        %v1860 = vmul.f32 %v1858, %v1857
        %v1861 = vadd.f32 %v1840, %v1859
        %v1862 = vadd.f32 %v1841, %v1860
        %v1863 = vstv %s439
        %v1864 = vmul.f32 %v1863, %v1856
        %v1865 = vmul.f32 %v1863, %v1857
        %v1866 = vadd.f32 %v1845, %v1864
        %v1867 = vadd.f32 %v1846, %v1865
        %v1868 = vstv %s514
        %v1869 = vmul.f32 %v1868, %v1856
        %v1870 = vmul.f32 %v1868, %v1857
        %v1871 = vadd.f32 %v1850, %v1869
        %v1872 = vadd.f32 %v1851, %v1870
        %1873 = vrot.lane.b32.xlu0 %v299, 126
        %v1874 = vpop.permute.xlu0 %1873
        %1875 = vrot.lane.b32.xlu0 %v300, 126
        %v1876 = vpop.permute.xlu0 %1875
        %v1877 = vsel %vm542, %v1874, 0.0
        %v1878 = vsel %vm542, %v1876, 0.0
        %v1879 = vstv %s365
        %v1880 = vmul.f32 %v1879, %v1877
        %v1881 = vmul.f32 %v1879, %v1878
        %v1882 = vadd.f32 %v1861, %v1880
        %v1883 = vadd.f32 %v1862, %v1881
        %v1884 = vstv %s440
        %v1885 = vmul.f32 %v1884, %v1877
        %v1886 = vmul.f32 %v1884, %v1878
        %v1887 = vadd.f32 %v1866, %v1885
        %v1888 = vadd.f32 %v1867, %v1886
        %v1889 = vstv %s515
        %v1890 = vmul.f32 %v1889, %v1877
        %v1891 = vmul.f32 %v1889, %v1878
        %v1892 = vadd.f32 %v1871, %v1890
        %v1893 = vadd.f32 %v1872, %v1891
        %v1894 = vrot.slane %v299, 1
        %v1895 = vrot.slane %v300, 1
        %v1896 = vsel %vm856, %v1894, %v1895
        %v1897 = vsel %vm856, %v1895, %v1894
        %v1898 = vsel %vm537, %v1896, 0.0
        %v1899 = vsel %vm538, %v1897, 0.0
        %1900 = vrot.lane.b32.xlu0 %v1898, 2
        %v1901 = vpop.permute.xlu0 %1900
        %1902 = vrot.lane.b32.xlu0 %v1899, 2
        %v1903 = vpop.permute.xlu0 %1902
        %v1904 = vsel %vm533, %v1901, 0.0
        %v1905 = vsel %vm533, %v1903, 0.0
        %v1906 = vstv %s366
        %v1907 = vmul.f32 %v1906, %v1904
        %v1908 = vmul.f32 %v1906, %v1905
        %v1909 = vadd.f32 %v1882, %v1907
        %v1910 = vadd.f32 %v1883, %v1908
        %v1911 = vstv %s441
        %v1912 = vmul.f32 %v1911, %v1904
        %v1913 = vmul.f32 %v1911, %v1905
        %v1914 = vadd.f32 %v1887, %v1912
        %v1915 = vadd.f32 %v1888, %v1913
        %v1916 = vstv %s516
        %v1917 = vmul.f32 %v1916, %v1904
        %v1918 = vmul.f32 %v1916, %v1905
        %v1919 = vadd.f32 %v1892, %v1917
        %v1920 = vadd.f32 %v1893, %v1918
        %1921 = vrot.lane.b32.xlu0 %v1898, 1
        %v1922 = vpop.permute.xlu0 %1921
        %1923 = vrot.lane.b32.xlu0 %v1899, 1
        %v1924 = vpop.permute.xlu0 %1923
        %v1925 = vsel %vm536, %v1922, 0.0
        %v1926 = vsel %vm536, %v1924, 0.0
        %v1927 = vstv %s367
        %v1928 = vmul.f32 %v1927, %v1925
        %v1929 = vmul.f32 %v1927, %v1926
        %v1930 = vadd.f32 %v1909, %v1928
        %v1931 = vadd.f32 %v1910, %v1929
        %v1932 = vstv %s442
        %v1933 = vmul.f32 %v1932, %v1925
        %v1934 = vmul.f32 %v1932, %v1926
        %v1935 = vadd.f32 %v1914, %v1933
        %v1936 = vadd.f32 %v1915, %v1934
        %v1937 = vstv %s517
        %v1938 = vmul.f32 %v1937, %v1925
        %v1939 = vmul.f32 %v1937, %v1926
        %v1940 = vadd.f32 %v1919, %v1938
        %v1941 = vadd.f32 %v1920, %v1939
        %v1942 = vstv %s368
        %v1943 = vmul.f32 %v1942, %v1898
        %v1944 = vmul.f32 %v1942, %v1899
        %v1945 = vadd.f32 %v1930, %v1943
        %v1946 = vadd.f32 %v1931, %v1944
        %v1947 = vstv %s443
        %v1948 = vmul.f32 %v1947, %v1898
        %v1949 = vmul.f32 %v1947, %v1899
        %v1950 = vadd.f32 %v1935, %v1948
        %v1951 = vadd.f32 %v1936, %v1949
        %v1952 = vstv %s518
        %v1953 = vmul.f32 %v1952, %v1898
        %v1954 = vmul.f32 %v1952, %v1899
        %v1955 = vadd.f32 %v1940, %v1953
        %v1956 = vadd.f32 %v1941, %v1954
        %1957 = vrot.lane.b32.xlu0 %v1898, 127
        %v1958 = vpop.permute.xlu0 %1957
        %1959 = vrot.lane.b32.xlu0 %v1899, 127
        %v1960 = vpop.permute.xlu0 %1959
        %v1961 = vsel %vm539, %v1958, 0.0
        %v1962 = vsel %vm539, %v1960, 0.0
        %v1963 = vstv %s369
        %v1964 = vmul.f32 %v1963, %v1961
        %v1965 = vmul.f32 %v1963, %v1962
        %v1966 = vadd.f32 %v1945, %v1964
        %v1967 = vadd.f32 %v1946, %v1965
        %v1968 = vstv %s444
        %v1969 = vmul.f32 %v1968, %v1961
        %v1970 = vmul.f32 %v1968, %v1962
        %v1971 = vadd.f32 %v1950, %v1969
        %v1972 = vadd.f32 %v1951, %v1970
        %v1973 = vstv %s519
        %v1974 = vmul.f32 %v1973, %v1961
        %v1975 = vmul.f32 %v1973, %v1962
        %v1976 = vadd.f32 %v1955, %v1974
        %v1977 = vadd.f32 %v1956, %v1975
        %1978 = vrot.lane.b32.xlu0 %v1898, 126
        %v1979 = vpop.permute.xlu0 %1978
        %1980 = vrot.lane.b32.xlu0 %v1899, 126
        %v1981 = vpop.permute.xlu0 %1980
        %v1982 = vsel %vm542, %v1979, 0.0
        %v1983 = vsel %vm542, %v1981, 0.0
        %v1984 = vstv %s370
        %v1985 = vmul.f32 %v1984, %v1982
        %v1986 = vmul.f32 %v1984, %v1983
        %v1987 = vadd.f32 %v1966, %v1985
        %v1988 = vadd.f32 %v1967, %v1986
        %v1989 = vstv %s445
        %v1990 = vmul.f32 %v1989, %v1982
        %v1991 = vmul.f32 %v1989, %v1983
        %v1992 = vadd.f32 %v1971, %v1990
        %v1993 = vadd.f32 %v1972, %v1991
        %v1994 = vstv %s520
        %v1995 = vmul.f32 %v1994, %v1982
        %v1996 = vmul.f32 %v1994, %v1983
        %v1997 = vadd.f32 %v1976, %v1995
        %v1998 = vadd.f32 %v1977, %v1996
        %v1999 = vrot.slane %v299, 2
        %v2000 = vrot.slane %v300, 2
        %v2001 = vsel %vm962, %v1999, %v2000
        %v2002 = vsel %vm962, %v2000, %v1999
        %v2003 = vsel %vm540, %v2001, 0.0
        %v2004 = vsel %vm541, %v2002, 0.0
        %2005 = vrot.lane.b32.xlu0 %v2003, 2
        %v2006 = vpop.permute.xlu0 %2005
        %2007 = vrot.lane.b32.xlu0 %v2004, 2
        %v2008 = vpop.permute.xlu0 %2007
        %v2009 = vsel %vm533, %v2006, 0.0
        %v2010 = vsel %vm533, %v2008, 0.0
        %v2011 = vstv %s371
        %v2012 = vmul.f32 %v2011, %v2009
        %v2013 = vmul.f32 %v2011, %v2010
        %v2014 = vadd.f32 %v1987, %v2012
        %v2015 = vadd.f32 %v1988, %v2013
        %v2016 = vstv %s446
        %v2017 = vmul.f32 %v2016, %v2009
        %v2018 = vmul.f32 %v2016, %v2010
        %v2019 = vadd.f32 %v1992, %v2017
        %v2020 = vadd.f32 %v1993, %v2018
        %v2021 = vstv %s521
        %v2022 = vmul.f32 %v2021, %v2009
        %v2023 = vmul.f32 %v2021, %v2010
        %v2024 = vadd.f32 %v1997, %v2022
        %v2025 = vadd.f32 %v1998, %v2023
        %2026 = vrot.lane.b32.xlu0 %v2003, 1
        %v2027 = vpop.permute.xlu0 %2026
        %2028 = vrot.lane.b32.xlu0 %v2004, 1
        %v2029 = vpop.permute.xlu0 %2028
        %v2030 = vsel %vm536, %v2027, 0.0
        %v2031 = vsel %vm536, %v2029, 0.0
        %v2032 = vstv %s372
        %v2033 = vmul.f32 %v2032, %v2030
        %v2034 = vmul.f32 %v2032, %v2031
        %v2035 = vadd.f32 %v2014, %v2033
        %v2036 = vadd.f32 %v2015, %v2034
        %v2037 = vstv %s447
        %v2038 = vmul.f32 %v2037, %v2030
        %v2039 = vmul.f32 %v2037, %v2031
        %v2040 = vadd.f32 %v2019, %v2038
        %v2041 = vadd.f32 %v2020, %v2039
        %v2042 = vstv %s522
        %v2043 = vmul.f32 %v2042, %v2030
        %v2044 = vmul.f32 %v2042, %v2031
        %v2045 = vadd.f32 %v2024, %v2043
        %v2046 = vadd.f32 %v2025, %v2044
        %v2047 = vstv %s373
        %v2048 = vmul.f32 %v2047, %v2003
        %v2049 = vmul.f32 %v2047, %v2004
        %v2050 = vadd.f32 %v2035, %v2048
        %v2051 = vadd.f32 %v2036, %v2049
        %v2052 = vstv %s448
        %v2053 = vmul.f32 %v2052, %v2003
        %v2054 = vmul.f32 %v2052, %v2004
        %v2055 = vadd.f32 %v2040, %v2053
        %v2056 = vadd.f32 %v2041, %v2054
        %v2057 = vstv %s523
        %v2058 = vmul.f32 %v2057, %v2003
        %v2059 = vmul.f32 %v2057, %v2004
        %v2060 = vadd.f32 %v2045, %v2058
        %v2061 = vadd.f32 %v2046, %v2059
        %2062 = vrot.lane.b32.xlu0 %v2003, 127
        %v2063 = vpop.permute.xlu0 %2062
        %2064 = vrot.lane.b32.xlu0 %v2004, 127
        %v2065 = vpop.permute.xlu0 %2064
        %v2066 = vsel %vm539, %v2063, 0.0
        %v2067 = vsel %vm539, %v2065, 0.0
        %v2068 = vstv %s374
        %v2069 = vmul.f32 %v2068, %v2066
        %v2070 = vmul.f32 %v2068, %v2067
        %v2071 = vadd.f32 %v2050, %v2069
        %v2072 = vadd.f32 %v2051, %v2070
        %v2073 = vstv %s449
        %v2074 = vmul.f32 %v2073, %v2066
        %v2075 = vmul.f32 %v2073, %v2067
        %v2076 = vadd.f32 %v2055, %v2074
        %v2077 = vadd.f32 %v2056, %v2075
        %v2078 = vstv %s524
        %v2079 = vmul.f32 %v2078, %v2066
        %v2080 = vmul.f32 %v2078, %v2067
        %v2081 = vadd.f32 %v2060, %v2079
        %v2082 = vadd.f32 %v2061, %v2080
        %2083 = vrot.lane.b32.xlu0 %v2003, 126
        %v2084 = vpop.permute.xlu0 %2083
        %2085 = vrot.lane.b32.xlu0 %v2004, 126
        %v2086 = vpop.permute.xlu0 %2085
        %v2087 = vsel %vm542, %v2084, 0.0
        %v2088 = vsel %vm542, %v2086, 0.0
        %v2089 = vstv %s375
        %v2090 = vmul.f32 %v2089, %v2087
        %v2091 = vmul.f32 %v2089, %v2088
        %v2092 = vadd.f32 %v2071, %v2090
        %v2093 = vadd.f32 %v2072, %v2091
        %v2094 = vstv %s450
        %v2095 = vmul.f32 %v2094, %v2087
        %v2096 = vmul.f32 %v2094, %v2088
        %v2097 = vadd.f32 %v2076, %v2095
        %v2098 = vadd.f32 %v2077, %v2096
        %v2099 = vstv %s525
        %v2100 = vmul.f32 %v2099, %v2087
        %v2101 = vmul.f32 %v2099, %v2088
        %v2102 = vadd.f32 %v2081, %v2100
        %v2103 = vadd.f32 %v2082, %v2101
        %2104 = vst [vmem:[%s229] sm:$0xff] %v2092
        %2105 = vst [vmem:[%s229 + $0x8] sm:$0xff] %v2093
        %s2106 = scalar_lea.vmem %s229, 16 [#allocation8]
        %2107 = vst [vmem:[%s2106] sm:$0xff] %v2097
        %2108 = vst [vmem:[%s2106 + $0x8] sm:$0xff] %v2098
        %s2109 = scalar_lea.vmem %s229, 32 [#allocation8]
        %2110 = vst [vmem:[%s2109] sm:$0xff] %v2102
        %2111 = vst [vmem:[%s2109 + $0x8] sm:$0xff] %v2103
        %s2112 = sand.u32 %s117, 1
        %s2113 = scalar_lea.sflag [#allocation3], %s2112
        %s2114 = sand.u32 %s117, 1
        %s2115 = smul.addr %s2114, 48
        %s2116 = scalar_lea.vmem [#allocation8], %s2115
        // Predicated region
        $region49: #{_transform_conv.1} parent=35 // pred_check
          %p2117 = pneg %p127
        $region50: #{_transform_conv.1} parent=35 // pred_check_branch
          %2119 = sbr.rel (%p2117) target = $region52
        $region51: #{_transform_conv.1} parent=35 // pred_region
          %s2121 = ssub.s32 768, 768
          %2122 = vsyncadd %s2113, %s2121
          %s2123 = smul.addr %s20, 6
          %s2124 = smul.addr %s2123, 128
          %s2125 = scalar_lea.hbm %s4, %s2124
          %s2126 = sshll.u32 %s2116, 4
          %s2127 = int_to_ptr.vmem [resolvable:$true] %s2126
          %2132 = dma.vmem_to_hbm [thread:$0]  %s2127, 768, %s2125, %s2113, 128, 128, 8
        $region52: #{_transform_conv.1} parent=35 // pred_fallthru
          _
      $region36: #{_transform_conv.1} parent=5 // pred_fallthru
        _
      %p2133 = scmp.le.s32.totalorder 2, %s15
      // Predicated region
      $region53: #{_transform_conv.1} parent=5 // pred_check
        %p2134 = pneg %p2133
      $region54: #{_transform_conv.1} parent=5 // pred_check_branch
        %2136 = sbr.rel (%p2134) target = $region56
      $region55: #{_transform_conv.1} parent=5 // pred_region
        %s2137 = ssub.s32 %s15, 2
        // Predicated region
        $region57: #{_transform_conv.1} parent=55 // pred_check
          %p2138 = pneg %p133
        $region58: #{_transform_conv.1} parent=55 // pred_check_branch
          %2140 = sbr.rel (%p2138) target = $region60
        $region59: #{_transform_conv.1} parent=55 // pred_region
          %s2141 = sand.u32 %s118, 1
          %s2142 = scalar_lea.sflag [#allocation3], %s2141
          %s2143 = sand.u32 %s118, 1
          %s2144 = smul.addr %s2143, 48
          %s2145 = scalar_lea.vmem [#allocation8], %s2144
          %2146 = dma.done %s2142, 768
        $region60: #{_transform_conv.1} parent=55 // pred_fallthru
          _
      $region56: #{_transform_conv.1} parent=5 // pred_fallthru
        _
    $region6: #{_transform_conv.1} parent=1 // loop_footer
      %s19 = sadd.s32 1, %s15
    $region7: #{_transform_conv.1} parent=1 // loop_footer_branch
      %14 = sbr.rel target = $region3
    $region8: #{_transform_conv.1} parent=1 // loop_exit
      _
    %2147 = vsyncpa [#allocation3], 1
    %s2148 = scalar_lea.sflag [#allocation3], 1
    %2149 = vsyncpa %s2148, 1
    %2150 = vsyncpa [#allocation4], 1
    %s2151 = scalar_lea.sflag [#allocation4], 1
    %2152 = vsyncpa %s2151, 1
    %2153 = vsyncpa [#allocation6], 1

</llo_original>
